<compile_context>
chip_gen: v7x
topology: tpu7x:2x2x1
jax: 0.10.0
libtpu: 0.0.40
codegen_flags: <defaults>
</compile_context>

<pallas_src>
import math

import jax
import jax.numpy as jnp
from jax.experimental import pallas as pl
from jax.experimental.pallas import tpu as pltpu


def _round_up(x, m):
    return ((x + m - 1) // m) * m


# --------------------------------------------------------------------------- #
# Kernel: one grid step == (batch b, vertex tile t)
# --------------------------------------------------------------------------- #
def conv_surface_kernel(idx_ref, src_ref, consts_ref, out_ref):
    """
    idx_ref    : (1, N, TV)     int32      neighbor indices (transposed, lane-dense)
    src_ref    : (1, Vp, D)     bf16/f32   per-vertex gather source
                                           cols: [P = v @ (0.5*wdir) | Fpre ... xyz]
    consts_ref : (2, Opad)      f32        row0 = theta bias, row1 = folded lin+BN bias
    out_ref    : (1, TV, Opad)  f32
    """
    N, TV = idx_ref.shape[1], idx_ref.shape[2]
    Vp, D = src_ref.shape[1], src_ref.shape[2]
    Opad = out_ref.shape[2]
    FW = D - Opad                                   # width of the F + geo segment

    idx = idx_ref[0]                                # (N, TV) int32
    src = src_ref[0]                                # (Vp, D)  stays in VMEM
    consts = consts_ref[...]                        # (2, Opad) f32
    theta_bias = consts[0:1, :]                     # (1, Opad)
    y_bias = consts[1:2, :]                         # (1, Opad)

    # Center rows of this vertex tile, sliced from the resident full source
    # (replaces the duplicate "center" input stream of v2).
    row0 = pl.multiple_of(pl.program_id(1) * TV, TV)
    center = src_ref[0, pl.ds(row0, TV), :].astype(jnp.float32)     # (TV, D)
    c_p = center[:, 0:Opad]                                          # (TV, Opad)
    c_fg = center[:, Opad:]                                          # (TV, FW)

    # One stacked one-hot gather matmul per tile: M = N*TV, K = Vp (MXU).
    iota_v = jax.lax.broadcasted_iota(jnp.int32, (N, TV, Vp), 2)
    onehot = (idx[:, :, None] == iota_v).astype(src.dtype)           # (N, TV, Vp)
    g = jnp.dot(onehot.reshape(N * TV, Vp), src,
                preferred_element_type=jnp.float32)                  # (N*TV, D) f32
    g = g.reshape(N, TV, D)

    g_p = g[:, :, 0:Opad]                         # gathered P          (N, TV, Opad)
    g_fg = g[:, :, Opad:]                         # gathered Fpre + xyz (N, TV, FW)

    # Squared neighbor-center distance over the 3 geo lanes only (hoisted mask).
    lane = jax.lax.broadcasted_iota(jnp.int32, (1, 1, FW), 2)
    geo_mask = (lane >= FW - 3).astype(jnp.float32)
    d = (g_fg - c_fg) * geo_mask
    sum_sq = jnp.sum(d * d, axis=-1, keepdims=True)                  # (N, TV, 1)
    # F.normalize(eps=1e-12): 1/max(||d||, 1e-12) == rsqrt(max(||d||^2, 1e-24))
    inv_nrm = jax.lax.rsqrt(jnp.maximum(sum_sq, 1e-24))

    theta = jnp.maximum(inv_nrm * (g_p - c_p) + theta_bias, 0.0)     # (N, TV, Opad)
    y = jnp.maximum(g_fg[:, :, 0:Opad] + y_bias, 0.0)                # (N, TV, Opad)
    # relu*relu >= 0 and N >= 1, so the plain max over the neighbor axis is exact.
    out_ref[0] = jnp.max(theta * y, axis=0).astype(out_ref.dtype)


# --------------------------------------------------------------------------- #
# Wrapper: per-vertex precompute (hoisted), padding, tiling, pallas_call
# --------------------------------------------------------------------------- #
def conv_surface_pallas(neighbor_index, vertices, feature_map, params,
                        *, tile_v=128, gather_dtype=jnp.bfloat16):
    bs, V, N = neighbor_index.shape
    C = feature_map.shape[-1]                      # = in_channel - 1
    O = params["wdir"].shape[-1]
    Opad = _round_up(O, 128)                       # lane-dense output / weights

    # xyz packing: reuse the zero-pad lanes at the tail of the F segment when
    # they exist (O + 3 <= Opad); otherwise append a dedicated 128-aligned block.
    FW = Opad if (O + 3) <= Opad else _round_up(O + 3, 128)
    D = Opad + FW

    def pad_lane(x, w):
        return jnp.pad(x, ((0, 0),) * (x.ndim - 1) + ((0, w - x.shape[-1]),))

    # ---- fold Linear bias + eval-mode BatchNorm into the weights, fold 0.5 ----
    w_fold = params["wnn"] * params["bn_scale"]                        # (C+1, O)
    b_fold = params["bnn"] * params["bn_scale"] + params["bn_shift"]   # (1, O)
    wdir_half = 0.5 * params["wdir"]                                   # (3, O)
    theta_bias = jnp.sum(wdir_half, axis=0, keepdims=True) + params["dir0"]
    consts = jnp.concatenate([pad_lane(theta_bias, Opad),
                              pad_lane(b_fold, Opad)], axis=0)         # (2, Opad)

    # ---- per-vertex precompute (N x fewer FLOPs than per-neighbor) ------------
    verts = vertices.astype(jnp.float32)
    feats = feature_map.astype(jnp.float32)
    p_seg = pad_lane(jnp.einsum("bvk,ko->bvo", verts, wdir_half), Opad)  # (bs,V,Opad)
    fnorm = jnp.sqrt(jnp.sum(feats * feats, -1, keepdims=True))          # (bs,V,1)
    f_pre = jnp.einsum("bvc,co->bvo", feats, w_fold[:C]) + fnorm * w_fold[C:C + 1]
    gap = FW - 3 - O
    f_seg = jnp.concatenate(
        [f_pre, jnp.zeros((bs, V, gap), jnp.float32), verts], axis=-1)   # (bs,V,FW)
    src = jnp.concatenate([p_seg, f_seg], axis=-1)                       # (bs,V,D)

    # ---- pad the vertex axis to a multiple of the tile (no TV=V fallback) -----
    TV = max(128, (tile_v // 128) * 128)
    Vp = _round_up(V, TV)
    src = jnp.pad(src, ((0, 0), (0, Vp - V), (0, 0))).astype(gather_dtype)
    idx_t = jnp.transpose(
        jnp.pad(neighbor_index.astype(jnp.int32), ((0, 0), (0, Vp - V), (0, 0))),
        (0, 2, 1))                                                       # (bs, N, Vp)
    grid = (bs, Vp // TV)

    # ---- per-chip scoped-VMEM budget -------------------------------------------
    isz = jnp.dtype(gather_dtype).itemsize
    need = (2 * Vp * D * isz            # double-buffered gather source
            + 2 * N * TV * 4            # idx block
            + 2 * TV * Opad * 4         # out block
            + 2 * 2 * Opad * 4          # consts
            + N * TV * Vp * isz         # one-hot LHS
            + 5 * N * TV * D * 4)       # gather result + epilogue temporaries
    try:
        vmem_cap = pltpu.get_tpu_info().vmem_capacity_bytes
    except Exception:
        vmem_cap = 64 * 1024 * 1024     # conservative fallback (v7x per-core VMEM)
    vmem_limit = int(min(max(int(need * 1.25), 32 * 1024 * 1024),
                         int(vmem_cap * 0.85)))

    out_padded = pl.pallas_call(
        conv_surface_kernel,
        out_shape=jax.ShapeDtypeStruct((bs, Vp, Opad), jnp.float32),
        grid_spec=pltpu.PrefetchScalarGridSpec(
            num_scalar_prefetch=0,
            grid=grid,
            in_specs=[
                pl.BlockSpec((1, N, TV), lambda b, t: (b, 0, t)),   # idx (lane-dense)
                # full gather source per batch element; block index only changes
                # with b, so it is only re-DMA'd per batch element.
                # TODO(synk): pipeline_mode=pl.Buffered(1) to single-buffer src for
                # very large V on v7x (64 MiB/TC) once validated on that backend.
                pl.BlockSpec((1, Vp, D), lambda b, t: (b, 0, 0)),
                pl.BlockSpec((2, Opad), lambda b, t: (0, 0)),       # consts
            ],
            out_specs=pl.BlockSpec((1, TV, Opad), lambda b, t: (b, t, 0)),
        ),
        compiler_params=pltpu.CompilerParams(
            # batch axis first so a 2-TC (v7x) core split lands on b when bs >= 2
            # and each core keeps a single resident src copy.
            dimension_semantics=("parallel", "parallel"),
            vmem_limit_bytes=vmem_limit,
        ),
    )(idx_t, src, consts)

    return out_padded[:, :V, :O]          # strip vertex + lane padding


# ----------------------- parameter construction (deterministic) --------------
def make_params(key, in_channel, out_channel):
    k1, k2, k3, _ = jax.random.split(key, 4)
    stdv_dir = math.sqrt(2.0 / out_channel)
    directions = jax.random.uniform(k1, (4, out_channel), jnp.float32,
                                    -stdv_dir, stdv_dir)
    stdv_lin = 1.0 / math.sqrt(in_channel)
    w_lin = jax.random.uniform(k2, (in_channel, out_channel), jnp.float32,
                               -stdv_lin, stdv_lin)          # already (in, out)
    b_lin = jax.random.uniform(k3, (1, out_channel), jnp.float32,
                               -stdv_lin, stdv_lin)
    # eval-mode BatchNorm1d with default buffers/affine
    gamma = jnp.ones((1, out_channel), jnp.float32)
    beta = jnp.zeros((1, out_channel), jnp.float32)
    running_mean = jnp.zeros((1, out_channel), jnp.float32)
    running_var = jnp.ones((1, out_channel), jnp.float32)
    eps = 1e-5
    bn_scale = gamma / jnp.sqrt(running_var + eps)
    bn_shift = beta - running_mean * bn_scale

    wdir = jnp.stack([directions[1] - directions[0],
                      directions[2] - directions[0],
                      directions[3] - directions[0]], axis=0)   # (3, O)
    dir0 = directions[0:1]                                      # (1, O)
    return dict(directions=directions, wdir=wdir, dir0=dir0,
                wnn=w_lin, bnn=b_lin, bn_scale=bn_scale, bn_shift=bn_shift)


# ----------------------- pure-JAX reference (original formulation) -----------
def conv_surface_ref(neighbor_index, vertices, feature_map, params):
    bs = neighbor_index.shape[0]
    id0 = jnp.arange(bs)[:, None, None]
    nbr_v = vertices[id0, neighbor_index]                       # (bs,V,N,3)
    direction = nbr_v - vertices[:, :, None, :]
    nrm = jnp.sqrt(jnp.sum(direction ** 2, -1, keepdims=True))
    dir_norm = direction / jnp.maximum(nrm, 1e-12)
    theta = jnp.maximum(((dir_norm + 1.0) / 2.0) @ params["wdir"]
                        + params["dir0"][0], 0.0)
    nbr_f = feature_map[id0, neighbor_index]                    # (bs,V,N,C)
    dist = jnp.sqrt(jnp.sum(nbr_f ** 2, -1, keepdims=True))
    fs = jnp.concatenate([nbr_f, dist], -1)
    y = fs @ params["wnn"] + params["bnn"][0]
    y = y * params["bn_scale"][0] + params["bn_shift"][0]
    y = jnp.maximum(y, 0.0)
    return jnp.max(y * theta, axis=2)


if __name__ == "__main__":
    BS, V, N = 2, 16, 8
    IN_CHANNEL, OUT_CHANNEL, SUPPORT_NUM = 5, 32, 3   # feature_map has IN_CHANNEL-1 chans

    key = jax.random.PRNGKey(0)
    k_idx, k_vert, k_feat, k_par = jax.random.split(key, 4)

    neighbor_index = jax.random.randint(k_idx, (BS, V, N), 0, V, jnp.int32)
    vertices = jax.random.normal(k_vert, (BS, V, 3), jnp.float32)
    feature_map = jax.random.normal(k_feat, (BS, V, IN_CHANNEL - 1), jnp.float32)
    params = make_params(k_par, IN_CHANNEL, OUT_CHANNEL)

    ref = conv_surface_ref(neighbor_index, vertices, feature_map, params)

    # f32 gather path: tight check against the pure-JAX reference.
    out_f32 = jax.block_until_ready(
        conv_surface_pallas(neighbor_index, vertices, feature_map, params,
                            gather_dtype=jnp.float32))
    assert out_f32.shape == (BS, V, OUT_CHANNEL)
    assert jnp.allclose(out_f32, ref, atol=3e-4, rtol=3e-4), "f32 mismatch vs reference"

    # bf16 gather path (production default): looser check — bf16 rounding of the
    # gathered xyz feeds the normalize, so errors grow for very close neighbors.
    out_bf16 = jax.block_until_ready(
        conv_surface_pallas(neighbor_index, vertices, feature_map, params,
                            gather_dtype=jnp.bfloat16))
    assert out_bf16.shape == (BS, V, OUT_CHANNEL)
    assert bool(jnp.all(jnp.isfinite(out_bf16)))
    assert jnp.allclose(out_bf16, ref, atol=2.5e-1, rtol=2e-1), "bf16 mismatch vs reference"

    print("KERNEL_OK")
</pallas_src>

<mosaic_0001>
module attributes {stable_mosaic.version = 11 : i64} {
  func.func @conv_surface_kernel(%arg0: i32, %arg1: i32, %arg2: memref<1x8x128xi32, #tpu.memory_space<vmem>>, %arg3: memref<1x128x256xf32, #tpu.memory_space<vmem>>, %arg4: memref<2x128xf32, #tpu.memory_space<vmem>>, %arg5: memref<1x128x128xf32, #tpu.memory_space<vmem>>) attributes {dimension_semantics = [#tpu.dimension_semantics<parallel>, #tpu.dimension_semantics<parallel>], iteration_bounds = array<i64: 2, 1>, scalar_prefetch = 0 : i64, scratch_operands = 0 : i64, tpu.core_type = #tpu.core_type<tc>, window_params = [{transform_indices = @transform_0, window_bounds = array<i64: 1, 8, 128>}, {transform_indices = @transform_1, window_bounds = array<i64: 1, 128, 256>}, {pipeline_mode = #tpu.pipeline_mode<synchronous>, transform_indices = @transform_2, window_bounds = array<i64: 2, 128>}, {transform_indices = @transform_3, window_bounds = array<i64: 1, 128, 128>}]} {
    %c0 = arith.constant 0 : index
    %c0_0 = arith.constant 0 : index
    %c0_1 = arith.constant 0 : index
    %0 = vector.load %arg2[%c0, %c0_0, %c0_1] : memref<1x8x128xi32, #tpu.memory_space<vmem>>, vector<1x8x128xi32>
    %1 = vector.shape_cast %0 : vector<1x8x128xi32> to vector<8x128xi32>
    %c0_2 = arith.constant 0 : index
    %c0_3 = arith.constant 0 : index
    %c0_4 = arith.constant 0 : index
    %2 = vector.load %arg3[%c0_2, %c0_3, %c0_4] : memref<1x128x256xf32, #tpu.memory_space<vmem>>, vector<1x128x256xf32>
    %3 = vector.shape_cast %2 : vector<1x128x256xf32> to vector<128x256xf32>
    %c0_5 = arith.constant 0 : index
    %c0_6 = arith.constant 0 : index
    %4 = vector.load %arg4[%c0_5, %c0_6] : memref<2x128xf32, #tpu.memory_space<vmem>>, vector<2x128xf32>
    %5 = vector.extract_strided_slice %4 {offsets = [0, 0], sizes = [1, 128], strides = [1, 1]} : vector<2x128xf32> to vector<1x128xf32>
    %6 = vector.extract_strided_slice %4 {offsets = [1, 0], sizes = [1, 128], strides = [1, 1]} : vector<2x128xf32> to vector<1x128xf32>
    %c128_i32 = arith.constant 128 : i32
    %7 = arith.muli %arg1, %c128_i32 : i32
    %8 = tpu.assume_multiple %7, 128 : i32
    %c0_7 = arith.constant 0 : index
    %9 = arith.index_cast %8 : i32 to index
    %c0_8 = arith.constant 0 : index
    %10 = vector.load %arg3[%c0_7, %9, %c0_8] : memref<1x128x256xf32, #tpu.memory_space<vmem>>, vector<1x128x256xf32>
    %11 = vector.shape_cast %10 : vector<1x128x256xf32> to vector<128x256xf32>
    %12 = vector.extract_strided_slice %11 {offsets = [0, 0], sizes = [128, 128], strides = [1, 1]} : vector<128x256xf32> to vector<128x128xf32>
    %13 = vector.extract_strided_slice %11 {offsets = [0, 128], sizes = [128, 128], strides = [1, 1]} : vector<128x256xf32> to vector<128x128xf32>
    %14 = tpu.iota {dimensions = array<i32: 2>} : vector<8x128x128xi32>
    %15 = vector.shape_cast %1 : vector<8x128xi32> to vector<8x128x1xi32>
    %16 = vector.broadcast %15 : vector<8x128x1xi32> to vector<8x128x128xi32>
    %17 = arith.cmpi eq, %16, %14 : vector<8x128x128xi32>
    %18 = arith.extui %17 : vector<8x128x128xi1> to vector<8x128x128xi32>
    %19 = arith.sitofp %18 : vector<8x128x128xi32> to vector<8x128x128xf32>
    %20 = vector.shape_cast %19 : vector<8x128x128xf32> to vector<1024x128xf32>
    %cst = arith.constant dense<0.000000e+00> : vector<1024x256xf32>
    %21 = tpu.matmul %20, %3, %cst {dimension_numbers = #tpu.dot_dimension_numbers<[1], [0], [0], [1], [0, 0, 1, 1], [], []>} : vector<1024x128xf32>, vector<128x256xf32>, vector<1024x256xf32> -> vector<1024x256xf32>
    %22 = vector.shape_cast %21 : vector<1024x256xf32> to vector<8x128x256xf32>
    %23 = vector.extract_strided_slice %22 {offsets = [0, 0, 0], sizes = [8, 128, 128], strides = [1, 1, 1]} : vector<8x128x256xf32> to vector<8x128x128xf32>
    %24 = vector.extract_strided_slice %22 {offsets = [0, 0, 128], sizes = [8, 128, 128], strides = [1, 1, 1]} : vector<8x128x256xf32> to vector<8x128x128xf32>
    %25 = tpu.iota {dimensions = array<i32: 2>} : vector<1x1x128xi32>
    %c125_i32 = arith.constant 125 : i32
    %26 = vector.broadcast %c125_i32 : i32 to vector<1x1x128xi32>
    %27 = arith.cmpi sge, %25, %26 : vector<1x1x128xi32>
    %28 = arith.extui %27 : vector<1x1x128xi1> to vector<1x1x128xi32>
    %29 = arith.sitofp %28 : vector<1x1x128xi32> to vector<1x1x128xf32>
    %30 = vector.shape_cast %13 : vector<128x128xf32> to vector<1x128x128xf32>
    %31 = vector.broadcast %30 : vector<1x128x128xf32> to vector<8x128x128xf32>
    %32 = arith.subf %24, %31 : vector<8x128x128xf32>
    %33 = vector.broadcast %29 : vector<1x1x128xf32> to vector<8x128x128xf32>
    %34 = arith.mulf %32, %33 : vector<8x128x128xf32>
    %35 = arith.mulf %34, %34 : vector<8x128x128xf32>
    %cst_9 = arith.constant dense<0.000000e+00> : vector<8x128xf32>
    %36 = vector.multi_reduction <add>, %35, %cst_9 [2] : vector<8x128x128xf32> to vector<8x128xf32>
    %37 = vector.shape_cast %36 : vector<8x128xf32> to vector<8x128x1xf32>
    %cst_10 = arith.constant 1.000000e-24 : f32
    %38 = vector.broadcast %cst_10 : f32 to vector<8x128x1xf32>
    %39 = arith.maximumf %37, %38 : vector<8x128x1xf32>
    %40 = math.rsqrt %39 : vector<8x128x1xf32>
    %41 = vector.shape_cast %12 : vector<128x128xf32> to vector<1x128x128xf32>
    %42 = vector.broadcast %41 : vector<1x128x128xf32> to vector<8x128x128xf32>
    %43 = arith.subf %23, %42 : vector<8x128x128xf32>
    %44 = vector.broadcast %40 : vector<8x128x1xf32> to vector<8x128x128xf32>
    %45 = arith.mulf %44, %43 : vector<8x128x128xf32>
    %46 = vector.shape_cast %5 : vector<1x128xf32> to vector<1x1x128xf32>
    %47 = vector.broadcast %46 : vector<1x1x128xf32> to vector<8x128x128xf32>
    %48 = arith.addf %45, %47 : vector<8x128x128xf32>
    %cst_11 = arith.constant 0.000000e+00 : f32
    %49 = vector.broadcast %cst_11 : f32 to vector<8x128x128xf32>
    %50 = arith.maximumf %48, %49 : vector<8x128x128xf32>
    %51 = vector.shape_cast %6 : vector<1x128xf32> to vector<1x1x128xf32>
    %52 = vector.broadcast %51 : vector<1x1x128xf32> to vector<8x128x128xf32>
    %53 = arith.addf %24, %52 : vector<8x128x128xf32>
    %cst_12 = arith.constant 0.000000e+00 : f32
    %54 = vector.broadcast %cst_12 : f32 to vector<8x128x128xf32>
    %55 = arith.maximumf %53, %54 : vector<8x128x128xf32>
    %56 = arith.mulf %50, %55 : vector<8x128x128xf32>
    %cst_13 = arith.constant dense<0xFF800000> : vector<128x128xf32>
    %57 = vector.multi_reduction <maximumf>, %56, %cst_13 [0] : vector<8x128x128xf32> to vector<128x128xf32>
    %c0_14 = arith.constant 0 : index
    %c0_15 = arith.constant 0 : index
    %c0_16 = arith.constant 0 : index
    %58 = vector.load %arg5[%c0_14, %c0_15, %c0_16] : memref<1x128x128xf32, #tpu.memory_space<vmem>>, vector<1x128x128xf32>
    %59 = vector.shape_cast %58 : vector<1x128x128xf32> to vector<128x128xf32>
    %60 = vector.shape_cast %57 : vector<128x128xf32> to vector<1x128x128xf32>
    tpu.vector_store %arg5[%c0_14, %c0_15, %c0_16], %60 {strides = array<i32>} : memref<1x128x128xf32, #tpu.memory_space<vmem>>, vector<1x128x128xf32>,
    return
  }
  func.func @transform_0(%arg0: i32, %arg1: i32) -> (i32, i32, i32) {
    %c0_i32 = arith.constant 0 : i32
    %c0_i32_0 = arith.constant 0 : i32
    return %arg0, %c0_i32, %arg1 : i32, i32, i32
  }
  func.func @transform_1(%arg0: i32, %arg1: i32) -> (i32, i32, i32) {
    %c0_i32 = arith.constant 0 : i32
    %c0_i32_0 = arith.constant 0 : i32
    %c0_i32_1 = arith.constant 0 : i32
    return %arg0, %c0_i32, %c0_i32_0 : i32, i32, i32
  }
  func.func @transform_2(%arg0: i32, %arg1: i32) -> (i32, i32) {
    %c0_i32 = arith.constant 0 : i32
    %c0_i32_0 = arith.constant 0 : i32
    %c0_i32_1 = arith.constant 0 : i32
    return %c0_i32, %c0_i32_0 : i32, i32
  }
  func.func @transform_3(%arg0: i32, %arg1: i32) -> (i32, i32, i32) {
    %c0_i32 = arith.constant 0 : i32
    %c0_i32_0 = arith.constant 0 : i32
    return %arg0, %arg1, %c0_i32 : i32, i32, i32
  }
}

</mosaic_0001>

<llo_original>
// kernel: tpu_custom_call.1
$region0: #{tpu_custom_call.1}
  #allocation0 [shape = 'u32[]', space=smem, size = 0x4, offset = 0x4, fixed_abs, tag = 'smem constant byte address 0x4 - core index']
  #allocation1 [shape = 'u32[144,128]{1,0:T(1,128)}', space=vmem, size = 0x12000, scoped, tag = 'internal scratch']
  %s0 = inlined_call_operand.hbm [shape: s32[2,8,128], index: 0, kind: input, shape index: {}]
  %s1 = inlined_call_operand.hbm [shape: f32[2,128,256], index: 1, kind: input, shape index: {}]
  %s2 = inlined_call_operand.vmem [shape: f32[2,128], index: 2, kind: input, shape index: {}]
  %s3 = inlined_call_operand.hbm [shape: f32[2,128,128], index: 3, kind: output, shape index: {}]
  %s4 = sld [smem:[#allocation0]]
  $region53: #{tpu_custom_call.1} parent=0
    _
  %s6 = ssub.s32 1, %s4
  %s7 = scalar_select 0, %s6, %s4
  $region1: #{tpu_custom_call.1} parent=0
    #allocation2 [shape = 'u8[8192]{0}', space=vmem, size = 0x2000, scoped, tag = 'input window, operand 0']
    #allocation3 [shape = 's32[2]{0}', space=sflag, size = 0x8, scoped, tag = 'scoped memory for tpu_custom_call.1']
    #allocation4 [shape = 's32[2]{0}', space=sflag, size = 0x8, scoped, tag = 'scoped memory for tpu_custom_call.1']
    #allocation5 [shape = 'u8[262144]{0}', space=vmem, size = 0x40000, scoped, tag = 'input window, operand 1']
    #allocation6 [shape = 's32[2]{0}', space=sflag, size = 0x8, scoped, tag = 'scoped memory for tpu_custom_call.1']
    #allocation7 [shape = 'u8[131072]{0}', space=vmem, size = 0x20000, scoped, tag = 'output window, operand 0']
    %8 = vsyncpa [#allocation3], 0
    %s9 = scalar_lea.sflag [#allocation3], 1
    %10 = vsyncpa %s9, 0
    %11 = vsyncpa [#allocation6], 0
    %s12 = scalar_lea.sflag [#allocation6], 1
    %13 = vsyncpa %s12, 0
    %14 = vsyncpa [#allocation4], 0
    %s15 = scalar_lea.sflag [#allocation4], 1
    %16 = vsyncpa %s15, 0
    loop: start=0, step=1, limit=4
    $region2: #{tpu_custom_call.1} parent=1 // loop_pre_header
      _
    $region3: #{tpu_custom_call.1} parent=1 // loop_header
      %s18 = sphi 0, %s22
      %p19 = scmp.ge.s32.totalorder %s18, 4
      %s25 = sphi 0, %s37
      %s26 = sphi 0, %s33
      %s27 = sphi 0, %s25
      %s28 = sphi 0, %s26
      %s29 = sphi 0, %s27
      %s30 = sphi 0, %s28
      %s42 = sphi 0, %s44
      %s45 = sphi 0, %s42
      %s46 = sphi 0, %s45
      %s62 = sphi 0, %s46
      %s68 = sphi 0, %s70
      %s71 = sphi 0, %s68
      %s72 = sphi 0, %s71
      %s88 = sphi 0, %s72
      %s92 = sphi 0, %s92
      %s94 = sphi 0, %s92
      %s95 = sphi 0, %s94
      %s109 = sphi 0, %s95
      %s117 = sphi 0, %s119
      %s120 = sphi 0, %s117
      %s121 = sphi 0, %s120
      %s137 = sphi 0, %s121
    $region4: #{tpu_custom_call.1} parent=1 // loop_header_branch
      %21 = sbr.rel (%p19) target = $region8
    $region5: #{tpu_custom_call.1} parent=1 // loop_body
      %s23 = ssub.s32 %s18, 1
      %s24 = ssub.s32 %s18, 2
      %s31 = sadd.s32 1, %s26
      %p32 = scmp.ge.s32.totalorder %s31, 1
      %s33 = scalar_select %p32, 0, %s31
      %s34 = sadd.s32 1, %s25
      %s35 = scalar_select %p32, %s34, %s25
      %p36 = scmp.ge.s32.totalorder %s35, 2
      %s37 = scalar_select %p36, 0, %s35
      %s38 = ssub.s32 %s25, %s37
      %s39 = ssub.s32 %s26, %s33
      %s40 = sor.u32 %s38, %s39
      %p41 = scmp.eq.s32.totalorder %s40, 0
      %s43 = sadd.s32 %s42, 1
      %s44 = scalar_select %p41, %s42, %s43
      %p47 = pneg %p41
      %p48 = scmp.eq.s32.totalorder %s18, 1
      %p49 = por %p47, %p48
      %p50 = scmp.ne.s32.totalorder %s42, %s45
      %p51 = scmp.eq.s32.totalorder %s18, 0
      %p52 = por %p50, %p51
      %p53 = scmp.ne.s32.totalorder %s42, %s45
      %p54 = scmp.eq.s32.totalorder %s23, 1
      %p55 = por %p53, %p54
      %p56 = scmp.ne.s32.totalorder %s45, %s46
      %p57 = scmp.eq.s32.totalorder %s23, 0
      %p58 = por %p56, %p57
      %p59 = scmp.ne.s32.totalorder %s45, %s46
      %p60 = scmp.eq.s32.totalorder %s24, 1
      %p61 = por %p59, %p60
      %p63 = scmp.ne.s32.totalorder %s46, %s62
      %p64 = scmp.eq.s32.totalorder %s24, 0
      %p65 = por %p63, %p64
      %s66 = ssub.s32 %s25, %s37
      %p67 = scmp.eq.s32.totalorder %s66, 0
      %s69 = sadd.s32 %s68, 1
      %s70 = scalar_select %p67, %s68, %s69
      %p73 = pneg %p67
      %p74 = scmp.eq.s32.totalorder %s18, 1
      %p75 = por %p73, %p74
      %p76 = scmp.ne.s32.totalorder %s68, %s71
      %p77 = scmp.eq.s32.totalorder %s18, 0
      %p78 = por %p76, %p77
      %p79 = scmp.ne.s32.totalorder %s68, %s71
      %p80 = scmp.eq.s32.totalorder %s23, 1
      %p81 = por %p79, %p80
      %p82 = scmp.ne.s32.totalorder %s71, %s72
      %p83 = scmp.eq.s32.totalorder %s23, 0
      %p84 = por %p82, %p83
      %p85 = scmp.ne.s32.totalorder %s71, %s72
      %p86 = scmp.eq.s32.totalorder %s24, 1
      %p87 = por %p85, %p86
      %p89 = scmp.ne.s32.totalorder %s72, %s88
      %p90 = scmp.eq.s32.totalorder %s24, 0
      %p91 = por %p89, %p90
      %s93 = sadd.s32 %s92, 1
      %p96 = scmp.eq.s32.totalorder %s18, 1
      %p97 = scmp.ne.s32.totalorder %s92, %s94
      %p98 = scmp.eq.s32.totalorder %s18, 0
      %p99 = por %p97, %p98
      %p100 = scmp.ne.s32.totalorder %s92, %s94
      %p101 = scmp.eq.s32.totalorder %s23, 1
      %p102 = por %p100, %p101
      %p103 = scmp.ne.s32.totalorder %s94, %s95
      %p104 = scmp.eq.s32.totalorder %s23, 0
      %p105 = por %p103, %p104
      %p106 = scmp.ne.s32.totalorder %s94, %s95
      %p107 = scmp.eq.s32.totalorder %s24, 1
      %p108 = por %p106, %p107
      %p110 = scmp.ne.s32.totalorder %s95, %s109
      %p111 = scmp.eq.s32.totalorder %s24, 0
      %p112 = por %p110, %p111
      %s113 = ssub.s32 %s25, %s37
      %s114 = ssub.s32 %s26, %s33
      %s115 = sor.u32 %s113, %s114
      %p116 = scmp.eq.s32.totalorder %s115, 0
      %s118 = sadd.s32 %s117, 1
      %s119 = scalar_select %p116, %s117, %s118
      %p122 = pneg %p116
      %p123 = scmp.eq.s32.totalorder %s18, 1
      %p124 = por %p122, %p123
      %p125 = scmp.ne.s32.totalorder %s117, %s120
      %p126 = scmp.eq.s32.totalorder %s18, 0
      %p127 = por %p125, %p126
      %p128 = scmp.ne.s32.totalorder %s117, %s120
      %p129 = scmp.eq.s32.totalorder %s23, 1
      %p130 = por %p128, %p129
      %p131 = scmp.ne.s32.totalorder %s120, %s121
      %p132 = scmp.eq.s32.totalorder %s23, 0
      %p133 = por %p131, %p132
      %p134 = scmp.ne.s32.totalorder %s120, %s121
      %p135 = scmp.eq.s32.totalorder %s24, 1
      %p136 = por %p134, %p135
      %p138 = scmp.ne.s32.totalorder %s121, %s137
      %p139 = scmp.eq.s32.totalorder %s24, 0
      %p140 = por %p138, %p139
      %p141 = scmp.le.s32.totalorder 1, %s18
      %p142 = scmp.lt.s32.totalorder %s18, 3
      %p143 = pnand %p141, %p142
      %p144 = pneg %p143
      // Predicated region
      $region9: #{tpu_custom_call.1} parent=5 // pred_check
        _
      $region10: #{tpu_custom_call.1} parent=5 // pred_check_branch
        %146 = sbr.rel (%p143) target = $region12
      $region11: #{tpu_custom_call.1} parent=5 // pred_region
        %s147 = ssub.s32 %s18, 1
        // Predicated region
        $region13: #{tpu_custom_call.1} parent=11 // pred_check
          %p148 = pneg %p105
        $region14: #{tpu_custom_call.1} parent=11 // pred_check_branch
          %150 = sbr.rel (%p148) target = $region16
        $region15: #{tpu_custom_call.1} parent=11 // pred_region
          _
        $region16: #{tpu_custom_call.1} parent=11 // pred_fallthru
          _
      $region12: #{tpu_custom_call.1} parent=5 // pred_fallthru
        _
      %p151 = scmp.lt.s32.totalorder %s18, 2
      // Predicated region
      $region17: #{tpu_custom_call.1} parent=5 // pred_check
        %p152 = pneg %p151
      $region18: #{tpu_custom_call.1} parent=5 // pred_check_branch
        %154 = sbr.rel (%p152) target = $region20
      $region19: #{tpu_custom_call.1} parent=5 // pred_region
        // Predicated region
        $region21: #{tpu_custom_call.1} parent=19 // pred_check
          %p155 = pneg %p52
        $region22: #{tpu_custom_call.1} parent=19 // pred_check_branch
          %157 = sbr.rel (%p155) target = $region24
        $region23: #{tpu_custom_call.1} parent=19 // pred_region
          %s158 = sand.u32 %s42, 1
          %s159 = scalar_lea.sflag [#allocation3], %s158
          %s160 = sand.u32 %s42, 1
          %s161 = smul.addr %s160, 8
          %s162 = scalar_lea.vmem [#allocation2], %s161
          %s164 = ssub.s32 128, 128
          %165 = vsyncadd %s159, %s164
          %s166 = sadd.s32 %s26, %s25
          %s167 = smul.addr %s166, 128
          %s168 = scalar_lea.hbm %s0, %s167
          %s170 = sshll.u32 %s162, 4
          %s171 = int_to_ptr.vmem [resolvable:$true] %s170
          %173 = dma.hbm_to_vmem [thread:$0]  %s168, 128, %s171, %s159
        $region24: #{tpu_custom_call.1} parent=19 // pred_fallthru
          _
        // Predicated region
        $region25: #{tpu_custom_call.1} parent=19 // pred_check
          %p174 = pneg %p78
        $region26: #{tpu_custom_call.1} parent=19 // pred_check_branch
          %176 = sbr.rel (%p174) target = $region28
        $region27: #{tpu_custom_call.1} parent=19 // pred_region
          %s177 = sand.u32 %s68, 1
          %s178 = scalar_lea.sflag [#allocation6], %s177
          %s179 = sand.u32 %s68, 1
          %s180 = smul.addr %s179, 256
          %s181 = scalar_lea.vmem [#allocation5], %s180
          %s183 = ssub.s32 4096, 4096
          %184 = vsyncadd %s178, %s183
          %s185 = smul.addr %s25, 32
          %s186 = smul.addr %s185, 128
          %s187 = scalar_lea.hbm %s1, %s186
          %s188 = sshll.u32 %s181, 4
          %s189 = int_to_ptr.vmem [resolvable:$true] %s188
          %194 = dma.hbm_to_vmem [thread:$0]  %s187, 4096, %s189, %s178, 256, 256, 16
        $region28: #{tpu_custom_call.1} parent=19 // pred_fallthru
          _
      $region20: #{tpu_custom_call.1} parent=5 // pred_fallthru
        _
      %p195 = scmp.le.s32.totalorder 1, %s18
      %p196 = scmp.lt.s32.totalorder %s18, 3
      %p197 = pnand %p195, %p196
      %p198 = pneg %p197
      // Predicated region
      $region29: #{tpu_custom_call.1} parent=5 // pred_check
        _
      $region30: #{tpu_custom_call.1} parent=5 // pred_check_branch
        %200 = sbr.rel (%p197) target = $region32
      $region31: #{tpu_custom_call.1} parent=5 // pred_region
        %s201 = ssub.s32 %s18, 1
        %s202 = sand.u32 %s45, 1
        %s203 = scalar_lea.sflag [#allocation3], %s202
        %s204 = sand.u32 %s45, 1
        %s205 = smul.addr %s204, 8
        %s206 = scalar_lea.vmem [#allocation2], %s205
        // Predicated region
        $region33: #{tpu_custom_call.1} parent=31 // pred_check
          %p207 = pneg %p58
        $region34: #{tpu_custom_call.1} parent=31 // pred_check_branch
          %209 = sbr.rel (%p207) target = $region36
        $region35: #{tpu_custom_call.1} parent=31 // pred_region
          %210 = dma.done %s203, 128
        $region36: #{tpu_custom_call.1} parent=31 // pred_fallthru
          _
        %s211 = sand.u32 %s71, 1
        %s212 = scalar_lea.sflag [#allocation6], %s211
        %s213 = sand.u32 %s71, 1
        %s214 = smul.addr %s213, 256
        %s215 = scalar_lea.vmem [#allocation5], %s214
        // Predicated region
        $region37: #{tpu_custom_call.1} parent=31 // pred_check
          %p216 = pneg %p84
        $region38: #{tpu_custom_call.1} parent=31 // pred_check_branch
          %218 = sbr.rel (%p216) target = $region40
        $region39: #{tpu_custom_call.1} parent=31 // pred_region
          %219 = dma.done %s212, 4096
        $region40: #{tpu_custom_call.1} parent=31 // pred_fallthru
          _
        %s220 = sand.u32 %s45, 1
        %s221 = scalar_lea.sflag [#allocation3], %s220
        %s222 = sand.u32 %s45, 1
        %s223 = smul.addr %s222, 8
        %s224 = scalar_lea.vmem [#allocation2], %s223
        %p225 = pneg %p58
        %p226 = pneg %p55
        %s227 = sand.u32 %s71, 1
        %s228 = scalar_lea.sflag [#allocation6], %s227
        %s229 = sand.u32 %s71, 1
        %s230 = smul.addr %s229, 256
        %s231 = scalar_lea.vmem [#allocation5], %s230
        %p232 = pneg %p84
        %p233 = pneg %p81
        %p234 = pneg %p105
        %p235 = pneg %p102
        %p236 = pneg %p133
        %p237 = pneg %p130
        %s238 = sand.u32 %s120, 1
        %s239 = scalar_lea.sflag [#allocation4], %s238
        %s240 = sand.u32 %s120, 1
        %s241 = smul.addr %s240, 128
        %s242 = scalar_lea.vmem [#allocation7], %s241
        %s243 = smul.u32 16, %s28
        %v244 = vld [vmem:[%s206] sm:$0xff]
        %v245 = vld [vmem:[%s215] sm:$0xff]
        %v246 = vld [vmem:[%s215 + $0x8] sm:$0xff]
        %v247 = vld [vmem:[%s215 + $0x10] sm:$0xff]
        %v248 = vld [vmem:[%s215 + $0x18] sm:$0xff]
        %v249 = vld [vmem:[%s215 + $0x20] sm:$0xff]
        %v250 = vld [vmem:[%s215 + $0x28] sm:$0xff]
        %v251 = vld [vmem:[%s215 + $0x30] sm:$0xff]
        %v252 = vld [vmem:[%s215 + $0x38] sm:$0xff]
        %v253 = vld [vmem:[%s215 + $0x40] sm:$0xff]
        %v254 = vld [vmem:[%s215 + $0x48] sm:$0xff]
        %v255 = vld [vmem:[%s215 + $0x50] sm:$0xff]
        %v256 = vld [vmem:[%s215 + $0x58] sm:$0xff]
        %v257 = vld [vmem:[%s215 + $0x60] sm:$0xff]
        %v258 = vld [vmem:[%s215 + $0x68] sm:$0xff]
        %v259 = vld [vmem:[%s215 + $0x70] sm:$0xff]
        %v260 = vld [vmem:[%s215 + $0x78] sm:$0xff]
        %v261 = vld [vmem:[%s215 + $0x80] sm:$0xff]
        %v262 = vld [vmem:[%s215 + $0x88] sm:$0xff]
        %v263 = vld [vmem:[%s215 + $0x90] sm:$0xff]
        %v264 = vld [vmem:[%s215 + $0x98] sm:$0xff]
        %v265 = vld [vmem:[%s215 + $0xa0] sm:$0xff]
        %v266 = vld [vmem:[%s215 + $0xa8] sm:$0xff]
        %v267 = vld [vmem:[%s215 + $0xb0] sm:$0xff]
        %v268 = vld [vmem:[%s215 + $0xb8] sm:$0xff]
        %v269 = vld [vmem:[%s215 + $0xc0] sm:$0xff]
        %v270 = vld [vmem:[%s215 + $0xc8] sm:$0xff]
        %v271 = vld [vmem:[%s215 + $0xd0] sm:$0xff]
        %v272 = vld [vmem:[%s215 + $0xd8] sm:$0xff]
        %v273 = vld [vmem:[%s215 + $0xe0] sm:$0xff]
        %v274 = vld [vmem:[%s215 + $0xe8] sm:$0xff]
        %v275 = vld [vmem:[%s215 + $0xf0] sm:$0xff]
        %v276 = vld [vmem:[%s215 + $0xf8] sm:$0xff]
        %v277 = vld [vmem:[%s2] sm:$0x3]
        %s278 = smul.u32 %s28, 128
        %s279 = sshra.s32 %s278, 3
        %s280 = sand.u32 %s278, 7
        %s281 = smul.u32 %s279, 2
        %s282 = smul.addr %s281, 8
        %s283 = scalar_lea.vmem %s215, %s282 [#allocation5]
        %v284 = vld [vmem:[%s283] sm:$0xff]
        %v285 = vld [vmem:[%s283 + $0x8] sm:$0xff]
        %v286 = vld [vmem:[%s283 + $0x10] sm:$0xff]
        %v287 = vld [vmem:[%s283 + $0x18] sm:$0xff]
        %v288 = vld [vmem:[%s283 + $0x20] sm:$0xff]
        %v289 = vld [vmem:[%s283 + $0x28] sm:$0xff]
        %v290 = vld [vmem:[%s283 + $0x30] sm:$0xff]
        %v291 = vld [vmem:[%s283 + $0x38] sm:$0xff]
        %v292 = vld [vmem:[%s283 + $0x40] sm:$0xff]
        %v293 = vld [vmem:[%s283 + $0x48] sm:$0xff]
        %v294 = vld [vmem:[%s283 + $0x50] sm:$0xff]
        %v295 = vld [vmem:[%s283 + $0x58] sm:$0xff]
        %v296 = vld [vmem:[%s283 + $0x60] sm:$0xff]
        %v297 = vld [vmem:[%s283 + $0x68] sm:$0xff]
        %v298 = vld [vmem:[%s283 + $0x70] sm:$0xff]
        %v299 = vld [vmem:[%s283 + $0x78] sm:$0xff]
        %v300 = vld [vmem:[%s283 + $0x80] sm:$0xff]
        %v301 = vld [vmem:[%s283 + $0x88] sm:$0xff]
        %v302 = vld [vmem:[%s283 + $0x90] sm:$0xff]
        %v303 = vld [vmem:[%s283 + $0x98] sm:$0xff]
        %v304 = vld [vmem:[%s283 + $0xa0] sm:$0xff]
        %v305 = vld [vmem:[%s283 + $0xa8] sm:$0xff]
        %v306 = vld [vmem:[%s283 + $0xb0] sm:$0xff]
        %v307 = vld [vmem:[%s283 + $0xb8] sm:$0xff]
        %v308 = vld [vmem:[%s283 + $0xc0] sm:$0xff]
        %v309 = vld [vmem:[%s283 + $0xc8] sm:$0xff]
        %v310 = vld [vmem:[%s283 + $0xd0] sm:$0xff]
        %v311 = vld [vmem:[%s283 + $0xd8] sm:$0xff]
        %v312 = vld [vmem:[%s283 + $0xe0] sm:$0xff]
        %v313 = vld [vmem:[%s283 + $0xe8] sm:$0xff]
        %v314 = vld [vmem:[%s283 + $0xf0] sm:$0xff]
        %v315 = vld [vmem:[%s283 + $0xf8] sm:$0xff]
        %v316 = vlaneseq
        %v317 = vand.u32 %v316, 127
        %v318 = vlaneseq
        %v319 = vshrl.u32 %v318, 7
        %v320 = vsub.s32 0, %v319
        %v321 = vrot.slane %v244, %v320
        %323 = vbcast.lane.b32.xlu0 %v321, 256
        %v324 = vpop.permute.xlu0 %323
        %s326 = sor.u32 256, 8
        %327 = vbcast.lane.b32.xlu0 %v321, %s326
        %v328 = vpop.permute.xlu0 %327
        %s330 = sor.u32 256, 16
        %331 = vbcast.lane.b32.xlu0 %v321, %s330
        %v332 = vpop.permute.xlu0 %331
        %s334 = sor.u32 256, 24
        %335 = vbcast.lane.b32.xlu0 %v321, %s334
        %v336 = vpop.permute.xlu0 %335
        %s338 = sor.u32 256, 32
        %339 = vbcast.lane.b32.xlu0 %v321, %s338
        %v340 = vpop.permute.xlu0 %339
        %s342 = sor.u32 256, 40
        %343 = vbcast.lane.b32.xlu0 %v321, %s342
        %v344 = vpop.permute.xlu0 %343
        %s346 = sor.u32 256, 48
        %347 = vbcast.lane.b32.xlu0 %v321, %s346
        %v348 = vpop.permute.xlu0 %347
        %s350 = sor.u32 256, 56
        %351 = vbcast.lane.b32.xlu0 %v321, %s350
        %v352 = vpop.permute.xlu0 %351
        %s354 = sor.u32 256, 64
        %355 = vbcast.lane.b32.xlu0 %v321, %s354
        %v356 = vpop.permute.xlu0 %355
        %s358 = sor.u32 256, 72
        %359 = vbcast.lane.b32.xlu0 %v321, %s358
        %v360 = vpop.permute.xlu0 %359
        %s362 = sor.u32 256, 80
        %363 = vbcast.lane.b32.xlu0 %v321, %s362
        %v364 = vpop.permute.xlu0 %363
        %s366 = sor.u32 256, 88
        %367 = vbcast.lane.b32.xlu0 %v321, %s366
        %v368 = vpop.permute.xlu0 %367
        %s370 = sor.u32 256, 96
        %371 = vbcast.lane.b32.xlu0 %v321, %s370
        %v372 = vpop.permute.xlu0 %371
        %s374 = sor.u32 256, 104
        %375 = vbcast.lane.b32.xlu0 %v321, %s374
        %v376 = vpop.permute.xlu0 %375
        %s378 = sor.u32 256, 112
        %379 = vbcast.lane.b32.xlu0 %v321, %s378
        %v380 = vpop.permute.xlu0 %379
        %s382 = sor.u32 256, 120
        %383 = vbcast.lane.b32.xlu0 %v321, %s382
        %v384 = vpop.permute.xlu0 %383
        %v385 = vlaneseq
        %v386 = vshrl.u32 %v385, 7
        %v387 = vsub.s32 1, %v386
        %v388 = vrot.slane %v244, %v387
        %390 = vbcast.lane.b32.xlu0 %v388, 256
        %v391 = vpop.permute.xlu0 %390
        %s393 = sor.u32 256, 8
        %394 = vbcast.lane.b32.xlu0 %v388, %s393
        %v395 = vpop.permute.xlu0 %394
        %s397 = sor.u32 256, 16
        %398 = vbcast.lane.b32.xlu0 %v388, %s397
        %v399 = vpop.permute.xlu0 %398
        %s401 = sor.u32 256, 24
        %402 = vbcast.lane.b32.xlu0 %v388, %s401
        %v403 = vpop.permute.xlu0 %402
        %s405 = sor.u32 256, 32
        %406 = vbcast.lane.b32.xlu0 %v388, %s405
        %v407 = vpop.permute.xlu0 %406
        %s409 = sor.u32 256, 40
        %410 = vbcast.lane.b32.xlu0 %v388, %s409
        %v411 = vpop.permute.xlu0 %410
        %s413 = sor.u32 256, 48
        %414 = vbcast.lane.b32.xlu0 %v388, %s413
        %v415 = vpop.permute.xlu0 %414
        %s417 = sor.u32 256, 56
        %418 = vbcast.lane.b32.xlu0 %v388, %s417
        %v419 = vpop.permute.xlu0 %418
        %s421 = sor.u32 256, 64
        %422 = vbcast.lane.b32.xlu0 %v388, %s421
        %v423 = vpop.permute.xlu0 %422
        %s425 = sor.u32 256, 72
        %426 = vbcast.lane.b32.xlu0 %v388, %s425
        %v427 = vpop.permute.xlu0 %426
        %s429 = sor.u32 256, 80
        %430 = vbcast.lane.b32.xlu0 %v388, %s429
        %v431 = vpop.permute.xlu0 %430
        %s433 = sor.u32 256, 88
        %434 = vbcast.lane.b32.xlu0 %v388, %s433
        %v435 = vpop.permute.xlu0 %434
        %s437 = sor.u32 256, 96
        %438 = vbcast.lane.b32.xlu0 %v388, %s437
        %v439 = vpop.permute.xlu0 %438
        %s441 = sor.u32 256, 104
        %442 = vbcast.lane.b32.xlu0 %v388, %s441
        %v443 = vpop.permute.xlu0 %442
        %s445 = sor.u32 256, 112
        %446 = vbcast.lane.b32.xlu0 %v388, %s445
        %v447 = vpop.permute.xlu0 %446
        %s449 = sor.u32 256, 120
        %450 = vbcast.lane.b32.xlu0 %v388, %s449
        %v451 = vpop.permute.xlu0 %450
        %v452 = vlaneseq
        %v453 = vshrl.u32 %v452, 7
        %v454 = vsub.s32 2, %v453
        %v455 = vrot.slane %v244, %v454
        %457 = vbcast.lane.b32.xlu0 %v455, 256
        %v458 = vpop.permute.xlu0 %457
        %s460 = sor.u32 256, 8
        %461 = vbcast.lane.b32.xlu0 %v455, %s460
        %v462 = vpop.permute.xlu0 %461
        %s464 = sor.u32 256, 16
        %465 = vbcast.lane.b32.xlu0 %v455, %s464
        %v466 = vpop.permute.xlu0 %465
        %s468 = sor.u32 256, 24
        %469 = vbcast.lane.b32.xlu0 %v455, %s468
        %v470 = vpop.permute.xlu0 %469
        %s472 = sor.u32 256, 32
        %473 = vbcast.lane.b32.xlu0 %v455, %s472
        %v474 = vpop.permute.xlu0 %473
        %s476 = sor.u32 256, 40
        %477 = vbcast.lane.b32.xlu0 %v455, %s476
        %v478 = vpop.permute.xlu0 %477
        %s480 = sor.u32 256, 48
        %481 = vbcast.lane.b32.xlu0 %v455, %s480
        %v482 = vpop.permute.xlu0 %481
        %s484 = sor.u32 256, 56
        %485 = vbcast.lane.b32.xlu0 %v455, %s484
        %v486 = vpop.permute.xlu0 %485
        %s488 = sor.u32 256, 64
        %489 = vbcast.lane.b32.xlu0 %v455, %s488
        %v490 = vpop.permute.xlu0 %489
        %s492 = sor.u32 256, 72
        %493 = vbcast.lane.b32.xlu0 %v455, %s492
        %v494 = vpop.permute.xlu0 %493
        %s496 = sor.u32 256, 80
        %497 = vbcast.lane.b32.xlu0 %v455, %s496
        %v498 = vpop.permute.xlu0 %497
        %s500 = sor.u32 256, 88
        %501 = vbcast.lane.b32.xlu0 %v455, %s500
        %v502 = vpop.permute.xlu0 %501
        %s504 = sor.u32 256, 96
        %505 = vbcast.lane.b32.xlu0 %v455, %s504
        %v506 = vpop.permute.xlu0 %505
        %s508 = sor.u32 256, 104
        %509 = vbcast.lane.b32.xlu0 %v455, %s508
        %v510 = vpop.permute.xlu0 %509
        %s512 = sor.u32 256, 112
        %513 = vbcast.lane.b32.xlu0 %v455, %s512
        %v514 = vpop.permute.xlu0 %513
        %s516 = sor.u32 256, 120
        %517 = vbcast.lane.b32.xlu0 %v455, %s516
        %v518 = vpop.permute.xlu0 %517
        %v519 = vlaneseq
        %v520 = vshrl.u32 %v519, 7
        %v521 = vsub.s32 3, %v520
        %v522 = vrot.slane %v244, %v521
        %524 = vbcast.lane.b32.xlu0 %v522, 256
        %v525 = vpop.permute.xlu0 %524
        %s527 = sor.u32 256, 8
        %528 = vbcast.lane.b32.xlu0 %v522, %s527
        %v529 = vpop.permute.xlu0 %528
        %s531 = sor.u32 256, 16
        %532 = vbcast.lane.b32.xlu0 %v522, %s531
        %v533 = vpop.permute.xlu0 %532
        %s535 = sor.u32 256, 24
        %536 = vbcast.lane.b32.xlu0 %v522, %s535
        %v537 = vpop.permute.xlu0 %536
        %s539 = sor.u32 256, 32
        %540 = vbcast.lane.b32.xlu0 %v522, %s539
        %v541 = vpop.permute.xlu0 %540
        %s543 = sor.u32 256, 40
        %544 = vbcast.lane.b32.xlu0 %v522, %s543
        %v545 = vpop.permute.xlu0 %544
        %s547 = sor.u32 256, 48
        %548 = vbcast.lane.b32.xlu0 %v522, %s547
        %v549 = vpop.permute.xlu0 %548
        %s551 = sor.u32 256, 56
        %552 = vbcast.lane.b32.xlu0 %v522, %s551
        %v553 = vpop.permute.xlu0 %552
        %s555 = sor.u32 256, 64
        %556 = vbcast.lane.b32.xlu0 %v522, %s555
        %v557 = vpop.permute.xlu0 %556
        %s559 = sor.u32 256, 72
        %560 = vbcast.lane.b32.xlu0 %v522, %s559
        %v561 = vpop.permute.xlu0 %560
        %s563 = sor.u32 256, 80
        %564 = vbcast.lane.b32.xlu0 %v522, %s563
        %v565 = vpop.permute.xlu0 %564
        %s567 = sor.u32 256, 88
        %568 = vbcast.lane.b32.xlu0 %v522, %s567
        %v569 = vpop.permute.xlu0 %568
        %s571 = sor.u32 256, 96
        %572 = vbcast.lane.b32.xlu0 %v522, %s571
        %v573 = vpop.permute.xlu0 %572
        %s575 = sor.u32 256, 104
        %576 = vbcast.lane.b32.xlu0 %v522, %s575
        %v577 = vpop.permute.xlu0 %576
        %s579 = sor.u32 256, 112
        %580 = vbcast.lane.b32.xlu0 %v522, %s579
        %v581 = vpop.permute.xlu0 %580
        %s583 = sor.u32 256, 120
        %584 = vbcast.lane.b32.xlu0 %v522, %s583
        %v585 = vpop.permute.xlu0 %584
        %v586 = vlaneseq
        %v587 = vshrl.u32 %v586, 7
        %v588 = vsub.s32 4, %v587
        %v589 = vrot.slane %v244, %v588
        %591 = vbcast.lane.b32.xlu0 %v589, 256
        %v592 = vpop.permute.xlu0 %591
        %s594 = sor.u32 256, 8
        %595 = vbcast.lane.b32.xlu0 %v589, %s594
        %v596 = vpop.permute.xlu0 %595
        %s598 = sor.u32 256, 16
        %599 = vbcast.lane.b32.xlu0 %v589, %s598
        %v600 = vpop.permute.xlu0 %599
        %s602 = sor.u32 256, 24
        %603 = vbcast.lane.b32.xlu0 %v589, %s602
        %v604 = vpop.permute.xlu0 %603
        %s606 = sor.u32 256, 32
        %607 = vbcast.lane.b32.xlu0 %v589, %s606
        %v608 = vpop.permute.xlu0 %607
        %s610 = sor.u32 256, 40
        %611 = vbcast.lane.b32.xlu0 %v589, %s610
        %v612 = vpop.permute.xlu0 %611
        %s614 = sor.u32 256, 48
        %615 = vbcast.lane.b32.xlu0 %v589, %s614
        %v616 = vpop.permute.xlu0 %615
        %s618 = sor.u32 256, 56
        %619 = vbcast.lane.b32.xlu0 %v589, %s618
        %v620 = vpop.permute.xlu0 %619
        %s622 = sor.u32 256, 64
        %623 = vbcast.lane.b32.xlu0 %v589, %s622
        %v624 = vpop.permute.xlu0 %623
        %s626 = sor.u32 256, 72
        %627 = vbcast.lane.b32.xlu0 %v589, %s626
        %v628 = vpop.permute.xlu0 %627
        %s630 = sor.u32 256, 80
        %631 = vbcast.lane.b32.xlu0 %v589, %s630
        %v632 = vpop.permute.xlu0 %631
        %s634 = sor.u32 256, 88
        %635 = vbcast.lane.b32.xlu0 %v589, %s634
        %v636 = vpop.permute.xlu0 %635
        %s638 = sor.u32 256, 96
        %639 = vbcast.lane.b32.xlu0 %v589, %s638
        %v640 = vpop.permute.xlu0 %639
        %s642 = sor.u32 256, 104
        %643 = vbcast.lane.b32.xlu0 %v589, %s642
        %v644 = vpop.permute.xlu0 %643
        %s646 = sor.u32 256, 112
        %647 = vbcast.lane.b32.xlu0 %v589, %s646
        %v648 = vpop.permute.xlu0 %647
        %s650 = sor.u32 256, 120
        %651 = vbcast.lane.b32.xlu0 %v589, %s650
        %v652 = vpop.permute.xlu0 %651
        %v653 = vlaneseq
        %v654 = vshrl.u32 %v653, 7
        %v655 = vsub.s32 5, %v654
        %v656 = vrot.slane %v244, %v655
        %658 = vbcast.lane.b32.xlu0 %v656, 256
        %v659 = vpop.permute.xlu0 %658
        %s661 = sor.u32 256, 8
        %662 = vbcast.lane.b32.xlu0 %v656, %s661
        %v663 = vpop.permute.xlu0 %662
        %s665 = sor.u32 256, 16
        %666 = vbcast.lane.b32.xlu0 %v656, %s665
        %v667 = vpop.permute.xlu0 %666
        %s669 = sor.u32 256, 24
        %670 = vbcast.lane.b32.xlu0 %v656, %s669
        %v671 = vpop.permute.xlu0 %670
        %s673 = sor.u32 256, 32
        %674 = vbcast.lane.b32.xlu0 %v656, %s673
        %v675 = vpop.permute.xlu0 %674
        %s677 = sor.u32 256, 40
        %678 = vbcast.lane.b32.xlu0 %v656, %s677
        %v679 = vpop.permute.xlu0 %678
        %s681 = sor.u32 256, 48
        %682 = vbcast.lane.b32.xlu0 %v656, %s681
        %v683 = vpop.permute.xlu0 %682
        %s685 = sor.u32 256, 56
        %686 = vbcast.lane.b32.xlu0 %v656, %s685
        %v687 = vpop.permute.xlu0 %686
        %s689 = sor.u32 256, 64
        %690 = vbcast.lane.b32.xlu0 %v656, %s689
        %v691 = vpop.permute.xlu0 %690
        %s693 = sor.u32 256, 72
        %694 = vbcast.lane.b32.xlu0 %v656, %s693
        %v695 = vpop.permute.xlu0 %694
        %s697 = sor.u32 256, 80
        %698 = vbcast.lane.b32.xlu0 %v656, %s697
        %v699 = vpop.permute.xlu0 %698
        %s701 = sor.u32 256, 88
        %702 = vbcast.lane.b32.xlu0 %v656, %s701
        %v703 = vpop.permute.xlu0 %702
        %s705 = sor.u32 256, 96
        %706 = vbcast.lane.b32.xlu0 %v656, %s705
        %v707 = vpop.permute.xlu0 %706
        %s709 = sor.u32 256, 104
        %710 = vbcast.lane.b32.xlu0 %v656, %s709
        %v711 = vpop.permute.xlu0 %710
        %s713 = sor.u32 256, 112
        %714 = vbcast.lane.b32.xlu0 %v656, %s713
        %v715 = vpop.permute.xlu0 %714
        %s717 = sor.u32 256, 120
        %718 = vbcast.lane.b32.xlu0 %v656, %s717
        %v719 = vpop.permute.xlu0 %718
        %v720 = vlaneseq
        %v721 = vshrl.u32 %v720, 7
        %v722 = vsub.s32 6, %v721
        %v723 = vrot.slane %v244, %v722
        %725 = vbcast.lane.b32.xlu0 %v723, 256
        %v726 = vpop.permute.xlu0 %725
        %s728 = sor.u32 256, 8
        %729 = vbcast.lane.b32.xlu0 %v723, %s728
        %v730 = vpop.permute.xlu0 %729
        %s732 = sor.u32 256, 16
        %733 = vbcast.lane.b32.xlu0 %v723, %s732
        %v734 = vpop.permute.xlu0 %733
        %s736 = sor.u32 256, 24
        %737 = vbcast.lane.b32.xlu0 %v723, %s736
        %v738 = vpop.permute.xlu0 %737
        %s740 = sor.u32 256, 32
        %741 = vbcast.lane.b32.xlu0 %v723, %s740
        %v742 = vpop.permute.xlu0 %741
        %s744 = sor.u32 256, 40
        %745 = vbcast.lane.b32.xlu0 %v723, %s744
        %v746 = vpop.permute.xlu0 %745
        %s748 = sor.u32 256, 48
        %749 = vbcast.lane.b32.xlu0 %v723, %s748
        %v750 = vpop.permute.xlu0 %749
        %s752 = sor.u32 256, 56
        %753 = vbcast.lane.b32.xlu0 %v723, %s752
        %v754 = vpop.permute.xlu0 %753
        %s756 = sor.u32 256, 64
        %757 = vbcast.lane.b32.xlu0 %v723, %s756
        %v758 = vpop.permute.xlu0 %757
        %s760 = sor.u32 256, 72
        %761 = vbcast.lane.b32.xlu0 %v723, %s760
        %v762 = vpop.permute.xlu0 %761
        %s764 = sor.u32 256, 80
        %765 = vbcast.lane.b32.xlu0 %v723, %s764
        %v766 = vpop.permute.xlu0 %765
        %s768 = sor.u32 256, 88
        %769 = vbcast.lane.b32.xlu0 %v723, %s768
        %v770 = vpop.permute.xlu0 %769
        %s772 = sor.u32 256, 96
        %773 = vbcast.lane.b32.xlu0 %v723, %s772
        %v774 = vpop.permute.xlu0 %773
        %s776 = sor.u32 256, 104
        %777 = vbcast.lane.b32.xlu0 %v723, %s776
        %v778 = vpop.permute.xlu0 %777
        %s780 = sor.u32 256, 112
        %781 = vbcast.lane.b32.xlu0 %v723, %s780
        %v782 = vpop.permute.xlu0 %781
        %s784 = sor.u32 256, 120
        %785 = vbcast.lane.b32.xlu0 %v723, %s784
        %v786 = vpop.permute.xlu0 %785
        %v787 = vlaneseq
        %v788 = vshrl.u32 %v787, 7
        %v789 = vsub.s32 7, %v788
        %v790 = vrot.slane %v244, %v789
        %792 = vbcast.lane.b32.xlu0 %v790, 256
        %v793 = vpop.permute.xlu0 %792
        %s795 = sor.u32 256, 8
        %796 = vbcast.lane.b32.xlu0 %v790, %s795
        %v797 = vpop.permute.xlu0 %796
        %s799 = sor.u32 256, 16
        %800 = vbcast.lane.b32.xlu0 %v790, %s799
        %v801 = vpop.permute.xlu0 %800
        %s803 = sor.u32 256, 24
        %804 = vbcast.lane.b32.xlu0 %v790, %s803
        %v805 = vpop.permute.xlu0 %804
        %s807 = sor.u32 256, 32
        %808 = vbcast.lane.b32.xlu0 %v790, %s807
        %v809 = vpop.permute.xlu0 %808
        %s811 = sor.u32 256, 40
        %812 = vbcast.lane.b32.xlu0 %v790, %s811
        %v813 = vpop.permute.xlu0 %812
        %s815 = sor.u32 256, 48
        %816 = vbcast.lane.b32.xlu0 %v790, %s815
        %v817 = vpop.permute.xlu0 %816
        %s819 = sor.u32 256, 56
        %820 = vbcast.lane.b32.xlu0 %v790, %s819
        %v821 = vpop.permute.xlu0 %820
        %s823 = sor.u32 256, 64
        %824 = vbcast.lane.b32.xlu0 %v790, %s823
        %v825 = vpop.permute.xlu0 %824
        %s827 = sor.u32 256, 72
        %828 = vbcast.lane.b32.xlu0 %v790, %s827
        %v829 = vpop.permute.xlu0 %828
        %s831 = sor.u32 256, 80
        %832 = vbcast.lane.b32.xlu0 %v790, %s831
        %v833 = vpop.permute.xlu0 %832
        %s835 = sor.u32 256, 88
        %836 = vbcast.lane.b32.xlu0 %v790, %s835
        %v837 = vpop.permute.xlu0 %836
        %s839 = sor.u32 256, 96
        %840 = vbcast.lane.b32.xlu0 %v790, %s839
        %v841 = vpop.permute.xlu0 %840
        %s843 = sor.u32 256, 104
        %844 = vbcast.lane.b32.xlu0 %v790, %s843
        %v845 = vpop.permute.xlu0 %844
        %s847 = sor.u32 256, 112
        %848 = vbcast.lane.b32.xlu0 %v790, %s847
        %v849 = vpop.permute.xlu0 %848
        %s851 = sor.u32 256, 120
        %852 = vbcast.lane.b32.xlu0 %v790, %s851
        %v853 = vpop.permute.xlu0 %852
        %vm854 = vcmp.eq.s32.totalorder %v324, %v317
        %vm855 = vcmp.eq.s32.totalorder %v328, %v317
        %vm856 = vcmp.eq.s32.totalorder %v332, %v317
        %vm857 = vcmp.eq.s32.totalorder %v336, %v317
        %vm858 = vcmp.eq.s32.totalorder %v340, %v317
        %vm859 = vcmp.eq.s32.totalorder %v344, %v317
        %vm860 = vcmp.eq.s32.totalorder %v348, %v317
        %vm861 = vcmp.eq.s32.totalorder %v352, %v317
        %vm862 = vcmp.eq.s32.totalorder %v356, %v317
        %vm863 = vcmp.eq.s32.totalorder %v360, %v317
        %vm864 = vcmp.eq.s32.totalorder %v364, %v317
        %vm865 = vcmp.eq.s32.totalorder %v368, %v317
        %vm866 = vcmp.eq.s32.totalorder %v372, %v317
        %vm867 = vcmp.eq.s32.totalorder %v376, %v317
        %vm868 = vcmp.eq.s32.totalorder %v380, %v317
        %vm869 = vcmp.eq.s32.totalorder %v384, %v317
        %vm870 = vcmp.eq.s32.totalorder %v391, %v317
        %vm871 = vcmp.eq.s32.totalorder %v395, %v317
        %vm872 = vcmp.eq.s32.totalorder %v399, %v317
        %vm873 = vcmp.eq.s32.totalorder %v403, %v317
        %vm874 = vcmp.eq.s32.totalorder %v407, %v317
        %vm875 = vcmp.eq.s32.totalorder %v411, %v317
        %vm876 = vcmp.eq.s32.totalorder %v415, %v317
        %vm877 = vcmp.eq.s32.totalorder %v419, %v317
        %vm878 = vcmp.eq.s32.totalorder %v423, %v317
        %vm879 = vcmp.eq.s32.totalorder %v427, %v317
        %vm880 = vcmp.eq.s32.totalorder %v431, %v317
        %vm881 = vcmp.eq.s32.totalorder %v435, %v317
        %vm882 = vcmp.eq.s32.totalorder %v439, %v317
        %vm883 = vcmp.eq.s32.totalorder %v443, %v317
        %vm884 = vcmp.eq.s32.totalorder %v447, %v317
        %vm885 = vcmp.eq.s32.totalorder %v451, %v317
        %vm886 = vcmp.eq.s32.totalorder %v458, %v317
        %vm887 = vcmp.eq.s32.totalorder %v462, %v317
        %vm888 = vcmp.eq.s32.totalorder %v466, %v317
        %vm889 = vcmp.eq.s32.totalorder %v470, %v317
        %vm890 = vcmp.eq.s32.totalorder %v474, %v317
        %vm891 = vcmp.eq.s32.totalorder %v478, %v317
        %vm892 = vcmp.eq.s32.totalorder %v482, %v317
        %vm893 = vcmp.eq.s32.totalorder %v486, %v317
        %vm894 = vcmp.eq.s32.totalorder %v490, %v317
        %vm895 = vcmp.eq.s32.totalorder %v494, %v317
        %vm896 = vcmp.eq.s32.totalorder %v498, %v317
        %vm897 = vcmp.eq.s32.totalorder %v502, %v317
        %vm898 = vcmp.eq.s32.totalorder %v506, %v317
        %vm899 = vcmp.eq.s32.totalorder %v510, %v317
        %vm900 = vcmp.eq.s32.totalorder %v514, %v317
        %vm901 = vcmp.eq.s32.totalorder %v518, %v317
        %vm902 = vcmp.eq.s32.totalorder %v525, %v317
        %vm903 = vcmp.eq.s32.totalorder %v529, %v317
        %vm904 = vcmp.eq.s32.totalorder %v533, %v317
        %vm905 = vcmp.eq.s32.totalorder %v537, %v317
        %vm906 = vcmp.eq.s32.totalorder %v541, %v317
        %vm907 = vcmp.eq.s32.totalorder %v545, %v317
        %vm908 = vcmp.eq.s32.totalorder %v549, %v317
        %vm909 = vcmp.eq.s32.totalorder %v553, %v317
        %vm910 = vcmp.eq.s32.totalorder %v557, %v317
        %vm911 = vcmp.eq.s32.totalorder %v561, %v317
        %vm912 = vcmp.eq.s32.totalorder %v565, %v317
        %vm913 = vcmp.eq.s32.totalorder %v569, %v317
        %vm914 = vcmp.eq.s32.totalorder %v573, %v317
        %vm915 = vcmp.eq.s32.totalorder %v577, %v317
        %vm916 = vcmp.eq.s32.totalorder %v581, %v317
        %vm917 = vcmp.eq.s32.totalorder %v585, %v317
        %vm918 = vcmp.eq.s32.totalorder %v592, %v317
        %vm919 = vcmp.eq.s32.totalorder %v596, %v317
        %vm920 = vcmp.eq.s32.totalorder %v600, %v317
        %vm921 = vcmp.eq.s32.totalorder %v604, %v317
        %vm922 = vcmp.eq.s32.totalorder %v608, %v317
        %vm923 = vcmp.eq.s32.totalorder %v612, %v317
        %vm924 = vcmp.eq.s32.totalorder %v616, %v317
        %vm925 = vcmp.eq.s32.totalorder %v620, %v317
        %vm926 = vcmp.eq.s32.totalorder %v624, %v317
        %vm927 = vcmp.eq.s32.totalorder %v628, %v317
        %vm928 = vcmp.eq.s32.totalorder %v632, %v317
        %vm929 = vcmp.eq.s32.totalorder %v636, %v317
        %vm930 = vcmp.eq.s32.totalorder %v640, %v317
        %vm931 = vcmp.eq.s32.totalorder %v644, %v317
        %vm932 = vcmp.eq.s32.totalorder %v648, %v317
        %vm933 = vcmp.eq.s32.totalorder %v652, %v317
        %vm934 = vcmp.eq.s32.totalorder %v659, %v317
        %vm935 = vcmp.eq.s32.totalorder %v663, %v317
        %vm936 = vcmp.eq.s32.totalorder %v667, %v317
        %vm937 = vcmp.eq.s32.totalorder %v671, %v317
        %vm938 = vcmp.eq.s32.totalorder %v675, %v317
        %vm939 = vcmp.eq.s32.totalorder %v679, %v317
        %vm940 = vcmp.eq.s32.totalorder %v683, %v317
        %vm941 = vcmp.eq.s32.totalorder %v687, %v317
        %vm942 = vcmp.eq.s32.totalorder %v691, %v317
        %vm943 = vcmp.eq.s32.totalorder %v695, %v317
        %vm944 = vcmp.eq.s32.totalorder %v699, %v317
        %vm945 = vcmp.eq.s32.totalorder %v703, %v317
        %vm946 = vcmp.eq.s32.totalorder %v707, %v317
        %vm947 = vcmp.eq.s32.totalorder %v711, %v317
        %vm948 = vcmp.eq.s32.totalorder %v715, %v317
        %vm949 = vcmp.eq.s32.totalorder %v719, %v317
        %vm950 = vcmp.eq.s32.totalorder %v726, %v317
        %vm951 = vcmp.eq.s32.totalorder %v730, %v317
        %vm952 = vcmp.eq.s32.totalorder %v734, %v317
        %vm953 = vcmp.eq.s32.totalorder %v738, %v317
        %vm954 = vcmp.eq.s32.totalorder %v742, %v317
        %vm955 = vcmp.eq.s32.totalorder %v746, %v317
        %vm956 = vcmp.eq.s32.totalorder %v750, %v317
        %vm957 = vcmp.eq.s32.totalorder %v754, %v317
        %vm958 = vcmp.eq.s32.totalorder %v758, %v317
        %vm959 = vcmp.eq.s32.totalorder %v762, %v317
        %vm960 = vcmp.eq.s32.totalorder %v766, %v317
        %vm961 = vcmp.eq.s32.totalorder %v770, %v317
        %vm962 = vcmp.eq.s32.totalorder %v774, %v317
        %vm963 = vcmp.eq.s32.totalorder %v778, %v317
        %vm964 = vcmp.eq.s32.totalorder %v782, %v317
        %vm965 = vcmp.eq.s32.totalorder %v786, %v317
        %vm966 = vcmp.eq.s32.totalorder %v793, %v317
        %vm967 = vcmp.eq.s32.totalorder %v797, %v317
        %vm968 = vcmp.eq.s32.totalorder %v801, %v317
        %vm969 = vcmp.eq.s32.totalorder %v805, %v317
        %vm970 = vcmp.eq.s32.totalorder %v809, %v317
        %vm971 = vcmp.eq.s32.totalorder %v813, %v317
        %vm972 = vcmp.eq.s32.totalorder %v817, %v317
        %vm973 = vcmp.eq.s32.totalorder %v821, %v317
        %vm974 = vcmp.eq.s32.totalorder %v825, %v317
        %vm975 = vcmp.eq.s32.totalorder %v829, %v317
        %vm976 = vcmp.eq.s32.totalorder %v833, %v317
        %vm977 = vcmp.eq.s32.totalorder %v837, %v317
        %vm978 = vcmp.eq.s32.totalorder %v841, %v317
        %vm979 = vcmp.eq.s32.totalorder %v845, %v317
        %vm980 = vcmp.eq.s32.totalorder %v849, %v317
        %vm981 = vcmp.eq.s32.totalorder %v853, %v317
        %v982 = vsel %vm854, 1, 0
        %v983 = vsel %vm855, 1, 0
        %v984 = vsel %vm856, 1, 0
        %v985 = vsel %vm857, 1, 0
        %v986 = vsel %vm858, 1, 0
        %v987 = vsel %vm859, 1, 0
        %v988 = vsel %vm860, 1, 0
        %v989 = vsel %vm861, 1, 0
        %v990 = vsel %vm862, 1, 0
        %v991 = vsel %vm863, 1, 0
        %v992 = vsel %vm864, 1, 0
        %v993 = vsel %vm865, 1, 0
        %v994 = vsel %vm866, 1, 0
        %v995 = vsel %vm867, 1, 0
        %v996 = vsel %vm868, 1, 0
        %v997 = vsel %vm869, 1, 0
        %v998 = vsel %vm870, 1, 0
        %v999 = vsel %vm871, 1, 0
        %v1000 = vsel %vm872, 1, 0
        %v1001 = vsel %vm873, 1, 0
        %v1002 = vsel %vm874, 1, 0
        %v1003 = vsel %vm875, 1, 0
        %v1004 = vsel %vm876, 1, 0
        %v1005 = vsel %vm877, 1, 0
        %v1006 = vsel %vm878, 1, 0
        %v1007 = vsel %vm879, 1, 0
        %v1008 = vsel %vm880, 1, 0
        %v1009 = vsel %vm881, 1, 0
        %v1010 = vsel %vm882, 1, 0
        %v1011 = vsel %vm883, 1, 0
        %v1012 = vsel %vm884, 1, 0
        %v1013 = vsel %vm885, 1, 0
        %v1014 = vsel %vm886, 1, 0
        %v1015 = vsel %vm887, 1, 0
        %v1016 = vsel %vm888, 1, 0
        %v1017 = vsel %vm889, 1, 0
        %v1018 = vsel %vm890, 1, 0
        %v1019 = vsel %vm891, 1, 0
        %v1020 = vsel %vm892, 1, 0
        %v1021 = vsel %vm893, 1, 0
        %v1022 = vsel %vm894, 1, 0
        %v1023 = vsel %vm895, 1, 0
        %v1024 = vsel %vm896, 1, 0
        %v1025 = vsel %vm897, 1, 0
        %v1026 = vsel %vm898, 1, 0
        %v1027 = vsel %vm899, 1, 0
        %v1028 = vsel %vm900, 1, 0
        %v1029 = vsel %vm901, 1, 0
        %v1030 = vsel %vm902, 1, 0
        %v1031 = vsel %vm903, 1, 0
        %v1032 = vsel %vm904, 1, 0
        %v1033 = vsel %vm905, 1, 0
        %v1034 = vsel %vm906, 1, 0
        %v1035 = vsel %vm907, 1, 0
        %v1036 = vsel %vm908, 1, 0
        %v1037 = vsel %vm909, 1, 0
        %v1038 = vsel %vm910, 1, 0
        %v1039 = vsel %vm911, 1, 0
        %v1040 = vsel %vm912, 1, 0
        %v1041 = vsel %vm913, 1, 0
        %v1042 = vsel %vm914, 1, 0
        %v1043 = vsel %vm915, 1, 0
        %v1044 = vsel %vm916, 1, 0
        %v1045 = vsel %vm917, 1, 0
        %v1046 = vsel %vm918, 1, 0
        %v1047 = vsel %vm919, 1, 0
        %v1048 = vsel %vm920, 1, 0
        %v1049 = vsel %vm921, 1, 0
        %v1050 = vsel %vm922, 1, 0
        %v1051 = vsel %vm923, 1, 0
        %v1052 = vsel %vm924, 1, 0
        %v1053 = vsel %vm925, 1, 0
        %v1054 = vsel %vm926, 1, 0
        %v1055 = vsel %vm927, 1, 0
        %v1056 = vsel %vm928, 1, 0
        %v1057 = vsel %vm929, 1, 0
        %v1058 = vsel %vm930, 1, 0
        %v1059 = vsel %vm931, 1, 0
        %v1060 = vsel %vm932, 1, 0
        %v1061 = vsel %vm933, 1, 0
        %v1062 = vsel %vm934, 1, 0
        %v1063 = vsel %vm935, 1, 0
        %v1064 = vsel %vm936, 1, 0
        %v1065 = vsel %vm937, 1, 0
        %v1066 = vsel %vm938, 1, 0
        %v1067 = vsel %vm939, 1, 0
        %v1068 = vsel %vm940, 1, 0
        %v1069 = vsel %vm941, 1, 0
        %v1070 = vsel %vm942, 1, 0
        %v1071 = vsel %vm943, 1, 0
        %v1072 = vsel %vm944, 1, 0
        %v1073 = vsel %vm945, 1, 0
        %v1074 = vsel %vm946, 1, 0
        %v1075 = vsel %vm947, 1, 0
        %v1076 = vsel %vm948, 1, 0
        %v1077 = vsel %vm949, 1, 0
        %v1078 = vsel %vm950, 1, 0
        %v1079 = vsel %vm951, 1, 0
        %v1080 = vsel %vm952, 1, 0
        %v1081 = vsel %vm953, 1, 0
        %v1082 = vsel %vm954, 1, 0
        %v1083 = vsel %vm955, 1, 0
        %v1084 = vsel %vm956, 1, 0
        %v1085 = vsel %vm957, 1, 0
        %v1086 = vsel %vm958, 1, 0
        %v1087 = vsel %vm959, 1, 0
        %v1088 = vsel %vm960, 1, 0
        %v1089 = vsel %vm961, 1, 0
        %v1090 = vsel %vm962, 1, 0
        %v1091 = vsel %vm963, 1, 0
        %v1092 = vsel %vm964, 1, 0
        %v1093 = vsel %vm965, 1, 0
        %v1094 = vsel %vm966, 1, 0
        %v1095 = vsel %vm967, 1, 0
        %v1096 = vsel %vm968, 1, 0
        %v1097 = vsel %vm969, 1, 0
        %v1098 = vsel %vm970, 1, 0
        %v1099 = vsel %vm971, 1, 0
        %v1100 = vsel %vm972, 1, 0
        %v1101 = vsel %vm973, 1, 0
        %v1102 = vsel %vm974, 1, 0
        %v1103 = vsel %vm975, 1, 0
        %v1104 = vsel %vm976, 1, 0
        %v1105 = vsel %vm977, 1, 0
        %v1106 = vsel %vm978, 1, 0
        %v1107 = vsel %vm979, 1, 0
        %v1108 = vsel %vm980, 1, 0
        %v1109 = vsel %vm981, 1, 0
        %v1110 = vcvt.s32.f32 %v982
        %v1111 = vcvt.s32.f32 %v983
        %v1112 = vcvt.s32.f32 %v984
        %v1113 = vcvt.s32.f32 %v985
        %v1114 = vcvt.s32.f32 %v986
        %v1115 = vcvt.s32.f32 %v987
        %v1116 = vcvt.s32.f32 %v988
        %v1117 = vcvt.s32.f32 %v989
        %v1118 = vcvt.s32.f32 %v990
        %v1119 = vcvt.s32.f32 %v991
        %v1120 = vcvt.s32.f32 %v992
        %v1121 = vcvt.s32.f32 %v993
        %v1122 = vcvt.s32.f32 %v994
        %v1123 = vcvt.s32.f32 %v995
        %v1124 = vcvt.s32.f32 %v996
        %v1125 = vcvt.s32.f32 %v997
        %v1126 = vcvt.s32.f32 %v998
        %v1127 = vcvt.s32.f32 %v999
        %v1128 = vcvt.s32.f32 %v1000
        %v1129 = vcvt.s32.f32 %v1001
        %v1130 = vcvt.s32.f32 %v1002
        %v1131 = vcvt.s32.f32 %v1003
        %v1132 = vcvt.s32.f32 %v1004
        %v1133 = vcvt.s32.f32 %v1005
        %v1134 = vcvt.s32.f32 %v1006
        %v1135 = vcvt.s32.f32 %v1007
        %v1136 = vcvt.s32.f32 %v1008
        %v1137 = vcvt.s32.f32 %v1009
        %v1138 = vcvt.s32.f32 %v1010
        %v1139 = vcvt.s32.f32 %v1011
        %v1140 = vcvt.s32.f32 %v1012
        %v1141 = vcvt.s32.f32 %v1013
        %v1142 = vcvt.s32.f32 %v1014
        %v1143 = vcvt.s32.f32 %v1015
        %v1144 = vcvt.s32.f32 %v1016
        %v1145 = vcvt.s32.f32 %v1017
        %v1146 = vcvt.s32.f32 %v1018
        %v1147 = vcvt.s32.f32 %v1019
        %v1148 = vcvt.s32.f32 %v1020
        %v1149 = vcvt.s32.f32 %v1021
        %v1150 = vcvt.s32.f32 %v1022
        %v1151 = vcvt.s32.f32 %v1023
        %v1152 = vcvt.s32.f32 %v1024
        %v1153 = vcvt.s32.f32 %v1025
        %v1154 = vcvt.s32.f32 %v1026
        %v1155 = vcvt.s32.f32 %v1027
        %v1156 = vcvt.s32.f32 %v1028
        %v1157 = vcvt.s32.f32 %v1029
        %v1158 = vcvt.s32.f32 %v1030
        %v1159 = vcvt.s32.f32 %v1031
        %v1160 = vcvt.s32.f32 %v1032
        %v1161 = vcvt.s32.f32 %v1033
        %v1162 = vcvt.s32.f32 %v1034
        %v1163 = vcvt.s32.f32 %v1035
        %v1164 = vcvt.s32.f32 %v1036
        %v1165 = vcvt.s32.f32 %v1037
        %v1166 = vcvt.s32.f32 %v1038
        %v1167 = vcvt.s32.f32 %v1039
        %v1168 = vcvt.s32.f32 %v1040
        %v1169 = vcvt.s32.f32 %v1041
        %v1170 = vcvt.s32.f32 %v1042
        %v1171 = vcvt.s32.f32 %v1043
        %v1172 = vcvt.s32.f32 %v1044
        %v1173 = vcvt.s32.f32 %v1045
        %v1174 = vcvt.s32.f32 %v1046
        %v1175 = vcvt.s32.f32 %v1047
        %v1176 = vcvt.s32.f32 %v1048
        %v1177 = vcvt.s32.f32 %v1049
        %v1178 = vcvt.s32.f32 %v1050
        %v1179 = vcvt.s32.f32 %v1051
        %v1180 = vcvt.s32.f32 %v1052
        %v1181 = vcvt.s32.f32 %v1053
        %v1182 = vcvt.s32.f32 %v1054
        %v1183 = vcvt.s32.f32 %v1055
        %v1184 = vcvt.s32.f32 %v1056
        %v1185 = vcvt.s32.f32 %v1057
        %v1186 = vcvt.s32.f32 %v1058
        %v1187 = vcvt.s32.f32 %v1059
        %v1188 = vcvt.s32.f32 %v1060
        %v1189 = vcvt.s32.f32 %v1061
        %v1190 = vcvt.s32.f32 %v1062
        %v1191 = vcvt.s32.f32 %v1063
        %v1192 = vcvt.s32.f32 %v1064
        %v1193 = vcvt.s32.f32 %v1065
        %v1194 = vcvt.s32.f32 %v1066
        %v1195 = vcvt.s32.f32 %v1067
        %v1196 = vcvt.s32.f32 %v1068
        %v1197 = vcvt.s32.f32 %v1069
        %v1198 = vcvt.s32.f32 %v1070
        %v1199 = vcvt.s32.f32 %v1071
        %v1200 = vcvt.s32.f32 %v1072
        %v1201 = vcvt.s32.f32 %v1073
        %v1202 = vcvt.s32.f32 %v1074
        %v1203 = vcvt.s32.f32 %v1075
        %v1204 = vcvt.s32.f32 %v1076
        %v1205 = vcvt.s32.f32 %v1077
        %v1206 = vcvt.s32.f32 %v1078
        %v1207 = vcvt.s32.f32 %v1079
        %v1208 = vcvt.s32.f32 %v1080
        %v1209 = vcvt.s32.f32 %v1081
        %v1210 = vcvt.s32.f32 %v1082
        %v1211 = vcvt.s32.f32 %v1083
        %v1212 = vcvt.s32.f32 %v1084
        %v1213 = vcvt.s32.f32 %v1085
        %v1214 = vcvt.s32.f32 %v1086
        %v1215 = vcvt.s32.f32 %v1087
        %v1216 = vcvt.s32.f32 %v1088
        %v1217 = vcvt.s32.f32 %v1089
        %v1218 = vcvt.s32.f32 %v1090
        %v1219 = vcvt.s32.f32 %v1091
        %v1220 = vcvt.s32.f32 %v1092
        %v1221 = vcvt.s32.f32 %v1093
        %v1222 = vcvt.s32.f32 %v1094
        %v1223 = vcvt.s32.f32 %v1095
        %v1224 = vcvt.s32.f32 %v1096
        %v1225 = vcvt.s32.f32 %v1097
        %v1226 = vcvt.s32.f32 %v1098
        %v1227 = vcvt.s32.f32 %v1099
        %v1228 = vcvt.s32.f32 %v1100
        %v1229 = vcvt.s32.f32 %v1101
        %v1230 = vcvt.s32.f32 %v1102
        %v1231 = vcvt.s32.f32 %v1103
        %v1232 = vcvt.s32.f32 %v1104
        %v1233 = vcvt.s32.f32 %v1105
        %v1234 = vcvt.s32.f32 %v1106
        %v1235 = vcvt.s32.f32 %v1107
        %v1236 = vcvt.s32.f32 %v1108
        %v1237 = vcvt.s32.f32 %v1109
        %1238 = vmatprep.subr.mxu0 %v246
        %1239 = vmatpush1.msra.mxu0 %v245
        %1240 = vmatprep.subr.mxu0 %v248
        %1241 = vmatpush1.msra.mxu0 %v247
        %1242 = vmatprep.subr.mxu0 %v250
        %1243 = vmatpush1.msra.mxu0 %v249
        %1244 = vmatprep.subr.mxu0 %v252
        %1245 = vmatpush1.msra.mxu0 %v251
        %1246 = vmatprep.subr.mxu0 %v254
        %1247 = vmatpush1.msra.mxu0 %v253
        %1248 = vmatprep.subr.mxu0 %v256
        %1249 = vmatpush1.msra.mxu0 %v255
        %1250 = vmatprep.subr.mxu0 %v258
        %1251 = vmatpush1.msra.mxu0 %v257
        %1252 = vmatprep.subr.mxu0 %v260
        %1253 = vmatpush1.msra.mxu0 %v259
        %1254 = vmatprep.subr.mxu0 %v262
        %1255 = vmatpush1.msra.mxu0 %v261
        %1256 = vmatprep.subr.mxu0 %v264
        %1257 = vmatpush1.msra.mxu0 %v263
        %1258 = vmatprep.subr.mxu0 %v266
        %1259 = vmatpush1.msra.mxu0 %v265
        %1260 = vmatprep.subr.mxu0 %v268
        %1261 = vmatpush1.msra.mxu0 %v267
        %1262 = vmatprep.subr.mxu0 %v270
        %1263 = vmatpush1.msra.mxu0 %v269
        %1264 = vmatprep.subr.mxu0 %v272
        %1265 = vmatpush1.msra.mxu0 %v271
        %1266 = vmatprep.subr.mxu0 %v274
        %1267 = vmatpush1.msra.mxu0 %v273
        %1268 = vmatprep.subr.mxu0 %v276
        %1269 = vmatpush1.msra.mxu0 %v275
        %1270 = vmatprep.subr.mxu0 0.0
        %1271 = vmatpush1.msra.mxu0 0.0
        %1272 = vmatprep.subr.mxu0 0.0
        %1273 = vmatpush1.msra.mxu0 0.0
        %1274 = vmatprep.subr.mxu0 0.0
        %1275 = vmatpush1.msra.mxu0 0.0
        %1276 = vmatprep.subr.mxu0 0.0
        %1277 = vmatpush1.msra.mxu0 0.0
        %1278 = vmatprep.subr.mxu0 0.0
        %1279 = vmatpush1.msra.mxu0 0.0
        %1280 = vmatprep.subr.mxu0 0.0
        %1281 = vmatpush1.msra.mxu0 0.0
        %1282 = vmatprep.subr.mxu0 0.0
        %1283 = vmatpush1.msra.mxu0 0.0
        %1284 = vmatprep.subr.mxu0 0.0
        %1285 = vmatpush1.msra.mxu0 0.0
        %1286 = vmatprep.subr.mxu0 0.0
        %1287 = vmatpush1.msra.mxu0 0.0
        %1288 = vmatprep.subr.mxu0 0.0
        %1289 = vmatpush1.msra.mxu0 0.0
        %1290 = vmatprep.subr.mxu0 0.0
        %1291 = vmatpush1.msra.mxu0 0.0
        %1292 = vmatprep.subr.mxu0 0.0
        %1293 = vmatpush1.msra.mxu0 0.0
        %1294 = vmatprep.subr.mxu0 0.0
        %1295 = vmatpush1.msra.mxu0 0.0
        %1296 = vmatprep.subr.mxu0 0.0
        %1297 = vmatpush1.msra.mxu0 0.0
        %1298 = vmatprep.subr.mxu0 0.0
        %1299 = vmatpush1.msra.mxu0 0.0
        %1300 = vmatprep.subr.mxu0 0.0
        %1301 = vmatpush1.msra.mxu0 0.0
        %1302 = vmatprep.mubr.f32.mxu0 0.0
        %1303 = vmatmul.mubr.f32.gmra.mrb[0].mxu0 %v1110
        %v1304 = vpop.f32.mrb[0].mxu0
        %v1305 = vadd.f32 0.0, %v1304
        %v1306 = vpop.f32.mrb[0].mxu0
        %v1307 = vadd.f32 0.0, %v1306
        %1308 = vmatprep.mubr.f32.mxu0 0.0
        %1309 = vmatmul.mubr.f32.gmra.mrb[0].mxu0 %v1111
        %v1310 = vpop.f32.mrb[0].mxu0
        %v1311 = vadd.f32 0.0, %v1310
        %v1312 = vpop.f32.mrb[0].mxu0
        %v1313 = vadd.f32 0.0, %v1312
        %1314 = vmatprep.mubr.f32.mxu0 0.0
        %1315 = vmatmul.mubr.f32.gmra.mrb[0].mxu0 %v1112
        %v1316 = vpop.f32.mrb[0].mxu0
        %v1317 = vadd.f32 0.0, %v1316
        %v1318 = vpop.f32.mrb[0].mxu0
        %v1319 = vadd.f32 0.0, %v1318
        %1320 = vmatprep.mubr.f32.mxu0 0.0
        %1321 = vmatmul.mubr.f32.gmra.mrb[0].mxu0 %v1113
        %v1322 = vpop.f32.mrb[0].mxu0
        %v1323 = vadd.f32 0.0, %v1322
        %v1324 = vpop.f32.mrb[0].mxu0
        %v1325 = vadd.f32 0.0, %v1324
        %1326 = vmatprep.mubr.f32.mxu0 0.0
        %1327 = vmatmul.mubr.f32.gmra.mrb[0].mxu0 %v1114
        %v1328 = vpop.f32.mrb[0].mxu0
        %v1329 = vadd.f32 0.0, %v1328
        %v1330 = vpop.f32.mrb[0].mxu0
        %v1331 = vadd.f32 0.0, %v1330
        %1332 = vmatprep.mubr.f32.mxu0 0.0
        %1333 = vmatmul.mubr.f32.gmra.mrb[0].mxu0 %v1115
        %v1334 = vpop.f32.mrb[0].mxu0
        %v1335 = vadd.f32 0.0, %v1334
        %v1336 = vpop.f32.mrb[0].mxu0
        %v1337 = vadd.f32 0.0, %v1336
        %1338 = vmatprep.mubr.f32.mxu0 0.0
        %1339 = vmatmul.mubr.f32.gmra.mrb[0].mxu0 %v1116
        %v1340 = vpop.f32.mrb[0].mxu0
        %v1341 = vadd.f32 0.0, %v1340
        %v1342 = vpop.f32.mrb[0].mxu0
        %v1343 = vadd.f32 0.0, %v1342
        %1344 = vmatprep.mubr.f32.mxu0 0.0
        %1345 = vmatmul.mubr.f32.gmra.mrb[0].mxu0 %v1117
        %v1346 = vpop.f32.mrb[0].mxu0
        %v1347 = vadd.f32 0.0, %v1346
        %v1348 = vpop.f32.mrb[0].mxu0
        %v1349 = vadd.f32 0.0, %v1348
        %1350 = vmatprep.mubr.f32.mxu0 0.0
        %1351 = vmatmul.mubr.f32.gmra.mrb[0].mxu0 %v1118
        %v1352 = vpop.f32.mrb[0].mxu0
        %v1353 = vadd.f32 0.0, %v1352
        %v1354 = vpop.f32.mrb[0].mxu0
        %v1355 = vadd.f32 0.0, %v1354
        %1356 = vmatprep.mubr.f32.mxu0 0.0
        %1357 = vmatmul.mubr.f32.gmra.mrb[0].mxu0 %v1119
        %v1358 = vpop.f32.mrb[0].mxu0
        %v1359 = vadd.f32 0.0, %v1358
        %v1360 = vpop.f32.mrb[0].mxu0
        %v1361 = vadd.f32 0.0, %v1360
        %1362 = vmatprep.mubr.f32.mxu0 0.0
        %1363 = vmatmul.mubr.f32.gmra.mrb[0].mxu0 %v1120
        %v1364 = vpop.f32.mrb[0].mxu0
        %v1365 = vadd.f32 0.0, %v1364
        %v1366 = vpop.f32.mrb[0].mxu0
        %v1367 = vadd.f32 0.0, %v1366
        %1368 = vmatprep.mubr.f32.mxu0 0.0
        %1369 = vmatmul.mubr.f32.gmra.mrb[0].mxu0 %v1121
        %v1370 = vpop.f32.mrb[0].mxu0
        %v1371 = vadd.f32 0.0, %v1370
        %v1372 = vpop.f32.mrb[0].mxu0
        %v1373 = vadd.f32 0.0, %v1372
        %1374 = vmatprep.mubr.f32.mxu0 0.0
        %1375 = vmatmul.mubr.f32.gmra.mrb[0].mxu0 %v1122
        %v1376 = vpop.f32.mrb[0].mxu0
        %v1377 = vadd.f32 0.0, %v1376
        %v1378 = vpop.f32.mrb[0].mxu0
        %v1379 = vadd.f32 0.0, %v1378
        %1380 = vmatprep.mubr.f32.mxu0 0.0
        %1381 = vmatmul.mubr.f32.gmra.mrb[0].mxu0 %v1123
        %v1382 = vpop.f32.mrb[0].mxu0
        %v1383 = vadd.f32 0.0, %v1382
        %v1384 = vpop.f32.mrb[0].mxu0
        %v1385 = vadd.f32 0.0, %v1384
        %1386 = vmatprep.mubr.f32.mxu0 0.0
        %1387 = vmatmul.mubr.f32.gmra.mrb[0].mxu0 %v1124
        %v1388 = vpop.f32.mrb[0].mxu0
        %v1389 = vadd.f32 0.0, %v1388
        %v1390 = vpop.f32.mrb[0].mxu0
        %v1391 = vadd.f32 0.0, %v1390
        %1392 = vmatprep.mubr.f32.mxu0 0.0
        %1393 = vmatmul.mubr.f32.gmra.mrb[0].mxu0 %v1125
        %v1394 = vpop.f32.mrb[0].mxu0
        %v1395 = vadd.f32 0.0, %v1394
        %v1396 = vpop.f32.mrb[0].mxu0
        %v1397 = vadd.f32 0.0, %v1396
        %1398 = vmatprep.mubr.f32.mxu0 0.0
        %1399 = vmatmul.mubr.f32.gmra.mrb[0].mxu0 %v1126
        %v1400 = vpop.f32.mrb[0].mxu0
        %v1401 = vadd.f32 0.0, %v1400
        %v1402 = vpop.f32.mrb[0].mxu0
        %v1403 = vadd.f32 0.0, %v1402
        %1404 = vmatprep.mubr.f32.mxu0 0.0
        %1405 = vmatmul.mubr.f32.gmra.mrb[0].mxu0 %v1127
        %v1406 = vpop.f32.mrb[0].mxu0
        %v1407 = vadd.f32 0.0, %v1406
        %v1408 = vpop.f32.mrb[0].mxu0
        %v1409 = vadd.f32 0.0, %v1408
        %1410 = vmatprep.mubr.f32.mxu0 0.0
        %1411 = vmatmul.mubr.f32.gmra.mrb[0].mxu0 %v1128
        %v1412 = vpop.f32.mrb[0].mxu0
        %v1413 = vadd.f32 0.0, %v1412
        %v1414 = vpop.f32.mrb[0].mxu0
        %v1415 = vadd.f32 0.0, %v1414
        %1416 = vmatprep.mubr.f32.mxu0 0.0
        %1417 = vmatmul.mubr.f32.gmra.mrb[0].mxu0 %v1129
        %v1418 = vpop.f32.mrb[0].mxu0
        %v1419 = vadd.f32 0.0, %v1418
        %v1420 = vpop.f32.mrb[0].mxu0
        %v1421 = vadd.f32 0.0, %v1420
        %1422 = vmatprep.mubr.f32.mxu0 0.0
        %1423 = vmatmul.mubr.f32.gmra.mrb[0].mxu0 %v1130
        %v1424 = vpop.f32.mrb[0].mxu0
        %v1425 = vadd.f32 0.0, %v1424
        %v1426 = vpop.f32.mrb[0].mxu0
        %v1427 = vadd.f32 0.0, %v1426
        %1428 = vmatprep.mubr.f32.mxu0 0.0
        %1429 = vmatmul.mubr.f32.gmra.mrb[0].mxu0 %v1131
        %v1430 = vpop.f32.mrb[0].mxu0
        %v1431 = vadd.f32 0.0, %v1430
        %v1432 = vpop.f32.mrb[0].mxu0
        %v1433 = vadd.f32 0.0, %v1432
        %1434 = vmatprep.mubr.f32.mxu0 0.0
        %1435 = vmatmul.mubr.f32.gmra.mrb[0].mxu0 %v1132
        %v1436 = vpop.f32.mrb[0].mxu0
        %v1437 = vadd.f32 0.0, %v1436
        %v1438 = vpop.f32.mrb[0].mxu0
        %v1439 = vadd.f32 0.0, %v1438
        %1440 = vmatprep.mubr.f32.mxu0 0.0
        %1441 = vmatmul.mubr.f32.gmra.mrb[0].mxu0 %v1133
        %v1442 = vpop.f32.mrb[0].mxu0
        %v1443 = vadd.f32 0.0, %v1442
        %v1444 = vpop.f32.mrb[0].mxu0
        %v1445 = vadd.f32 0.0, %v1444
        %1446 = vmatprep.mubr.f32.mxu0 0.0
        %1447 = vmatmul.mubr.f32.gmra.mrb[0].mxu0 %v1134
        %v1448 = vpop.f32.mrb[0].mxu0
        %v1449 = vadd.f32 0.0, %v1448
        %v1450 = vpop.f32.mrb[0].mxu0
        %v1451 = vadd.f32 0.0, %v1450
        %1452 = vmatprep.mubr.f32.mxu0 0.0
        %1453 = vmatmul.mubr.f32.gmra.mrb[0].mxu0 %v1135
        %v1454 = vpop.f32.mrb[0].mxu0
        %v1455 = vadd.f32 0.0, %v1454
        %v1456 = vpop.f32.mrb[0].mxu0
        %v1457 = vadd.f32 0.0, %v1456
        %1458 = vmatprep.mubr.f32.mxu0 0.0
        %1459 = vmatmul.mubr.f32.gmra.mrb[0].mxu0 %v1136
        %v1460 = vpop.f32.mrb[0].mxu0
        %v1461 = vadd.f32 0.0, %v1460
        %v1462 = vpop.f32.mrb[0].mxu0
        %v1463 = vadd.f32 0.0, %v1462
        %1464 = vmatprep.mubr.f32.mxu0 0.0
        %1465 = vmatmul.mubr.f32.gmra.mrb[0].mxu0 %v1137
        %v1466 = vpop.f32.mrb[0].mxu0
        %v1467 = vadd.f32 0.0, %v1466
        %v1468 = vpop.f32.mrb[0].mxu0
        %v1469 = vadd.f32 0.0, %v1468
        %1470 = vmatprep.mubr.f32.mxu0 0.0
        %1471 = vmatmul.mubr.f32.gmra.mrb[0].mxu0 %v1138
        %v1472 = vpop.f32.mrb[0].mxu0
        %v1473 = vadd.f32 0.0, %v1472
        %v1474 = vpop.f32.mrb[0].mxu0
        %v1475 = vadd.f32 0.0, %v1474
        %1476 = vmatprep.mubr.f32.mxu0 0.0
        %1477 = vmatmul.mubr.f32.gmra.mrb[0].mxu0 %v1139
        %v1478 = vpop.f32.mrb[0].mxu0
        %v1479 = vadd.f32 0.0, %v1478
        %v1480 = vpop.f32.mrb[0].mxu0
        %v1481 = vadd.f32 0.0, %v1480
        %1482 = vmatprep.mubr.f32.mxu0 0.0
        %1483 = vmatmul.mubr.f32.gmra.mrb[0].mxu0 %v1140
        %v1484 = vpop.f32.mrb[0].mxu0
        %v1485 = vadd.f32 0.0, %v1484
        %v1486 = vpop.f32.mrb[0].mxu0
        %v1487 = vadd.f32 0.0, %v1486
        %1488 = vmatprep.mubr.f32.mxu0 0.0
        %1489 = vmatmul.mubr.f32.gmra.mrb[0].mxu0 %v1141
        %v1490 = vpop.f32.mrb[0].mxu0
        %v1491 = vadd.f32 0.0, %v1490
        %v1492 = vpop.f32.mrb[0].mxu0
        %v1493 = vadd.f32 0.0, %v1492
        %1494 = vmatprep.mubr.f32.mxu0 0.0
        %1495 = vmatmul.mubr.f32.gmra.mrb[0].mxu0 %v1142
        %v1496 = vpop.f32.mrb[0].mxu0
        %v1497 = vadd.f32 0.0, %v1496
        %v1498 = vpop.f32.mrb[0].mxu0
        %v1499 = vadd.f32 0.0, %v1498
        %1500 = vmatprep.mubr.f32.mxu0 0.0
        %1501 = vmatmul.mubr.f32.gmra.mrb[0].mxu0 %v1143
        %v1502 = vpop.f32.mrb[0].mxu0
        %v1503 = vadd.f32 0.0, %v1502
        %v1504 = vpop.f32.mrb[0].mxu0
        %v1505 = vadd.f32 0.0, %v1504
        %1506 = vmatprep.mubr.f32.mxu0 0.0
        %1507 = vmatmul.mubr.f32.gmra.mrb[0].mxu0 %v1144
        %v1508 = vpop.f32.mrb[0].mxu0
        %v1509 = vadd.f32 0.0, %v1508
        %v1510 = vpop.f32.mrb[0].mxu0
        %v1511 = vadd.f32 0.0, %v1510
        %1512 = vmatprep.mubr.f32.mxu0 0.0
        %1513 = vmatmul.mubr.f32.gmra.mrb[0].mxu0 %v1145
        %v1514 = vpop.f32.mrb[0].mxu0
        %v1515 = vadd.f32 0.0, %v1514
        %v1516 = vpop.f32.mrb[0].mxu0
        %v1517 = vadd.f32 0.0, %v1516
        %1518 = vmatprep.mubr.f32.mxu0 0.0
        %1519 = vmatmul.mubr.f32.gmra.mrb[0].mxu0 %v1146
        %v1520 = vpop.f32.mrb[0].mxu0
        %v1521 = vadd.f32 0.0, %v1520
        %v1522 = vpop.f32.mrb[0].mxu0
        %v1523 = vadd.f32 0.0, %v1522
        %1524 = vmatprep.mubr.f32.mxu0 0.0
        %1525 = vmatmul.mubr.f32.gmra.mrb[0].mxu0 %v1147
        %v1526 = vpop.f32.mrb[0].mxu0
        %v1527 = vadd.f32 0.0, %v1526
        %v1528 = vpop.f32.mrb[0].mxu0
        %v1529 = vadd.f32 0.0, %v1528
        %1530 = vmatprep.mubr.f32.mxu0 0.0
        %1531 = vmatmul.mubr.f32.gmra.mrb[0].mxu0 %v1148
        %v1532 = vpop.f32.mrb[0].mxu0
        %v1533 = vadd.f32 0.0, %v1532
        %v1534 = vpop.f32.mrb[0].mxu0
        %v1535 = vadd.f32 0.0, %v1534
        %1536 = vmatprep.mubr.f32.mxu0 0.0
        %1537 = vmatmul.mubr.f32.gmra.mrb[0].mxu0 %v1149
        %v1538 = vpop.f32.mrb[0].mxu0
        %v1539 = vadd.f32 0.0, %v1538
        %v1540 = vpop.f32.mrb[0].mxu0
        %v1541 = vadd.f32 0.0, %v1540
        %1542 = vmatprep.mubr.f32.mxu0 0.0
        %1543 = vmatmul.mubr.f32.gmra.mrb[0].mxu0 %v1150
        %v1544 = vpop.f32.mrb[0].mxu0
        %v1545 = vadd.f32 0.0, %v1544
        %v1546 = vpop.f32.mrb[0].mxu0
        %v1547 = vadd.f32 0.0, %v1546
        %1548 = vmatprep.mubr.f32.mxu0 0.0
        %1549 = vmatmul.mubr.f32.gmra.mrb[0].mxu0 %v1151
        %v1550 = vpop.f32.mrb[0].mxu0
        %v1551 = vadd.f32 0.0, %v1550
        %v1552 = vpop.f32.mrb[0].mxu0
        %v1553 = vadd.f32 0.0, %v1552
        %1554 = vmatprep.mubr.f32.mxu0 0.0
        %1555 = vmatmul.mubr.f32.gmra.mrb[0].mxu0 %v1152
        %v1556 = vpop.f32.mrb[0].mxu0
        %v1557 = vadd.f32 0.0, %v1556
        %v1558 = vpop.f32.mrb[0].mxu0
        %v1559 = vadd.f32 0.0, %v1558
        %1560 = vmatprep.mubr.f32.mxu0 0.0
        %1561 = vmatmul.mubr.f32.gmra.mrb[0].mxu0 %v1153
        %v1562 = vpop.f32.mrb[0].mxu0
        %v1563 = vadd.f32 0.0, %v1562
        %v1564 = vpop.f32.mrb[0].mxu0
        %v1565 = vadd.f32 0.0, %v1564
        %1566 = vmatprep.mubr.f32.mxu0 0.0
        %1567 = vmatmul.mubr.f32.gmra.mrb[0].mxu0 %v1154
        %v1568 = vpop.f32.mrb[0].mxu0
        %v1569 = vadd.f32 0.0, %v1568
        %v1570 = vpop.f32.mrb[0].mxu0
        %v1571 = vadd.f32 0.0, %v1570
        %1572 = vmatprep.mubr.f32.mxu0 0.0
        %1573 = vmatmul.mubr.f32.gmra.mrb[0].mxu0 %v1155
        %v1574 = vpop.f32.mrb[0].mxu0
        %v1575 = vadd.f32 0.0, %v1574
        %v1576 = vpop.f32.mrb[0].mxu0
        %v1577 = vadd.f32 0.0, %v1576
        %1578 = vmatprep.mubr.f32.mxu0 0.0
        %1579 = vmatmul.mubr.f32.gmra.mrb[0].mxu0 %v1156
        %v1580 = vpop.f32.mrb[0].mxu0
        %v1581 = vadd.f32 0.0, %v1580
        %v1582 = vpop.f32.mrb[0].mxu0
        %v1583 = vadd.f32 0.0, %v1582
        %1584 = vmatprep.mubr.f32.mxu0 0.0
        %1585 = vmatmul.mubr.f32.gmra.mrb[0].mxu0 %v1157
        %v1586 = vpop.f32.mrb[0].mxu0
        %v1587 = vadd.f32 0.0, %v1586
        %v1588 = vpop.f32.mrb[0].mxu0
        %v1589 = vadd.f32 0.0, %v1588
        %1590 = vmatprep.mubr.f32.mxu0 0.0
        %1591 = vmatmul.mubr.f32.gmra.mrb[0].mxu0 %v1158
        %v1592 = vpop.f32.mrb[0].mxu0
        %v1593 = vadd.f32 0.0, %v1592
        %v1594 = vpop.f32.mrb[0].mxu0
        %v1595 = vadd.f32 0.0, %v1594
        %1596 = vmatprep.mubr.f32.mxu0 0.0
        %1597 = vmatmul.mubr.f32.gmra.mrb[0].mxu0 %v1159
        %v1598 = vpop.f32.mrb[0].mxu0
        %v1599 = vadd.f32 0.0, %v1598
        %v1600 = vpop.f32.mrb[0].mxu0
        %v1601 = vadd.f32 0.0, %v1600
        %1602 = vmatprep.mubr.f32.mxu0 0.0
        %1603 = vmatmul.mubr.f32.gmra.mrb[0].mxu0 %v1160
        %v1604 = vpop.f32.mrb[0].mxu0
        %v1605 = vadd.f32 0.0, %v1604
        %v1606 = vpop.f32.mrb[0].mxu0
        %v1607 = vadd.f32 0.0, %v1606
        %1608 = vmatprep.mubr.f32.mxu0 0.0
        %1609 = vmatmul.mubr.f32.gmra.mrb[0].mxu0 %v1161
        %v1610 = vpop.f32.mrb[0].mxu0
        %v1611 = vadd.f32 0.0, %v1610
        %v1612 = vpop.f32.mrb[0].mxu0
        %v1613 = vadd.f32 0.0, %v1612
        %1614 = vmatprep.mubr.f32.mxu0 0.0
        %1615 = vmatmul.mubr.f32.gmra.mrb[0].mxu0 %v1162
        %v1616 = vpop.f32.mrb[0].mxu0
        %v1617 = vadd.f32 0.0, %v1616
        %v1618 = vpop.f32.mrb[0].mxu0
        %v1619 = vadd.f32 0.0, %v1618
        %1620 = vmatprep.mubr.f32.mxu0 0.0
        %1621 = vmatmul.mubr.f32.gmra.mrb[0].mxu0 %v1163
        %v1622 = vpop.f32.mrb[0].mxu0
        %v1623 = vadd.f32 0.0, %v1622
        %v1624 = vpop.f32.mrb[0].mxu0
        %v1625 = vadd.f32 0.0, %v1624
        %1626 = vmatprep.mubr.f32.mxu0 0.0
        %1627 = vmatmul.mubr.f32.gmra.mrb[0].mxu0 %v1164
        %v1628 = vpop.f32.mrb[0].mxu0
        %v1629 = vadd.f32 0.0, %v1628
        %v1630 = vpop.f32.mrb[0].mxu0
        %v1631 = vadd.f32 0.0, %v1630
        %1632 = vmatprep.mubr.f32.mxu0 0.0
        %1633 = vmatmul.mubr.f32.gmra.mrb[0].mxu0 %v1165
        %v1634 = vpop.f32.mrb[0].mxu0
        %v1635 = vadd.f32 0.0, %v1634
        %v1636 = vpop.f32.mrb[0].mxu0
        %v1637 = vadd.f32 0.0, %v1636
        %1638 = vmatprep.mubr.f32.mxu0 0.0
        %1639 = vmatmul.mubr.f32.gmra.mrb[0].mxu0 %v1166
        %v1640 = vpop.f32.mrb[0].mxu0
        %v1641 = vadd.f32 0.0, %v1640
        %v1642 = vpop.f32.mrb[0].mxu0
        %v1643 = vadd.f32 0.0, %v1642
        %1644 = vmatprep.mubr.f32.mxu0 0.0
        %1645 = vmatmul.mubr.f32.gmra.mrb[0].mxu0 %v1167
        %v1646 = vpop.f32.mrb[0].mxu0
        %v1647 = vadd.f32 0.0, %v1646
        %v1648 = vpop.f32.mrb[0].mxu0
        %v1649 = vadd.f32 0.0, %v1648
        %1650 = vmatprep.mubr.f32.mxu0 0.0
        %1651 = vmatmul.mubr.f32.gmra.mrb[0].mxu0 %v1168
        %v1652 = vpop.f32.mrb[0].mxu0
        %v1653 = vadd.f32 0.0, %v1652
        %v1654 = vpop.f32.mrb[0].mxu0
        %v1655 = vadd.f32 0.0, %v1654
        %1656 = vmatprep.mubr.f32.mxu0 0.0
        %1657 = vmatmul.mubr.f32.gmra.mrb[0].mxu0 %v1169
        %v1658 = vpop.f32.mrb[0].mxu0
        %v1659 = vadd.f32 0.0, %v1658
        %v1660 = vpop.f32.mrb[0].mxu0
        %v1661 = vadd.f32 0.0, %v1660
        %1662 = vmatprep.mubr.f32.mxu0 0.0
        %1663 = vmatmul.mubr.f32.gmra.mrb[0].mxu0 %v1170
        %v1664 = vpop.f32.mrb[0].mxu0
        %v1665 = vadd.f32 0.0, %v1664
        %v1666 = vpop.f32.mrb[0].mxu0
        %v1667 = vadd.f32 0.0, %v1666
        %1668 = vmatprep.mubr.f32.mxu0 0.0
        %1669 = vmatmul.mubr.f32.gmra.mrb[0].mxu0 %v1171
        %v1670 = vpop.f32.mrb[0].mxu0
        %v1671 = vadd.f32 0.0, %v1670
        %v1672 = vpop.f32.mrb[0].mxu0
        %v1673 = vadd.f32 0.0, %v1672
        %1674 = vmatprep.mubr.f32.mxu0 0.0
        %1675 = vmatmul.mubr.f32.gmra.mrb[0].mxu0 %v1172
        %v1676 = vpop.f32.mrb[0].mxu0
        %v1677 = vadd.f32 0.0, %v1676
        %v1678 = vpop.f32.mrb[0].mxu0
        %v1679 = vadd.f32 0.0, %v1678
        %1680 = vmatprep.mubr.f32.mxu0 0.0
        %1681 = vmatmul.mubr.f32.gmra.mrb[0].mxu0 %v1173
        %v1682 = vpop.f32.mrb[0].mxu0
        %v1683 = vadd.f32 0.0, %v1682
        %v1684 = vpop.f32.mrb[0].mxu0
        %v1685 = vadd.f32 0.0, %v1684
        %1686 = vmatprep.mubr.f32.mxu0 0.0
        %1687 = vmatmul.mubr.f32.gmra.mrb[0].mxu0 %v1174
        %v1688 = vpop.f32.mrb[0].mxu0
        %v1689 = vadd.f32 0.0, %v1688
        %v1690 = vpop.f32.mrb[0].mxu0
        %v1691 = vadd.f32 0.0, %v1690
        %1692 = vmatprep.mubr.f32.mxu0 0.0
        %1693 = vmatmul.mubr.f32.gmra.mrb[0].mxu0 %v1175
        %v1694 = vpop.f32.mrb[0].mxu0
        %v1695 = vadd.f32 0.0, %v1694
        %v1696 = vpop.f32.mrb[0].mxu0
        %v1697 = vadd.f32 0.0, %v1696
        %1698 = vmatprep.mubr.f32.mxu0 0.0
        %1699 = vmatmul.mubr.f32.gmra.mrb[0].mxu0 %v1176
        %v1700 = vpop.f32.mrb[0].mxu0
        %v1701 = vadd.f32 0.0, %v1700
        %v1702 = vpop.f32.mrb[0].mxu0
        %v1703 = vadd.f32 0.0, %v1702
        %1704 = vmatprep.mubr.f32.mxu0 0.0
        %1705 = vmatmul.mubr.f32.gmra.mrb[0].mxu0 %v1177
        %v1706 = vpop.f32.mrb[0].mxu0
        %v1707 = vadd.f32 0.0, %v1706
        %v1708 = vpop.f32.mrb[0].mxu0
        %v1709 = vadd.f32 0.0, %v1708
        %1710 = vmatprep.mubr.f32.mxu0 0.0
        %1711 = vmatmul.mubr.f32.gmra.mrb[0].mxu0 %v1178
        %v1712 = vpop.f32.mrb[0].mxu0
        %v1713 = vadd.f32 0.0, %v1712
        %v1714 = vpop.f32.mrb[0].mxu0
        %v1715 = vadd.f32 0.0, %v1714
        %1716 = vmatprep.mubr.f32.mxu0 0.0
        %1717 = vmatmul.mubr.f32.gmra.mrb[0].mxu0 %v1179
        %v1718 = vpop.f32.mrb[0].mxu0
        %v1719 = vadd.f32 0.0, %v1718
        %v1720 = vpop.f32.mrb[0].mxu0
        %v1721 = vadd.f32 0.0, %v1720
        %1722 = vmatprep.mubr.f32.mxu0 0.0
        %1723 = vmatmul.mubr.f32.gmra.mrb[0].mxu0 %v1180
        %v1724 = vpop.f32.mrb[0].mxu0
        %v1725 = vadd.f32 0.0, %v1724
        %v1726 = vpop.f32.mrb[0].mxu0
        %v1727 = vadd.f32 0.0, %v1726
        %1728 = vmatprep.mubr.f32.mxu0 0.0
        %1729 = vmatmul.mubr.f32.gmra.mrb[0].mxu0 %v1181
        %v1730 = vpop.f32.mrb[0].mxu0
        %v1731 = vadd.f32 0.0, %v1730
        %v1732 = vpop.f32.mrb[0].mxu0
        %v1733 = vadd.f32 0.0, %v1732
        %1734 = vmatprep.mubr.f32.mxu0 0.0
        %1735 = vmatmul.mubr.f32.gmra.mrb[0].mxu0 %v1182
        %v1736 = vpop.f32.mrb[0].mxu0
        %v1737 = vadd.f32 0.0, %v1736
        %v1738 = vpop.f32.mrb[0].mxu0
        %v1739 = vadd.f32 0.0, %v1738
        %1740 = vmatprep.mubr.f32.mxu0 0.0
        %1741 = vmatmul.mubr.f32.gmra.mrb[0].mxu0 %v1183
        %v1742 = vpop.f32.mrb[0].mxu0
        %v1743 = vadd.f32 0.0, %v1742
        %v1744 = vpop.f32.mrb[0].mxu0
        %v1745 = vadd.f32 0.0, %v1744
        %1746 = vmatprep.mubr.f32.mxu0 0.0
        %1747 = vmatmul.mubr.f32.gmra.mrb[0].mxu0 %v1184
        %v1748 = vpop.f32.mrb[0].mxu0
        %v1749 = vadd.f32 0.0, %v1748
        %v1750 = vpop.f32.mrb[0].mxu0
        %v1751 = vadd.f32 0.0, %v1750
        %1752 = vmatprep.mubr.f32.mxu0 0.0
        %1753 = vmatmul.mubr.f32.gmra.mrb[0].mxu0 %v1185
        %v1754 = vpop.f32.mrb[0].mxu0
        %v1755 = vadd.f32 0.0, %v1754
        %v1756 = vpop.f32.mrb[0].mxu0
        %v1757 = vadd.f32 0.0, %v1756
        %1758 = vmatprep.mubr.f32.mxu0 0.0
        %1759 = vmatmul.mubr.f32.gmra.mrb[0].mxu0 %v1186
        %v1760 = vpop.f32.mrb[0].mxu0
        %v1761 = vadd.f32 0.0, %v1760
        %v1762 = vpop.f32.mrb[0].mxu0
        %v1763 = vadd.f32 0.0, %v1762
        %1764 = vmatprep.mubr.f32.mxu0 0.0
        %1765 = vmatmul.mubr.f32.gmra.mrb[0].mxu0 %v1187
        %v1766 = vpop.f32.mrb[0].mxu0
        %v1767 = vadd.f32 0.0, %v1766
        %v1768 = vpop.f32.mrb[0].mxu0
        %v1769 = vadd.f32 0.0, %v1768
        %1770 = vmatprep.mubr.f32.mxu0 0.0
        %1771 = vmatmul.mubr.f32.gmra.mrb[0].mxu0 %v1188
        %v1772 = vpop.f32.mrb[0].mxu0
        %v1773 = vadd.f32 0.0, %v1772
        %v1774 = vpop.f32.mrb[0].mxu0
        %v1775 = vadd.f32 0.0, %v1774
        %1776 = vmatprep.mubr.f32.mxu0 0.0
        %1777 = vmatmul.mubr.f32.gmra.mrb[0].mxu0 %v1189
        %v1778 = vpop.f32.mrb[0].mxu0
        %v1779 = vadd.f32 0.0, %v1778
        %v1780 = vpop.f32.mrb[0].mxu0
        %v1781 = vadd.f32 0.0, %v1780
        %1782 = vmatprep.mubr.f32.mxu0 0.0
        %1783 = vmatmul.mubr.f32.gmra.mrb[0].mxu0 %v1190
        %v1784 = vpop.f32.mrb[0].mxu0
        %v1785 = vadd.f32 0.0, %v1784
        %v1786 = vpop.f32.mrb[0].mxu0
        %v1787 = vadd.f32 0.0, %v1786
        %1788 = vmatprep.mubr.f32.mxu0 0.0
        %1789 = vmatmul.mubr.f32.gmra.mrb[0].mxu0 %v1191
        %v1790 = vpop.f32.mrb[0].mxu0
        %v1791 = vadd.f32 0.0, %v1790
        %v1792 = vpop.f32.mrb[0].mxu0
        %v1793 = vadd.f32 0.0, %v1792
        %1794 = vmatprep.mubr.f32.mxu0 0.0
        %1795 = vmatmul.mubr.f32.gmra.mrb[0].mxu0 %v1192
        %v1796 = vpop.f32.mrb[0].mxu0
        %v1797 = vadd.f32 0.0, %v1796
        %v1798 = vpop.f32.mrb[0].mxu0
        %v1799 = vadd.f32 0.0, %v1798
        %1800 = vmatprep.mubr.f32.mxu0 0.0
        %1801 = vmatmul.mubr.f32.gmra.mrb[0].mxu0 %v1193
        %v1802 = vpop.f32.mrb[0].mxu0
        %v1803 = vadd.f32 0.0, %v1802
        %v1804 = vpop.f32.mrb[0].mxu0
        %v1805 = vadd.f32 0.0, %v1804
        %1806 = vmatprep.mubr.f32.mxu0 0.0
        %1807 = vmatmul.mubr.f32.gmra.mrb[0].mxu0 %v1194
        %v1808 = vpop.f32.mrb[0].mxu0
        %v1809 = vadd.f32 0.0, %v1808
        %v1810 = vpop.f32.mrb[0].mxu0
        %v1811 = vadd.f32 0.0, %v1810
        %1812 = vmatprep.mubr.f32.mxu0 0.0
        %1813 = vmatmul.mubr.f32.gmra.mrb[0].mxu0 %v1195
        %v1814 = vpop.f32.mrb[0].mxu0
        %v1815 = vadd.f32 0.0, %v1814
        %v1816 = vpop.f32.mrb[0].mxu0
        %v1817 = vadd.f32 0.0, %v1816
        %1818 = vmatprep.mubr.f32.mxu0 0.0
        %1819 = vmatmul.mubr.f32.gmra.mrb[0].mxu0 %v1196
        %v1820 = vpop.f32.mrb[0].mxu0
        %v1821 = vadd.f32 0.0, %v1820
        %v1822 = vpop.f32.mrb[0].mxu0
        %v1823 = vadd.f32 0.0, %v1822
        %1824 = vmatprep.mubr.f32.mxu0 0.0
        %1825 = vmatmul.mubr.f32.gmra.mrb[0].mxu0 %v1197
        %v1826 = vpop.f32.mrb[0].mxu0
        %v1827 = vadd.f32 0.0, %v1826
        %v1828 = vpop.f32.mrb[0].mxu0
        %v1829 = vadd.f32 0.0, %v1828
        %1830 = vmatprep.mubr.f32.mxu0 0.0
        %1831 = vmatmul.mubr.f32.gmra.mrb[0].mxu0 %v1198
        %v1832 = vpop.f32.mrb[0].mxu0
        %v1833 = vadd.f32 0.0, %v1832
        %v1834 = vpop.f32.mrb[0].mxu0
        %v1835 = vadd.f32 0.0, %v1834
        %1836 = vmatprep.mubr.f32.mxu0 0.0
        %1837 = vmatmul.mubr.f32.gmra.mrb[0].mxu0 %v1199
        %v1838 = vpop.f32.mrb[0].mxu0
        %v1839 = vadd.f32 0.0, %v1838
        %v1840 = vpop.f32.mrb[0].mxu0
        %v1841 = vadd.f32 0.0, %v1840
        %1842 = vmatprep.mubr.f32.mxu0 0.0
        %1843 = vmatmul.mubr.f32.gmra.mrb[0].mxu0 %v1200
        %v1844 = vpop.f32.mrb[0].mxu0
        %v1845 = vadd.f32 0.0, %v1844
        %v1846 = vpop.f32.mrb[0].mxu0
        %v1847 = vadd.f32 0.0, %v1846
        %1848 = vmatprep.mubr.f32.mxu0 0.0
        %1849 = vmatmul.mubr.f32.gmra.mrb[0].mxu0 %v1201
        %v1850 = vpop.f32.mrb[0].mxu0
        %v1851 = vadd.f32 0.0, %v1850
        %v1852 = vpop.f32.mrb[0].mxu0
        %v1853 = vadd.f32 0.0, %v1852
        %1854 = vmatprep.mubr.f32.mxu0 0.0
        %1855 = vmatmul.mubr.f32.gmra.mrb[0].mxu0 %v1202
        %v1856 = vpop.f32.mrb[0].mxu0
        %v1857 = vadd.f32 0.0, %v1856
        %v1858 = vpop.f32.mrb[0].mxu0
        %v1859 = vadd.f32 0.0, %v1858
        %1860 = vmatprep.mubr.f32.mxu0 0.0
        %1861 = vmatmul.mubr.f32.gmra.mrb[0].mxu0 %v1203
        %v1862 = vpop.f32.mrb[0].mxu0
        %v1863 = vadd.f32 0.0, %v1862
        %v1864 = vpop.f32.mrb[0].mxu0
        %v1865 = vadd.f32 0.0, %v1864
        %1866 = vmatprep.mubr.f32.mxu0 0.0
        %1867 = vmatmul.mubr.f32.gmra.mrb[0].mxu0 %v1204
        %v1868 = vpop.f32.mrb[0].mxu0
        %v1869 = vadd.f32 0.0, %v1868
        %v1870 = vpop.f32.mrb[0].mxu0
        %v1871 = vadd.f32 0.0, %v1870
        %1872 = vmatprep.mubr.f32.mxu0 0.0
        %1873 = vmatmul.mubr.f32.gmra.mrb[0].mxu0 %v1205
        %v1874 = vpop.f32.mrb[0].mxu0
        %v1875 = vadd.f32 0.0, %v1874
        %v1876 = vpop.f32.mrb[0].mxu0
        %v1877 = vadd.f32 0.0, %v1876
        %1878 = vmatprep.mubr.f32.mxu0 0.0
        %1879 = vmatmul.mubr.f32.gmra.mrb[0].mxu0 %v1206
        %v1880 = vpop.f32.mrb[0].mxu0
        %v1881 = vadd.f32 0.0, %v1880
        %v1882 = vpop.f32.mrb[0].mxu0
        %v1883 = vadd.f32 0.0, %v1882
        %1884 = vmatprep.mubr.f32.mxu0 0.0
        %1885 = vmatmul.mubr.f32.gmra.mrb[0].mxu0 %v1207
        %v1886 = vpop.f32.mrb[0].mxu0
        %v1887 = vadd.f32 0.0, %v1886
        %v1888 = vpop.f32.mrb[0].mxu0
        %v1889 = vadd.f32 0.0, %v1888
        %1890 = vmatprep.mubr.f32.mxu0 0.0
        %1891 = vmatmul.mubr.f32.gmra.mrb[0].mxu0 %v1208
        %v1892 = vpop.f32.mrb[0].mxu0
        %v1893 = vadd.f32 0.0, %v1892
        %v1894 = vpop.f32.mrb[0].mxu0
        %v1895 = vadd.f32 0.0, %v1894
        %1896 = vmatprep.mubr.f32.mxu0 0.0
        %1897 = vmatmul.mubr.f32.gmra.mrb[0].mxu0 %v1209
        %v1898 = vpop.f32.mrb[0].mxu0
        %v1899 = vadd.f32 0.0, %v1898
        %v1900 = vpop.f32.mrb[0].mxu0
        %v1901 = vadd.f32 0.0, %v1900
        %1902 = vmatprep.mubr.f32.mxu0 0.0
        %1903 = vmatmul.mubr.f32.gmra.mrb[0].mxu0 %v1210
        %v1904 = vpop.f32.mrb[0].mxu0
        %v1905 = vadd.f32 0.0, %v1904
        %v1906 = vpop.f32.mrb[0].mxu0
        %v1907 = vadd.f32 0.0, %v1906
        %1908 = vmatprep.mubr.f32.mxu0 0.0
        %1909 = vmatmul.mubr.f32.gmra.mrb[0].mxu0 %v1211
        %v1910 = vpop.f32.mrb[0].mxu0
        %v1911 = vadd.f32 0.0, %v1910
        %v1912 = vpop.f32.mrb[0].mxu0
        %v1913 = vadd.f32 0.0, %v1912
        %1914 = vmatprep.mubr.f32.mxu0 0.0
        %1915 = vmatmul.mubr.f32.gmra.mrb[0].mxu0 %v1212
        %v1916 = vpop.f32.mrb[0].mxu0
        %v1917 = vadd.f32 0.0, %v1916
        %v1918 = vpop.f32.mrb[0].mxu0
        %v1919 = vadd.f32 0.0, %v1918
        %1920 = vmatprep.mubr.f32.mxu0 0.0
        %1921 = vmatmul.mubr.f32.gmra.mrb[0].mxu0 %v1213
        %v1922 = vpop.f32.mrb[0].mxu0
        %v1923 = vadd.f32 0.0, %v1922
        %v1924 = vpop.f32.mrb[0].mxu0
        %v1925 = vadd.f32 0.0, %v1924
        %1926 = vmatprep.mubr.f32.mxu0 0.0
        %1927 = vmatmul.mubr.f32.gmra.mrb[0].mxu0 %v1214
        %v1928 = vpop.f32.mrb[0].mxu0
        %v1929 = vadd.f32 0.0, %v1928
        %v1930 = vpop.f32.mrb[0].mxu0
        %v1931 = vadd.f32 0.0, %v1930
        %1932 = vmatprep.mubr.f32.mxu0 0.0
        %1933 = vmatmul.mubr.f32.gmra.mrb[0].mxu0 %v1215
        %v1934 = vpop.f32.mrb[0].mxu0
        %v1935 = vadd.f32 0.0, %v1934
        %v1936 = vpop.f32.mrb[0].mxu0
        %v1937 = vadd.f32 0.0, %v1936
        %1938 = vmatprep.mubr.f32.mxu0 0.0
        %1939 = vmatmul.mubr.f32.gmra.mrb[0].mxu0 %v1216
        %v1940 = vpop.f32.mrb[0].mxu0
        %v1941 = vadd.f32 0.0, %v1940
        %v1942 = vpop.f32.mrb[0].mxu0
        %v1943 = vadd.f32 0.0, %v1942
        %1944 = vmatprep.mubr.f32.mxu0 0.0
        %1945 = vmatmul.mubr.f32.gmra.mrb[0].mxu0 %v1217
        %v1946 = vpop.f32.mrb[0].mxu0
        %v1947 = vadd.f32 0.0, %v1946
        %v1948 = vpop.f32.mrb[0].mxu0
        %v1949 = vadd.f32 0.0, %v1948
        %1950 = vmatprep.mubr.f32.mxu0 0.0
        %1951 = vmatmul.mubr.f32.gmra.mrb[0].mxu0 %v1218
        %v1952 = vpop.f32.mrb[0].mxu0
        %v1953 = vadd.f32 0.0, %v1952
        %v1954 = vpop.f32.mrb[0].mxu0
        %v1955 = vadd.f32 0.0, %v1954
        %1956 = vmatprep.mubr.f32.mxu0 0.0
        %1957 = vmatmul.mubr.f32.gmra.mrb[0].mxu0 %v1219
        %v1958 = vpop.f32.mrb[0].mxu0
        %v1959 = vadd.f32 0.0, %v1958
        %v1960 = vpop.f32.mrb[0].mxu0
        %v1961 = vadd.f32 0.0, %v1960
        %1962 = vmatprep.mubr.f32.mxu0 0.0
        %1963 = vmatmul.mubr.f32.gmra.mrb[0].mxu0 %v1220
        %v1964 = vpop.f32.mrb[0].mxu0
        %v1965 = vadd.f32 0.0, %v1964
        %v1966 = vpop.f32.mrb[0].mxu0
        %v1967 = vadd.f32 0.0, %v1966
        %1968 = vmatprep.mubr.f32.mxu0 0.0
        %1969 = vmatmul.mubr.f32.gmra.mrb[0].mxu0 %v1221
        %v1970 = vpop.f32.mrb[0].mxu0
        %v1971 = vadd.f32 0.0, %v1970
        %v1972 = vpop.f32.mrb[0].mxu0
        %v1973 = vadd.f32 0.0, %v1972
        %1974 = vmatprep.mubr.f32.mxu0 0.0
        %1975 = vmatmul.mubr.f32.gmra.mrb[0].mxu0 %v1222
        %v1976 = vpop.f32.mrb[0].mxu0
        %v1977 = vadd.f32 0.0, %v1976
        %v1978 = vpop.f32.mrb[0].mxu0
        %v1979 = vadd.f32 0.0, %v1978
        %1980 = vmatprep.mubr.f32.mxu0 0.0
        %1981 = vmatmul.mubr.f32.gmra.mrb[0].mxu0 %v1223
        %v1982 = vpop.f32.mrb[0].mxu0
        %v1983 = vadd.f32 0.0, %v1982
        %v1984 = vpop.f32.mrb[0].mxu0
        %v1985 = vadd.f32 0.0, %v1984
        %1986 = vmatprep.mubr.f32.mxu0 0.0
        %1987 = vmatmul.mubr.f32.gmra.mrb[0].mxu0 %v1224
        %v1988 = vpop.f32.mrb[0].mxu0
        %v1989 = vadd.f32 0.0, %v1988
        %v1990 = vpop.f32.mrb[0].mxu0
        %v1991 = vadd.f32 0.0, %v1990
        %1992 = vmatprep.mubr.f32.mxu0 0.0
        %1993 = vmatmul.mubr.f32.gmra.mrb[0].mxu0 %v1225
        %v1994 = vpop.f32.mrb[0].mxu0
        %v1995 = vadd.f32 0.0, %v1994
        %v1996 = vpop.f32.mrb[0].mxu0
        %v1997 = vadd.f32 0.0, %v1996
        %1998 = vmatprep.mubr.f32.mxu0 0.0
        %1999 = vmatmul.mubr.f32.gmra.mrb[0].mxu0 %v1226
        %v2000 = vpop.f32.mrb[0].mxu0
        %v2001 = vadd.f32 0.0, %v2000
        %v2002 = vpop.f32.mrb[0].mxu0
        %v2003 = vadd.f32 0.0, %v2002
        %2004 = vmatprep.mubr.f32.mxu0 0.0
        %2005 = vmatmul.mubr.f32.gmra.mrb[0].mxu0 %v1227
        %v2006 = vpop.f32.mrb[0].mxu0
        %v2007 = vadd.f32 0.0, %v2006
        %v2008 = vpop.f32.mrb[0].mxu0
        %v2009 = vadd.f32 0.0, %v2008
        %2010 = vmatprep.mubr.f32.mxu0 0.0
        %2011 = vmatmul.mubr.f32.gmra.mrb[0].mxu0 %v1228
        %v2012 = vpop.f32.mrb[0].mxu0
        %v2013 = vadd.f32 0.0, %v2012
        %v2014 = vpop.f32.mrb[0].mxu0
        %v2015 = vadd.f32 0.0, %v2014
        %2016 = vmatprep.mubr.f32.mxu0 0.0
        %2017 = vmatmul.mubr.f32.gmra.mrb[0].mxu0 %v1229
        %v2018 = vpop.f32.mrb[0].mxu0
        %v2019 = vadd.f32 0.0, %v2018
        %v2020 = vpop.f32.mrb[0].mxu0
        %v2021 = vadd.f32 0.0, %v2020
        %2022 = vmatprep.mubr.f32.mxu0 0.0
        %2023 = vmatmul.mubr.f32.gmra.mrb[0].mxu0 %v1230
        %v2024 = vpop.f32.mrb[0].mxu0
        %v2025 = vadd.f32 0.0, %v2024
        %v2026 = vpop.f32.mrb[0].mxu0
        %v2027 = vadd.f32 0.0, %v2026
        %2028 = vmatprep.mubr.f32.mxu0 0.0
        %2029 = vmatmul.mubr.f32.gmra.mrb[0].mxu0 %v1231
        %v2030 = vpop.f32.mrb[0].mxu0
        %v2031 = vadd.f32 0.0, %v2030
        %v2032 = vpop.f32.mrb[0].mxu0
        %v2033 = vadd.f32 0.0, %v2032
        %2034 = vmatprep.mubr.f32.mxu0 0.0
        %2035 = vmatmul.mubr.f32.gmra.mrb[0].mxu0 %v1232
        %v2036 = vpop.f32.mrb[0].mxu0
        %v2037 = vadd.f32 0.0, %v2036
        %v2038 = vpop.f32.mrb[0].mxu0
        %v2039 = vadd.f32 0.0, %v2038
        %2040 = vmatprep.mubr.f32.mxu0 0.0
        %2041 = vmatmul.mubr.f32.gmra.mrb[0].mxu0 %v1233
        %v2042 = vpop.f32.mrb[0].mxu0
        %v2043 = vadd.f32 0.0, %v2042
        %v2044 = vpop.f32.mrb[0].mxu0
        %v2045 = vadd.f32 0.0, %v2044
        %2046 = vmatprep.mubr.f32.mxu0 0.0
        %2047 = vmatmul.mubr.f32.gmra.mrb[0].mxu0 %v1234
        %v2048 = vpop.f32.mrb[0].mxu0
        %v2049 = vadd.f32 0.0, %v2048
        %v2050 = vpop.f32.mrb[0].mxu0
        %v2051 = vadd.f32 0.0, %v2050
        %2052 = vmatprep.mubr.f32.mxu0 0.0
        %2053 = vmatmul.mubr.f32.gmra.mrb[0].mxu0 %v1235
        %v2054 = vpop.f32.mrb[0].mxu0
        %v2055 = vadd.f32 0.0, %v2054
        %v2056 = vpop.f32.mrb[0].mxu0
        %v2057 = vadd.f32 0.0, %v2056
        %2058 = vmatprep.mubr.f32.mxu0 0.0
        %2059 = vmatmul.mubr.f32.gmra.mrb[0].mxu0 %v1236
        %v2060 = vpop.f32.mrb[0].mxu0
        %v2061 = vadd.f32 0.0, %v2060
        %v2062 = vpop.f32.mrb[0].mxu0
        %v2063 = vadd.f32 0.0, %v2062
        %2064 = vmatprep.mubr.f32.mxu0 0.0
        %2065 = vmatmul.mubr.f32.gmra.mrb[0].mxu0 %v1237
        %v2066 = vpop.f32.mrb[0].mxu0
        %v2067 = vadd.f32 0.0, %v2066
        %v2068 = vpop.f32.mrb[0].mxu0
        %v2069 = vadd.f32 0.0, %v2068
        %2070 = vdwg.mxu0
        %vm2071 = vcmp.ge.s32.totalorder %v317, 125
        %v2072 = vsel %vm2071, 1, 0
        %v2073 = vcvt.s32.f32 %v2072
        %v2074 = vsub.f32 %v1307, %v285
        %v2075 = vsub.f32 %v1313, %v287
        %v2076 = vsub.f32 %v1319, %v289
        %v2077 = vsub.f32 %v1325, %v291
        %v2078 = vsub.f32 %v1331, %v293
        %v2079 = vsub.f32 %v1337, %v295
        %v2080 = vsub.f32 %v1343, %v297
        %v2081 = vsub.f32 %v1349, %v299
        %v2082 = vsub.f32 %v1355, %v301
        %v2083 = vsub.f32 %v1361, %v303
        %v2084 = vsub.f32 %v1367, %v305
        %v2085 = vsub.f32 %v1373, %v307
        %v2086 = vsub.f32 %v1379, %v309
        %v2087 = vsub.f32 %v1385, %v311
        %v2088 = vsub.f32 %v1391, %v313
        %v2089 = vsub.f32 %v1397, %v315
        %v2090 = vsub.f32 %v1403, %v285
        %v2091 = vsub.f32 %v1409, %v287
        %v2092 = vsub.f32 %v1415, %v289
        %v2093 = vsub.f32 %v1421, %v291
        %v2094 = vsub.f32 %v1427, %v293
        %v2095 = vsub.f32 %v1433, %v295
        %v2096 = vsub.f32 %v1439, %v297
        %v2097 = vsub.f32 %v1445, %v299
        %v2098 = vsub.f32 %v1451, %v301
        %v2099 = vsub.f32 %v1457, %v303
        %v2100 = vsub.f32 %v1463, %v305
        %v2101 = vsub.f32 %v1469, %v307
        %v2102 = vsub.f32 %v1475, %v309
        %v2103 = vsub.f32 %v1481, %v311
        %v2104 = vsub.f32 %v1487, %v313
        %v2105 = vsub.f32 %v1493, %v315
        %v2106 = vsub.f32 %v1499, %v285
        %v2107 = vsub.f32 %v1505, %v287
        %v2108 = vsub.f32 %v1511, %v289
        %v2109 = vsub.f32 %v1517, %v291
        %v2110 = vsub.f32 %v1523, %v293
        %v2111 = vsub.f32 %v1529, %v295
        %v2112 = vsub.f32 %v1535, %v297
        %v2113 = vsub.f32 %v1541, %v299
        %v2114 = vsub.f32 %v1547, %v301
        %v2115 = vsub.f32 %v1553, %v303
        %v2116 = vsub.f32 %v1559, %v305
        %v2117 = vsub.f32 %v1565, %v307
        %v2118 = vsub.f32 %v1571, %v309
        %v2119 = vsub.f32 %v1577, %v311
        %v2120 = vsub.f32 %v1583, %v313
        %v2121 = vsub.f32 %v1589, %v315
        %v2122 = vsub.f32 %v1595, %v285
        %v2123 = vsub.f32 %v1601, %v287
        %v2124 = vsub.f32 %v1607, %v289
        %v2125 = vsub.f32 %v1613, %v291
        %v2126 = vsub.f32 %v1619, %v293
        %v2127 = vsub.f32 %v1625, %v295
        %v2128 = vsub.f32 %v1631, %v297
        %v2129 = vsub.f32 %v1637, %v299
        %v2130 = vsub.f32 %v1643, %v301
        %v2131 = vsub.f32 %v1649, %v303
        %v2132 = vsub.f32 %v1655, %v305
        %v2133 = vsub.f32 %v1661, %v307
        %v2134 = vsub.f32 %v1667, %v309
        %v2135 = vsub.f32 %v1673, %v311
        %v2136 = vsub.f32 %v1679, %v313
        %v2137 = vsub.f32 %v1685, %v315
        %v2138 = vsub.f32 %v1691, %v285
        %v2139 = vsub.f32 %v1697, %v287
        %v2140 = vsub.f32 %v1703, %v289
        %v2141 = vsub.f32 %v1709, %v291
        %v2142 = vsub.f32 %v1715, %v293
        %v2143 = vsub.f32 %v1721, %v295
        %v2144 = vsub.f32 %v1727, %v297
        %v2145 = vsub.f32 %v1733, %v299
        %v2146 = vsub.f32 %v1739, %v301
        %v2147 = vsub.f32 %v1745, %v303
        %v2148 = vsub.f32 %v1751, %v305
        %v2149 = vsub.f32 %v1757, %v307
        %v2150 = vsub.f32 %v1763, %v309
        %v2151 = vsub.f32 %v1769, %v311
        %v2152 = vsub.f32 %v1775, %v313
        %v2153 = vsub.f32 %v1781, %v315
        %v2154 = vsub.f32 %v1787, %v285
        %v2155 = vsub.f32 %v1793, %v287
        %v2156 = vsub.f32 %v1799, %v289
        %v2157 = vsub.f32 %v1805, %v291
        %v2158 = vsub.f32 %v1811, %v293
        %v2159 = vsub.f32 %v1817, %v295
        %v2160 = vsub.f32 %v1823, %v297
        %v2161 = vsub.f32 %v1829, %v299
        %v2162 = vsub.f32 %v1835, %v301
        %v2163 = vsub.f32 %v1841, %v303
        %v2164 = vsub.f32 %v1847, %v305
        %v2165 = vsub.f32 %v1853, %v307
        %v2166 = vsub.f32 %v1859, %v309
        %v2167 = vsub.f32 %v1865, %v311
        %v2168 = vsub.f32 %v1871, %v313
        %v2169 = vsub.f32 %v1877, %v315
        %v2170 = vsub.f32 %v1883, %v285
        %v2171 = vsub.f32 %v1889, %v287
        %v2172 = vsub.f32 %v1895, %v289
        %v2173 = vsub.f32 %v1901, %v291
        %v2174 = vsub.f32 %v1907, %v293
        %v2175 = vsub.f32 %v1913, %v295
        %v2176 = vsub.f32 %v1919, %v297
        %v2177 = vsub.f32 %v1925, %v299
        %v2178 = vsub.f32 %v1931, %v301
        %v2179 = vsub.f32 %v1937, %v303
        %v2180 = vsub.f32 %v1943, %v305
        %v2181 = vsub.f32 %v1949, %v307
        %v2182 = vsub.f32 %v1955, %v309
        %v2183 = vsub.f32 %v1961, %v311
        %v2184 = vsub.f32 %v1967, %v313
        %v2185 = vsub.f32 %v1973, %v315
        %v2186 = vsub.f32 %v1979, %v285
        %v2187 = vsub.f32 %v1985, %v287
        %v2188 = vsub.f32 %v1991, %v289
        %v2189 = vsub.f32 %v1997, %v291
        %v2190 = vsub.f32 %v2003, %v293
        %v2191 = vsub.f32 %v2009, %v295
        %v2192 = vsub.f32 %v2015, %v297
        %v2193 = vsub.f32 %v2021, %v299
        %v2194 = vsub.f32 %v2027, %v301
        %v2195 = vsub.f32 %v2033, %v303
        %v2196 = vsub.f32 %v2039, %v305
        %v2197 = vsub.f32 %v2045, %v307
        %v2198 = vsub.f32 %v2051, %v309
        %v2199 = vsub.f32 %v2057, %v311
        %v2200 = vsub.f32 %v2063, %v313
        %v2201 = vsub.f32 %v2069, %v315
        %v2202 = vmul.f32 %v2074, %v2073
        %v2203 = vmul.f32 %v2075, %v2073
        %v2204 = vmul.f32 %v2076, %v2073
        %v2205 = vmul.f32 %v2077, %v2073
        %v2206 = vmul.f32 %v2078, %v2073
        %v2207 = vmul.f32 %v2079, %v2073
        %v2208 = vmul.f32 %v2080, %v2073
        %v2209 = vmul.f32 %v2081, %v2073
        %v2210 = vmul.f32 %v2082, %v2073
        %v2211 = vmul.f32 %v2083, %v2073
        %v2212 = vmul.f32 %v2084, %v2073
        %v2213 = vmul.f32 %v2085, %v2073
        %v2214 = vmul.f32 %v2086, %v2073
        %v2215 = vmul.f32 %v2087, %v2073
        %v2216 = vmul.f32 %v2088, %v2073
        %v2217 = vmul.f32 %v2089, %v2073
        %v2218 = vmul.f32 %v2090, %v2073
        %v2219 = vmul.f32 %v2091, %v2073
        %v2220 = vmul.f32 %v2092, %v2073
        %v2221 = vmul.f32 %v2093, %v2073
        %v2222 = vmul.f32 %v2094, %v2073
        %v2223 = vmul.f32 %v2095, %v2073
        %v2224 = vmul.f32 %v2096, %v2073
        %v2225 = vmul.f32 %v2097, %v2073
        %v2226 = vmul.f32 %v2098, %v2073
        %v2227 = vmul.f32 %v2099, %v2073
        %v2228 = vmul.f32 %v2100, %v2073
        %v2229 = vmul.f32 %v2101, %v2073
        %v2230 = vmul.f32 %v2102, %v2073
        %v2231 = vmul.f32 %v2103, %v2073
        %v2232 = vmul.f32 %v2104, %v2073
        %v2233 = vmul.f32 %v2105, %v2073
        %v2234 = vmul.f32 %v2106, %v2073
        %v2235 = vmul.f32 %v2107, %v2073
        %v2236 = vmul.f32 %v2108, %v2073
        %v2237 = vmul.f32 %v2109, %v2073
        %v2238 = vmul.f32 %v2110, %v2073
        %v2239 = vmul.f32 %v2111, %v2073
        %v2240 = vmul.f32 %v2112, %v2073
        %v2241 = vmul.f32 %v2113, %v2073
        %v2242 = vmul.f32 %v2114, %v2073
        %v2243 = vmul.f32 %v2115, %v2073
        %v2244 = vmul.f32 %v2116, %v2073
        %v2245 = vmul.f32 %v2117, %v2073
        %v2246 = vmul.f32 %v2118, %v2073
        %v2247 = vmul.f32 %v2119, %v2073
        %v2248 = vmul.f32 %v2120, %v2073
        %v2249 = vmul.f32 %v2121, %v2073
        %v2250 = vmul.f32 %v2122, %v2073
        %v2251 = vmul.f32 %v2123, %v2073
        %v2252 = vmul.f32 %v2124, %v2073
        %v2253 = vmul.f32 %v2125, %v2073
        %v2254 = vmul.f32 %v2126, %v2073
        %v2255 = vmul.f32 %v2127, %v2073
        %v2256 = vmul.f32 %v2128, %v2073
        %v2257 = vmul.f32 %v2129, %v2073
        %v2258 = vmul.f32 %v2130, %v2073
        %v2259 = vmul.f32 %v2131, %v2073
        %v2260 = vmul.f32 %v2132, %v2073
        %v2261 = vmul.f32 %v2133, %v2073
        %v2262 = vmul.f32 %v2134, %v2073
        %v2263 = vmul.f32 %v2135, %v2073
        %v2264 = vmul.f32 %v2136, %v2073
        %v2265 = vmul.f32 %v2137, %v2073
        %v2266 = vmul.f32 %v2138, %v2073
        %v2267 = vmul.f32 %v2139, %v2073
        %v2268 = vmul.f32 %v2140, %v2073
        %v2269 = vmul.f32 %v2141, %v2073
        %v2270 = vmul.f32 %v2142, %v2073
        %v2271 = vmul.f32 %v2143, %v2073
        %v2272 = vmul.f32 %v2144, %v2073
        %v2273 = vmul.f32 %v2145, %v2073
        %v2274 = vmul.f32 %v2146, %v2073
        %v2275 = vmul.f32 %v2147, %v2073
        %v2276 = vmul.f32 %v2148, %v2073
        %v2277 = vmul.f32 %v2149, %v2073
        %v2278 = vmul.f32 %v2150, %v2073
        %v2279 = vmul.f32 %v2151, %v2073
        %v2280 = vmul.f32 %v2152, %v2073
        %v2281 = vmul.f32 %v2153, %v2073
        %v2282 = vmul.f32 %v2154, %v2073
        %v2283 = vmul.f32 %v2155, %v2073
        %v2284 = vmul.f32 %v2156, %v2073
        %v2285 = vmul.f32 %v2157, %v2073
        %v2286 = vmul.f32 %v2158, %v2073
        %v2287 = vmul.f32 %v2159, %v2073
        %v2288 = vmul.f32 %v2160, %v2073
        %v2289 = vmul.f32 %v2161, %v2073
        %v2290 = vmul.f32 %v2162, %v2073
        %v2291 = vmul.f32 %v2163, %v2073
        %v2292 = vmul.f32 %v2164, %v2073
        %v2293 = vmul.f32 %v2165, %v2073
        %v2294 = vmul.f32 %v2166, %v2073
        %v2295 = vmul.f32 %v2167, %v2073
        %v2296 = vmul.f32 %v2168, %v2073
        %v2297 = vmul.f32 %v2169, %v2073
        %v2298 = vmul.f32 %v2170, %v2073
        %v2299 = vmul.f32 %v2171, %v2073
        %v2300 = vmul.f32 %v2172, %v2073
        %v2301 = vmul.f32 %v2173, %v2073
        %v2302 = vmul.f32 %v2174, %v2073
        %v2303 = vmul.f32 %v2175, %v2073
        %v2304 = vmul.f32 %v2176, %v2073
        %v2305 = vmul.f32 %v2177, %v2073
        %v2306 = vmul.f32 %v2178, %v2073
        %v2307 = vmul.f32 %v2179, %v2073
        %v2308 = vmul.f32 %v2180, %v2073
        %v2309 = vmul.f32 %v2181, %v2073
        %v2310 = vmul.f32 %v2182, %v2073
        %v2311 = vmul.f32 %v2183, %v2073
        %v2312 = vmul.f32 %v2184, %v2073
        %v2313 = vmul.f32 %v2185, %v2073
        %v2314 = vmul.f32 %v2186, %v2073
        %v2315 = vmul.f32 %v2187, %v2073
        %v2316 = vmul.f32 %v2188, %v2073
        %v2317 = vmul.f32 %v2189, %v2073
        %v2318 = vmul.f32 %v2190, %v2073
        %v2319 = vmul.f32 %v2191, %v2073
        %v2320 = vmul.f32 %v2192, %v2073
        %v2321 = vmul.f32 %v2193, %v2073
        %v2322 = vmul.f32 %v2194, %v2073
        %v2323 = vmul.f32 %v2195, %v2073
        %v2324 = vmul.f32 %v2196, %v2073
        %v2325 = vmul.f32 %v2197, %v2073
        %v2326 = vmul.f32 %v2198, %v2073
        %v2327 = vmul.f32 %v2199, %v2073
        %v2328 = vmul.f32 %v2200, %v2073
        %v2329 = vmul.f32 %v2201, %v2073
        %v2330 = vmul.f32 %v2202, %v2202
        %v2331 = vmul.f32 %v2203, %v2203
        %v2332 = vmul.f32 %v2204, %v2204
        %v2333 = vmul.f32 %v2205, %v2205
        %v2334 = vmul.f32 %v2206, %v2206
        %v2335 = vmul.f32 %v2207, %v2207
        %v2336 = vmul.f32 %v2208, %v2208
        %v2337 = vmul.f32 %v2209, %v2209
        %v2338 = vmul.f32 %v2210, %v2210
        %v2339 = vmul.f32 %v2211, %v2211
        %v2340 = vmul.f32 %v2212, %v2212
        %v2341 = vmul.f32 %v2213, %v2213
        %v2342 = vmul.f32 %v2214, %v2214
        %v2343 = vmul.f32 %v2215, %v2215
        %v2344 = vmul.f32 %v2216, %v2216
        %v2345 = vmul.f32 %v2217, %v2217
        %v2346 = vmul.f32 %v2218, %v2218
        %v2347 = vmul.f32 %v2219, %v2219
        %v2348 = vmul.f32 %v2220, %v2220
        %v2349 = vmul.f32 %v2221, %v2221
        %v2350 = vmul.f32 %v2222, %v2222
        %v2351 = vmul.f32 %v2223, %v2223
        %v2352 = vmul.f32 %v2224, %v2224
        %v2353 = vmul.f32 %v2225, %v2225
        %v2354 = vmul.f32 %v2226, %v2226
        %v2355 = vmul.f32 %v2227, %v2227
        %v2356 = vmul.f32 %v2228, %v2228
        %v2357 = vmul.f32 %v2229, %v2229
        %v2358 = vmul.f32 %v2230, %v2230
        %v2359 = vmul.f32 %v2231, %v2231
        %v2360 = vmul.f32 %v2232, %v2232
        %v2361 = vmul.f32 %v2233, %v2233
        %v2362 = vmul.f32 %v2234, %v2234
        %v2363 = vmul.f32 %v2235, %v2235
        %v2364 = vmul.f32 %v2236, %v2236
        %v2365 = vmul.f32 %v2237, %v2237
        %v2366 = vmul.f32 %v2238, %v2238
        %v2367 = vmul.f32 %v2239, %v2239
        %v2368 = vmul.f32 %v2240, %v2240
        %v2369 = vmul.f32 %v2241, %v2241
        %v2370 = vmul.f32 %v2242, %v2242
        %v2371 = vmul.f32 %v2243, %v2243
        %v2372 = vmul.f32 %v2244, %v2244
        %v2373 = vmul.f32 %v2245, %v2245
        %v2374 = vmul.f32 %v2246, %v2246
        %v2375 = vmul.f32 %v2247, %v2247
        %v2376 = vmul.f32 %v2248, %v2248
        %v2377 = vmul.f32 %v2249, %v2249
        %v2378 = vmul.f32 %v2250, %v2250
        %v2379 = vmul.f32 %v2251, %v2251
        %v2380 = vmul.f32 %v2252, %v2252
        %v2381 = vmul.f32 %v2253, %v2253
        %v2382 = vmul.f32 %v2254, %v2254
        %v2383 = vmul.f32 %v2255, %v2255
        %v2384 = vmul.f32 %v2256, %v2256
        %v2385 = vmul.f32 %v2257, %v2257
        %v2386 = vmul.f32 %v2258, %v2258
        %v2387 = vmul.f32 %v2259, %v2259
        %v2388 = vmul.f32 %v2260, %v2260
        %v2389 = vmul.f32 %v2261, %v2261
        %v2390 = vmul.f32 %v2262, %v2262
        %v2391 = vmul.f32 %v2263, %v2263
        %v2392 = vmul.f32 %v2264, %v2264
        %v2393 = vmul.f32 %v2265, %v2265
        %v2394 = vmul.f32 %v2266, %v2266
        %v2395 = vmul.f32 %v2267, %v2267
        %v2396 = vmul.f32 %v2268, %v2268
        %v2397 = vmul.f32 %v2269, %v2269
        %v2398 = vmul.f32 %v2270, %v2270
        %v2399 = vmul.f32 %v2271, %v2271
        %v2400 = vmul.f32 %v2272, %v2272
        %v2401 = vmul.f32 %v2273, %v2273
        %v2402 = vmul.f32 %v2274, %v2274
        %v2403 = vmul.f32 %v2275, %v2275
        %v2404 = vmul.f32 %v2276, %v2276
        %v2405 = vmul.f32 %v2277, %v2277
        %v2406 = vmul.f32 %v2278, %v2278
        %v2407 = vmul.f32 %v2279, %v2279
        %v2408 = vmul.f32 %v2280, %v2280
        %v2409 = vmul.f32 %v2281, %v2281
        %v2410 = vmul.f32 %v2282, %v2282
        %v2411 = vmul.f32 %v2283, %v2283
        %v2412 = vmul.f32 %v2284, %v2284
        %v2413 = vmul.f32 %v2285, %v2285
        %v2414 = vmul.f32 %v2286, %v2286
        %v2415 = vmul.f32 %v2287, %v2287
        %v2416 = vmul.f32 %v2288, %v2288
        %v2417 = vmul.f32 %v2289, %v2289
        %v2418 = vmul.f32 %v2290, %v2290
        %v2419 = vmul.f32 %v2291, %v2291
        %v2420 = vmul.f32 %v2292, %v2292
        %v2421 = vmul.f32 %v2293, %v2293
        %v2422 = vmul.f32 %v2294, %v2294
        %v2423 = vmul.f32 %v2295, %v2295
        %v2424 = vmul.f32 %v2296, %v2296
        %v2425 = vmul.f32 %v2297, %v2297
        %v2426 = vmul.f32 %v2298, %v2298
        %v2427 = vmul.f32 %v2299, %v2299
        %v2428 = vmul.f32 %v2300, %v2300
        %v2429 = vmul.f32 %v2301, %v2301
        %v2430 = vmul.f32 %v2302, %v2302
        %v2431 = vmul.f32 %v2303, %v2303
        %v2432 = vmul.f32 %v2304, %v2304
        %v2433 = vmul.f32 %v2305, %v2305
        %v2434 = vmul.f32 %v2306, %v2306
        %v2435 = vmul.f32 %v2307, %v2307
        %v2436 = vmul.f32 %v2308, %v2308
        %v2437 = vmul.f32 %v2309, %v2309
        %v2438 = vmul.f32 %v2310, %v2310
        %v2439 = vmul.f32 %v2311, %v2311
        %v2440 = vmul.f32 %v2312, %v2312
        %v2441 = vmul.f32 %v2313, %v2313
        %v2442 = vmul.f32 %v2314, %v2314
        %v2443 = vmul.f32 %v2315, %v2315
        %v2444 = vmul.f32 %v2316, %v2316
        %v2445 = vmul.f32 %v2317, %v2317
        %v2446 = vmul.f32 %v2318, %v2318
        %v2447 = vmul.f32 %v2319, %v2319
        %v2448 = vmul.f32 %v2320, %v2320
        %v2449 = vmul.f32 %v2321, %v2321
        %v2450 = vmul.f32 %v2322, %v2322
        %v2451 = vmul.f32 %v2323, %v2323
        %v2452 = vmul.f32 %v2324, %v2324
        %v2453 = vmul.f32 %v2325, %v2325
        %v2454 = vmul.f32 %v2326, %v2326
        %v2455 = vmul.f32 %v2327, %v2327
        %v2456 = vmul.f32 %v2328, %v2328
        %v2457 = vmul.f32 %v2329, %v2329
        %2458 = vadd.xlane.f32.xlu0 %v2330
        %v2459 = vpop.xlane.xlu0 %2458
        %2460 = vadd.xlane.f32.xlu0 %v2331
        %v2461 = vpop.xlane.xlu0 %2460
        %2462 = vadd.xlane.f32.xlu0 %v2332
        %v2463 = vpop.xlane.xlu0 %2462
        %2464 = vadd.xlane.f32.xlu0 %v2333
        %v2465 = vpop.xlane.xlu0 %2464
        %2466 = vadd.xlane.f32.xlu0 %v2334
        %v2467 = vpop.xlane.xlu0 %2466
        %2468 = vadd.xlane.f32.xlu0 %v2335
        %v2469 = vpop.xlane.xlu0 %2468
        %2470 = vadd.xlane.f32.xlu0 %v2336
        %v2471 = vpop.xlane.xlu0 %2470
        %2472 = vadd.xlane.f32.xlu0 %v2337
        %v2473 = vpop.xlane.xlu0 %2472
        %2474 = vadd.xlane.f32.xlu0 %v2338
        %v2475 = vpop.xlane.xlu0 %2474
        %2476 = vadd.xlane.f32.xlu0 %v2339
        %v2477 = vpop.xlane.xlu0 %2476
        %2478 = vadd.xlane.f32.xlu0 %v2340
        %v2479 = vpop.xlane.xlu0 %2478
        %2480 = vadd.xlane.f32.xlu0 %v2341
        %v2481 = vpop.xlane.xlu0 %2480
        %2482 = vadd.xlane.f32.xlu0 %v2342
        %v2483 = vpop.xlane.xlu0 %2482
        %2484 = vadd.xlane.f32.xlu0 %v2343
        %v2485 = vpop.xlane.xlu0 %2484
        %2486 = vadd.xlane.f32.xlu0 %v2344
        %v2487 = vpop.xlane.xlu0 %2486
        %2488 = vadd.xlane.f32.xlu0 %v2345
        %v2489 = vpop.xlane.xlu0 %2488
        %2490 = vadd.xlane.f32.xlu0 %v2346
        %v2491 = vpop.xlane.xlu0 %2490
        %2492 = vadd.xlane.f32.xlu0 %v2347
        %v2493 = vpop.xlane.xlu0 %2492
        %2494 = vadd.xlane.f32.xlu0 %v2348
        %v2495 = vpop.xlane.xlu0 %2494
        %2496 = vadd.xlane.f32.xlu0 %v2349
        %v2497 = vpop.xlane.xlu0 %2496
        %2498 = vadd.xlane.f32.xlu0 %v2350
        %v2499 = vpop.xlane.xlu0 %2498
        %2500 = vadd.xlane.f32.xlu0 %v2351
        %v2501 = vpop.xlane.xlu0 %2500
        %2502 = vadd.xlane.f32.xlu0 %v2352
        %v2503 = vpop.xlane.xlu0 %2502
        %2504 = vadd.xlane.f32.xlu0 %v2353
        %v2505 = vpop.xlane.xlu0 %2504
        %2506 = vadd.xlane.f32.xlu0 %v2354
        %v2507 = vpop.xlane.xlu0 %2506
        %2508 = vadd.xlane.f32.xlu0 %v2355
        %v2509 = vpop.xlane.xlu0 %2508
        %2510 = vadd.xlane.f32.xlu0 %v2356
        %v2511 = vpop.xlane.xlu0 %2510
        %2512 = vadd.xlane.f32.xlu0 %v2357
        %v2513 = vpop.xlane.xlu0 %2512
        %2514 = vadd.xlane.f32.xlu0 %v2358
        %v2515 = vpop.xlane.xlu0 %2514
        %2516 = vadd.xlane.f32.xlu0 %v2359
        %v2517 = vpop.xlane.xlu0 %2516
        %2518 = vadd.xlane.f32.xlu0 %v2360
        %v2519 = vpop.xlane.xlu0 %2518
        %2520 = vadd.xlane.f32.xlu0 %v2361
        %v2521 = vpop.xlane.xlu0 %2520
        %2522 = vadd.xlane.f32.xlu0 %v2362
        %v2523 = vpop.xlane.xlu0 %2522
        %2524 = vadd.xlane.f32.xlu0 %v2363
        %v2525 = vpop.xlane.xlu0 %2524
        %2526 = vadd.xlane.f32.xlu0 %v2364
        %v2527 = vpop.xlane.xlu0 %2526
        %2528 = vadd.xlane.f32.xlu0 %v2365
        %v2529 = vpop.xlane.xlu0 %2528
        %2530 = vadd.xlane.f32.xlu0 %v2366
        %v2531 = vpop.xlane.xlu0 %2530
        %2532 = vadd.xlane.f32.xlu0 %v2367
        %v2533 = vpop.xlane.xlu0 %2532
        %2534 = vadd.xlane.f32.xlu0 %v2368
        %v2535 = vpop.xlane.xlu0 %2534
        %2536 = vadd.xlane.f32.xlu0 %v2369
        %v2537 = vpop.xlane.xlu0 %2536
        %2538 = vadd.xlane.f32.xlu0 %v2370
        %v2539 = vpop.xlane.xlu0 %2538
        %2540 = vadd.xlane.f32.xlu0 %v2371
        %v2541 = vpop.xlane.xlu0 %2540
        %2542 = vadd.xlane.f32.xlu0 %v2372
        %v2543 = vpop.xlane.xlu0 %2542
        %2544 = vadd.xlane.f32.xlu0 %v2373
        %v2545 = vpop.xlane.xlu0 %2544
        %2546 = vadd.xlane.f32.xlu0 %v2374
        %v2547 = vpop.xlane.xlu0 %2546
        %2548 = vadd.xlane.f32.xlu0 %v2375
        %v2549 = vpop.xlane.xlu0 %2548
        %2550 = vadd.xlane.f32.xlu0 %v2376
        %v2551 = vpop.xlane.xlu0 %2550
        %2552 = vadd.xlane.f32.xlu0 %v2377
        %v2553 = vpop.xlane.xlu0 %2552
        %2554 = vadd.xlane.f32.xlu0 %v2378
        %v2555 = vpop.xlane.xlu0 %2554
        %2556 = vadd.xlane.f32.xlu0 %v2379
        %v2557 = vpop.xlane.xlu0 %2556
        %2558 = vadd.xlane.f32.xlu0 %v2380
        %v2559 = vpop.xlane.xlu0 %2558
        %2560 = vadd.xlane.f32.xlu0 %v2381
        %v2561 = vpop.xlane.xlu0 %2560
        %2562 = vadd.xlane.f32.xlu0 %v2382
        %v2563 = vpop.xlane.xlu0 %2562
        %2564 = vadd.xlane.f32.xlu0 %v2383
        %v2565 = vpop.xlane.xlu0 %2564
        %2566 = vadd.xlane.f32.xlu0 %v2384
        %v2567 = vpop.xlane.xlu0 %2566
        %2568 = vadd.xlane.f32.xlu0 %v2385
        %v2569 = vpop.xlane.xlu0 %2568
        %2570 = vadd.xlane.f32.xlu0 %v2386
        %v2571 = vpop.xlane.xlu0 %2570
        %2572 = vadd.xlane.f32.xlu0 %v2387
        %v2573 = vpop.xlane.xlu0 %2572
        %2574 = vadd.xlane.f32.xlu0 %v2388
        %v2575 = vpop.xlane.xlu0 %2574
        %2576 = vadd.xlane.f32.xlu0 %v2389
        %v2577 = vpop.xlane.xlu0 %2576
        %2578 = vadd.xlane.f32.xlu0 %v2390
        %v2579 = vpop.xlane.xlu0 %2578
        %2580 = vadd.xlane.f32.xlu0 %v2391
        %v2581 = vpop.xlane.xlu0 %2580
        %2582 = vadd.xlane.f32.xlu0 %v2392
        %v2583 = vpop.xlane.xlu0 %2582
        %2584 = vadd.xlane.f32.xlu0 %v2393
        %v2585 = vpop.xlane.xlu0 %2584
        %2586 = vadd.xlane.f32.xlu0 %v2394
        %v2587 = vpop.xlane.xlu0 %2586
        %2588 = vadd.xlane.f32.xlu0 %v2395
        %v2589 = vpop.xlane.xlu0 %2588
        %2590 = vadd.xlane.f32.xlu0 %v2396
        %v2591 = vpop.xlane.xlu0 %2590
        %2592 = vadd.xlane.f32.xlu0 %v2397
        %v2593 = vpop.xlane.xlu0 %2592
        %2594 = vadd.xlane.f32.xlu0 %v2398
        %v2595 = vpop.xlane.xlu0 %2594
        %2596 = vadd.xlane.f32.xlu0 %v2399
        %v2597 = vpop.xlane.xlu0 %2596
        %2598 = vadd.xlane.f32.xlu0 %v2400
        %v2599 = vpop.xlane.xlu0 %2598
        %2600 = vadd.xlane.f32.xlu0 %v2401
        %v2601 = vpop.xlane.xlu0 %2600
        %2602 = vadd.xlane.f32.xlu0 %v2402
        %v2603 = vpop.xlane.xlu0 %2602
        %2604 = vadd.xlane.f32.xlu0 %v2403
        %v2605 = vpop.xlane.xlu0 %2604
        %2606 = vadd.xlane.f32.xlu0 %v2404
        %v2607 = vpop.xlane.xlu0 %2606
        %2608 = vadd.xlane.f32.xlu0 %v2405
        %v2609 = vpop.xlane.xlu0 %2608
        %2610 = vadd.xlane.f32.xlu0 %v2406
        %v2611 = vpop.xlane.xlu0 %2610
        %2612 = vadd.xlane.f32.xlu0 %v2407
        %v2613 = vpop.xlane.xlu0 %2612
        %2614 = vadd.xlane.f32.xlu0 %v2408
        %v2615 = vpop.xlane.xlu0 %2614
        %2616 = vadd.xlane.f32.xlu0 %v2409
        %v2617 = vpop.xlane.xlu0 %2616
        %2618 = vadd.xlane.f32.xlu0 %v2410
        %v2619 = vpop.xlane.xlu0 %2618
        %2620 = vadd.xlane.f32.xlu0 %v2411
        %v2621 = vpop.xlane.xlu0 %2620
        %2622 = vadd.xlane.f32.xlu0 %v2412
        %v2623 = vpop.xlane.xlu0 %2622
        %2624 = vadd.xlane.f32.xlu0 %v2413
        %v2625 = vpop.xlane.xlu0 %2624
        %2626 = vadd.xlane.f32.xlu0 %v2414
        %v2627 = vpop.xlane.xlu0 %2626
        %2628 = vadd.xlane.f32.xlu0 %v2415
        %v2629 = vpop.xlane.xlu0 %2628
        %2630 = vadd.xlane.f32.xlu0 %v2416
        %v2631 = vpop.xlane.xlu0 %2630
        %2632 = vadd.xlane.f32.xlu0 %v2417
        %v2633 = vpop.xlane.xlu0 %2632
        %2634 = vadd.xlane.f32.xlu0 %v2418
        %v2635 = vpop.xlane.xlu0 %2634
        %2636 = vadd.xlane.f32.xlu0 %v2419
        %v2637 = vpop.xlane.xlu0 %2636
        %2638 = vadd.xlane.f32.xlu0 %v2420
        %v2639 = vpop.xlane.xlu0 %2638
        %2640 = vadd.xlane.f32.xlu0 %v2421
        %v2641 = vpop.xlane.xlu0 %2640
        %2642 = vadd.xlane.f32.xlu0 %v2422
        %v2643 = vpop.xlane.xlu0 %2642
        %2644 = vadd.xlane.f32.xlu0 %v2423
        %v2645 = vpop.xlane.xlu0 %2644
        %2646 = vadd.xlane.f32.xlu0 %v2424
        %v2647 = vpop.xlane.xlu0 %2646
        %2648 = vadd.xlane.f32.xlu0 %v2425
        %v2649 = vpop.xlane.xlu0 %2648
        %2650 = vadd.xlane.f32.xlu0 %v2426
        %v2651 = vpop.xlane.xlu0 %2650
        %2652 = vadd.xlane.f32.xlu0 %v2427
        %v2653 = vpop.xlane.xlu0 %2652
        %2654 = vadd.xlane.f32.xlu0 %v2428
        %v2655 = vpop.xlane.xlu0 %2654
        %2656 = vadd.xlane.f32.xlu0 %v2429
        %v2657 = vpop.xlane.xlu0 %2656
        %2658 = vadd.xlane.f32.xlu0 %v2430
        %v2659 = vpop.xlane.xlu0 %2658
        %2660 = vadd.xlane.f32.xlu0 %v2431
        %v2661 = vpop.xlane.xlu0 %2660
        %2662 = vadd.xlane.f32.xlu0 %v2432
        %v2663 = vpop.xlane.xlu0 %2662
        %2664 = vadd.xlane.f32.xlu0 %v2433
        %v2665 = vpop.xlane.xlu0 %2664
        %2666 = vadd.xlane.f32.xlu0 %v2434
        %v2667 = vpop.xlane.xlu0 %2666
        %2668 = vadd.xlane.f32.xlu0 %v2435
        %v2669 = vpop.xlane.xlu0 %2668
        %2670 = vadd.xlane.f32.xlu0 %v2436
        %v2671 = vpop.xlane.xlu0 %2670
        %2672 = vadd.xlane.f32.xlu0 %v2437
        %v2673 = vpop.xlane.xlu0 %2672
        %2674 = vadd.xlane.f32.xlu0 %v2438
        %v2675 = vpop.xlane.xlu0 %2674
        %2676 = vadd.xlane.f32.xlu0 %v2439
        %v2677 = vpop.xlane.xlu0 %2676
        %2678 = vadd.xlane.f32.xlu0 %v2440
        %v2679 = vpop.xlane.xlu0 %2678
        %2680 = vadd.xlane.f32.xlu0 %v2441
        %v2681 = vpop.xlane.xlu0 %2680
        %2682 = vadd.xlane.f32.xlu0 %v2442
        %v2683 = vpop.xlane.xlu0 %2682
        %2684 = vadd.xlane.f32.xlu0 %v2443
        %v2685 = vpop.xlane.xlu0 %2684
        %2686 = vadd.xlane.f32.xlu0 %v2444
        %v2687 = vpop.xlane.xlu0 %2686
        %2688 = vadd.xlane.f32.xlu0 %v2445
        %v2689 = vpop.xlane.xlu0 %2688
        %2690 = vadd.xlane.f32.xlu0 %v2446
        %v2691 = vpop.xlane.xlu0 %2690
        %2692 = vadd.xlane.f32.xlu0 %v2447
        %v2693 = vpop.xlane.xlu0 %2692
        %2694 = vadd.xlane.f32.xlu0 %v2448
        %v2695 = vpop.xlane.xlu0 %2694
        %2696 = vadd.xlane.f32.xlu0 %v2449
        %v2697 = vpop.xlane.xlu0 %2696
        %2698 = vadd.xlane.f32.xlu0 %v2450
        %v2699 = vpop.xlane.xlu0 %2698
        %2700 = vadd.xlane.f32.xlu0 %v2451
        %v2701 = vpop.xlane.xlu0 %2700
        %2702 = vadd.xlane.f32.xlu0 %v2452
        %v2703 = vpop.xlane.xlu0 %2702
        %2704 = vadd.xlane.f32.xlu0 %v2453
        %v2705 = vpop.xlane.xlu0 %2704
        %2706 = vadd.xlane.f32.xlu0 %v2454
        %v2707 = vpop.xlane.xlu0 %2706
        %2708 = vadd.xlane.f32.xlu0 %v2455
        %v2709 = vpop.xlane.xlu0 %2708
        %2710 = vadd.xlane.f32.xlu0 %v2456
        %v2711 = vpop.xlane.xlu0 %2710
        %2712 = vadd.xlane.f32.xlu0 %v2457
        %v2713 = vpop.xlane.xlu0 %2712
        %v2714 = vmax.f32 %v2459, 1e-24
        %v2715 = vmax.f32 %v2461, 1e-24
        %v2716 = vmax.f32 %v2463, 1e-24
        %v2717 = vmax.f32 %v2465, 1e-24
        %v2718 = vmax.f32 %v2467, 1e-24
        %v2719 = vmax.f32 %v2469, 1e-24
        %v2720 = vmax.f32 %v2471, 1e-24
        %v2721 = vmax.f32 %v2473, 1e-24
        %v2722 = vmax.f32 %v2475, 1e-24
        %v2723 = vmax.f32 %v2477, 1e-24
        %v2724 = vmax.f32 %v2479, 1e-24
        %v2725 = vmax.f32 %v2481, 1e-24
        %v2726 = vmax.f32 %v2483, 1e-24
        %v2727 = vmax.f32 %v2485, 1e-24
        %v2728 = vmax.f32 %v2487, 1e-24
        %v2729 = vmax.f32 %v2489, 1e-24
        %v2730 = vmax.f32 %v2491, 1e-24
        %v2731 = vmax.f32 %v2493, 1e-24
        %v2732 = vmax.f32 %v2495, 1e-24
        %v2733 = vmax.f32 %v2497, 1e-24
        %v2734 = vmax.f32 %v2499, 1e-24
        %v2735 = vmax.f32 %v2501, 1e-24
        %v2736 = vmax.f32 %v2503, 1e-24
        %v2737 = vmax.f32 %v2505, 1e-24
        %v2738 = vmax.f32 %v2507, 1e-24
        %v2739 = vmax.f32 %v2509, 1e-24
        %v2740 = vmax.f32 %v2511, 1e-24
        %v2741 = vmax.f32 %v2513, 1e-24
        %v2742 = vmax.f32 %v2515, 1e-24
        %v2743 = vmax.f32 %v2517, 1e-24
        %v2744 = vmax.f32 %v2519, 1e-24
        %v2745 = vmax.f32 %v2521, 1e-24
        %v2746 = vmax.f32 %v2523, 1e-24
        %v2747 = vmax.f32 %v2525, 1e-24
        %v2748 = vmax.f32 %v2527, 1e-24
        %v2749 = vmax.f32 %v2529, 1e-24
        %v2750 = vmax.f32 %v2531, 1e-24
        %v2751 = vmax.f32 %v2533, 1e-24
        %v2752 = vmax.f32 %v2535, 1e-24
        %v2753 = vmax.f32 %v2537, 1e-24
        %v2754 = vmax.f32 %v2539, 1e-24
        %v2755 = vmax.f32 %v2541, 1e-24
        %v2756 = vmax.f32 %v2543, 1e-24
        %v2757 = vmax.f32 %v2545, 1e-24
        %v2758 = vmax.f32 %v2547, 1e-24
        %v2759 = vmax.f32 %v2549, 1e-24
        %v2760 = vmax.f32 %v2551, 1e-24
        %v2761 = vmax.f32 %v2553, 1e-24
        %v2762 = vmax.f32 %v2555, 1e-24
        %v2763 = vmax.f32 %v2557, 1e-24
        %v2764 = vmax.f32 %v2559, 1e-24
        %v2765 = vmax.f32 %v2561, 1e-24
        %v2766 = vmax.f32 %v2563, 1e-24
        %v2767 = vmax.f32 %v2565, 1e-24
        %v2768 = vmax.f32 %v2567, 1e-24
        %v2769 = vmax.f32 %v2569, 1e-24
        %v2770 = vmax.f32 %v2571, 1e-24
        %v2771 = vmax.f32 %v2573, 1e-24
        %v2772 = vmax.f32 %v2575, 1e-24
        %v2773 = vmax.f32 %v2577, 1e-24
        %v2774 = vmax.f32 %v2579, 1e-24
        %v2775 = vmax.f32 %v2581, 1e-24
        %v2776 = vmax.f32 %v2583, 1e-24
        %v2777 = vmax.f32 %v2585, 1e-24
        %v2778 = vmax.f32 %v2587, 1e-24
        %v2779 = vmax.f32 %v2589, 1e-24
        %v2780 = vmax.f32 %v2591, 1e-24
        %v2781 = vmax.f32 %v2593, 1e-24
        %v2782 = vmax.f32 %v2595, 1e-24
        %v2783 = vmax.f32 %v2597, 1e-24
        %v2784 = vmax.f32 %v2599, 1e-24
        %v2785 = vmax.f32 %v2601, 1e-24
        %v2786 = vmax.f32 %v2603, 1e-24
        %v2787 = vmax.f32 %v2605, 1e-24
        %v2788 = vmax.f32 %v2607, 1e-24
        %v2789 = vmax.f32 %v2609, 1e-24
        %v2790 = vmax.f32 %v2611, 1e-24
        %v2791 = vmax.f32 %v2613, 1e-24
        %v2792 = vmax.f32 %v2615, 1e-24
        %v2793 = vmax.f32 %v2617, 1e-24
        %v2794 = vmax.f32 %v2619, 1e-24
        %v2795 = vmax.f32 %v2621, 1e-24
        %v2796 = vmax.f32 %v2623, 1e-24
        %v2797 = vmax.f32 %v2625, 1e-24
        %v2798 = vmax.f32 %v2627, 1e-24
        %v2799 = vmax.f32 %v2629, 1e-24
        %v2800 = vmax.f32 %v2631, 1e-24
        %v2801 = vmax.f32 %v2633, 1e-24
        %v2802 = vmax.f32 %v2635, 1e-24
        %v2803 = vmax.f32 %v2637, 1e-24
        %v2804 = vmax.f32 %v2639, 1e-24
        %v2805 = vmax.f32 %v2641, 1e-24
        %v2806 = vmax.f32 %v2643, 1e-24
        %v2807 = vmax.f32 %v2645, 1e-24
        %v2808 = vmax.f32 %v2647, 1e-24
        %v2809 = vmax.f32 %v2649, 1e-24
        %v2810 = vmax.f32 %v2651, 1e-24
        %v2811 = vmax.f32 %v2653, 1e-24
        %v2812 = vmax.f32 %v2655, 1e-24
        %v2813 = vmax.f32 %v2657, 1e-24
        %v2814 = vmax.f32 %v2659, 1e-24
        %v2815 = vmax.f32 %v2661, 1e-24
        %v2816 = vmax.f32 %v2663, 1e-24
        %v2817 = vmax.f32 %v2665, 1e-24
        %v2818 = vmax.f32 %v2667, 1e-24
        %v2819 = vmax.f32 %v2669, 1e-24
        %v2820 = vmax.f32 %v2671, 1e-24
        %v2821 = vmax.f32 %v2673, 1e-24
        %v2822 = vmax.f32 %v2675, 1e-24
        %v2823 = vmax.f32 %v2677, 1e-24
        %v2824 = vmax.f32 %v2679, 1e-24
        %v2825 = vmax.f32 %v2681, 1e-24
        %v2826 = vmax.f32 %v2683, 1e-24
        %v2827 = vmax.f32 %v2685, 1e-24
        %v2828 = vmax.f32 %v2687, 1e-24
        %v2829 = vmax.f32 %v2689, 1e-24
        %v2830 = vmax.f32 %v2691, 1e-24
        %v2831 = vmax.f32 %v2693, 1e-24
        %v2832 = vmax.f32 %v2695, 1e-24
        %v2833 = vmax.f32 %v2697, 1e-24
        %v2834 = vmax.f32 %v2699, 1e-24
        %v2835 = vmax.f32 %v2701, 1e-24
        %v2836 = vmax.f32 %v2703, 1e-24
        %v2837 = vmax.f32 %v2705, 1e-24
        %v2838 = vmax.f32 %v2707, 1e-24
        %v2839 = vmax.f32 %v2709, 1e-24
        %v2840 = vmax.f32 %v2711, 1e-24
        %v2841 = vmax.f32 %v2713, 1e-24
        %v2842 = vrsqrt.pop %v2714
        %v2843 = vrsqrt.pop %v2715
        %v2844 = vrsqrt.pop %v2716
        %v2845 = vrsqrt.pop %v2717
        %v2846 = vrsqrt.pop %v2718
        %v2847 = vrsqrt.pop %v2719
        %v2848 = vrsqrt.pop %v2720
        %v2849 = vrsqrt.pop %v2721
        %v2850 = vrsqrt.pop %v2722
        %v2851 = vrsqrt.pop %v2723
        %v2852 = vrsqrt.pop %v2724
        %v2853 = vrsqrt.pop %v2725
        %v2854 = vrsqrt.pop %v2726
        %v2855 = vrsqrt.pop %v2727
        %v2856 = vrsqrt.pop %v2728
        %v2857 = vrsqrt.pop %v2729
        %v2858 = vrsqrt.pop %v2730
        %v2859 = vrsqrt.pop %v2731
        %v2860 = vrsqrt.pop %v2732
        %v2861 = vrsqrt.pop %v2733
        %v2862 = vrsqrt.pop %v2734
        %v2863 = vrsqrt.pop %v2735
        %v2864 = vrsqrt.pop %v2736
        %v2865 = vrsqrt.pop %v2737
        %v2866 = vrsqrt.pop %v2738
        %v2867 = vrsqrt.pop %v2739
        %v2868 = vrsqrt.pop %v2740
        %v2869 = vrsqrt.pop %v2741
        %v2870 = vrsqrt.pop %v2742
        %v2871 = vrsqrt.pop %v2743
        %v2872 = vrsqrt.pop %v2744
        %v2873 = vrsqrt.pop %v2745
        %v2874 = vrsqrt.pop %v2746
        %v2875 = vrsqrt.pop %v2747
        %v2876 = vrsqrt.pop %v2748
        %v2877 = vrsqrt.pop %v2749
        %v2878 = vrsqrt.pop %v2750
        %v2879 = vrsqrt.pop %v2751
        %v2880 = vrsqrt.pop %v2752
        %v2881 = vrsqrt.pop %v2753
        %v2882 = vrsqrt.pop %v2754
        %v2883 = vrsqrt.pop %v2755
        %v2884 = vrsqrt.pop %v2756
        %v2885 = vrsqrt.pop %v2757
        %v2886 = vrsqrt.pop %v2758
        %v2887 = vrsqrt.pop %v2759
        %v2888 = vrsqrt.pop %v2760
        %v2889 = vrsqrt.pop %v2761
        %v2890 = vrsqrt.pop %v2762
        %v2891 = vrsqrt.pop %v2763
        %v2892 = vrsqrt.pop %v2764
        %v2893 = vrsqrt.pop %v2765
        %v2894 = vrsqrt.pop %v2766
        %v2895 = vrsqrt.pop %v2767
        %v2896 = vrsqrt.pop %v2768
        %v2897 = vrsqrt.pop %v2769
        %v2898 = vrsqrt.pop %v2770
        %v2899 = vrsqrt.pop %v2771
        %v2900 = vrsqrt.pop %v2772
        %v2901 = vrsqrt.pop %v2773
        %v2902 = vrsqrt.pop %v2774
        %v2903 = vrsqrt.pop %v2775
        %v2904 = vrsqrt.pop %v2776
        %v2905 = vrsqrt.pop %v2777
        %v2906 = vrsqrt.pop %v2778
        %v2907 = vrsqrt.pop %v2779
        %v2908 = vrsqrt.pop %v2780
        %v2909 = vrsqrt.pop %v2781
        %v2910 = vrsqrt.pop %v2782
        %v2911 = vrsqrt.pop %v2783
        %v2912 = vrsqrt.pop %v2784
        %v2913 = vrsqrt.pop %v2785
        %v2914 = vrsqrt.pop %v2786
        %v2915 = vrsqrt.pop %v2787
        %v2916 = vrsqrt.pop %v2788
        %v2917 = vrsqrt.pop %v2789
        %v2918 = vrsqrt.pop %v2790
        %v2919 = vrsqrt.pop %v2791
        %v2920 = vrsqrt.pop %v2792
        %v2921 = vrsqrt.pop %v2793
        %v2922 = vrsqrt.pop %v2794
        %v2923 = vrsqrt.pop %v2795
        %v2924 = vrsqrt.pop %v2796
        %v2925 = vrsqrt.pop %v2797
        %v2926 = vrsqrt.pop %v2798
        %v2927 = vrsqrt.pop %v2799
        %v2928 = vrsqrt.pop %v2800
        %v2929 = vrsqrt.pop %v2801
        %v2930 = vrsqrt.pop %v2802
        %v2931 = vrsqrt.pop %v2803
        %v2932 = vrsqrt.pop %v2804
        %v2933 = vrsqrt.pop %v2805
        %v2934 = vrsqrt.pop %v2806
        %v2935 = vrsqrt.pop %v2807
        %v2936 = vrsqrt.pop %v2808
        %v2937 = vrsqrt.pop %v2809
        %v2938 = vrsqrt.pop %v2810
        %v2939 = vrsqrt.pop %v2811
        %v2940 = vrsqrt.pop %v2812
        %v2941 = vrsqrt.pop %v2813
        %v2942 = vrsqrt.pop %v2814
        %v2943 = vrsqrt.pop %v2815
        %v2944 = vrsqrt.pop %v2816
        %v2945 = vrsqrt.pop %v2817
        %v2946 = vrsqrt.pop %v2818
        %v2947 = vrsqrt.pop %v2819
        %v2948 = vrsqrt.pop %v2820
        %v2949 = vrsqrt.pop %v2821
        %v2950 = vrsqrt.pop %v2822
        %v2951 = vrsqrt.pop %v2823
        %v2952 = vrsqrt.pop %v2824
        %v2953 = vrsqrt.pop %v2825
        %v2954 = vrsqrt.pop %v2826
        %v2955 = vrsqrt.pop %v2827
        %v2956 = vrsqrt.pop %v2828
        %v2957 = vrsqrt.pop %v2829
        %v2958 = vrsqrt.pop %v2830
        %v2959 = vrsqrt.pop %v2831
        %v2960 = vrsqrt.pop %v2832
        %v2961 = vrsqrt.pop %v2833
        %v2962 = vrsqrt.pop %v2834
        %v2963 = vrsqrt.pop %v2835
        %v2964 = vrsqrt.pop %v2836
        %v2965 = vrsqrt.pop %v2837
        %v2966 = vrsqrt.pop %v2838
        %v2967 = vrsqrt.pop %v2839
        %v2968 = vrsqrt.pop %v2840
        %v2969 = vrsqrt.pop %v2841
        %v2970 = vsub.f32 %v1305, %v284
        %v2971 = vsub.f32 %v1311, %v286
        %v2972 = vsub.f32 %v1317, %v288
        %v2973 = vsub.f32 %v1323, %v290
        %v2974 = vsub.f32 %v1329, %v292
        %v2975 = vsub.f32 %v1335, %v294
        %v2976 = vsub.f32 %v1341, %v296
        %v2977 = vsub.f32 %v1347, %v298
        %v2978 = vsub.f32 %v1353, %v300
        %v2979 = vsub.f32 %v1359, %v302
        %v2980 = vsub.f32 %v1365, %v304
        %v2981 = vsub.f32 %v1371, %v306
        %v2982 = vsub.f32 %v1377, %v308
        %v2983 = vsub.f32 %v1383, %v310
        %v2984 = vsub.f32 %v1389, %v312
        %v2985 = vsub.f32 %v1395, %v314
        %v2986 = vsub.f32 %v1401, %v284
        %v2987 = vsub.f32 %v1407, %v286
        %v2988 = vsub.f32 %v1413, %v288
        %v2989 = vsub.f32 %v1419, %v290
        %v2990 = vsub.f32 %v1425, %v292
        %v2991 = vsub.f32 %v1431, %v294
        %v2992 = vsub.f32 %v1437, %v296
        %v2993 = vsub.f32 %v1443, %v298
        %v2994 = vsub.f32 %v1449, %v300
        %v2995 = vsub.f32 %v1455, %v302
        %v2996 = vsub.f32 %v1461, %v304
        %v2997 = vsub.f32 %v1467, %v306
        %v2998 = vsub.f32 %v1473, %v308
        %v2999 = vsub.f32 %v1479, %v310
        %v3000 = vsub.f32 %v1485, %v312
        %v3001 = vsub.f32 %v1491, %v314
        %v3002 = vsub.f32 %v1497, %v284
        %v3003 = vsub.f32 %v1503, %v286
        %v3004 = vsub.f32 %v1509, %v288
        %v3005 = vsub.f32 %v1515, %v290
        %v3006 = vsub.f32 %v1521, %v292
        %v3007 = vsub.f32 %v1527, %v294
        %v3008 = vsub.f32 %v1533, %v296
        %v3009 = vsub.f32 %v1539, %v298
        %v3010 = vsub.f32 %v1545, %v300
        %v3011 = vsub.f32 %v1551, %v302
        %v3012 = vsub.f32 %v1557, %v304
        %v3013 = vsub.f32 %v1563, %v306
        %v3014 = vsub.f32 %v1569, %v308
        %v3015 = vsub.f32 %v1575, %v310
        %v3016 = vsub.f32 %v1581, %v312
        %v3017 = vsub.f32 %v1587, %v314
        %v3018 = vsub.f32 %v1593, %v284
        %v3019 = vsub.f32 %v1599, %v286
        %v3020 = vsub.f32 %v1605, %v288
        %v3021 = vsub.f32 %v1611, %v290
        %v3022 = vsub.f32 %v1617, %v292
        %v3023 = vsub.f32 %v1623, %v294
        %v3024 = vsub.f32 %v1629, %v296
        %v3025 = vsub.f32 %v1635, %v298
        %v3026 = vsub.f32 %v1641, %v300
        %v3027 = vsub.f32 %v1647, %v302
        %v3028 = vsub.f32 %v1653, %v304
        %v3029 = vsub.f32 %v1659, %v306
        %v3030 = vsub.f32 %v1665, %v308
        %v3031 = vsub.f32 %v1671, %v310
        %v3032 = vsub.f32 %v1677, %v312
        %v3033 = vsub.f32 %v1683, %v314
        %v3034 = vsub.f32 %v1689, %v284
        %v3035 = vsub.f32 %v1695, %v286
        %v3036 = vsub.f32 %v1701, %v288
        %v3037 = vsub.f32 %v1707, %v290
        %v3038 = vsub.f32 %v1713, %v292
        %v3039 = vsub.f32 %v1719, %v294
        %v3040 = vsub.f32 %v1725, %v296
        %v3041 = vsub.f32 %v1731, %v298
        %v3042 = vsub.f32 %v1737, %v300
        %v3043 = vsub.f32 %v1743, %v302
        %v3044 = vsub.f32 %v1749, %v304
        %v3045 = vsub.f32 %v1755, %v306
        %v3046 = vsub.f32 %v1761, %v308
        %v3047 = vsub.f32 %v1767, %v310
        %v3048 = vsub.f32 %v1773, %v312
        %v3049 = vsub.f32 %v1779, %v314
        %v3050 = vsub.f32 %v1785, %v284
        %v3051 = vsub.f32 %v1791, %v286
        %v3052 = vsub.f32 %v1797, %v288
        %v3053 = vsub.f32 %v1803, %v290
        %v3054 = vsub.f32 %v1809, %v292
        %v3055 = vsub.f32 %v1815, %v294
        %v3056 = vsub.f32 %v1821, %v296
        %v3057 = vsub.f32 %v1827, %v298
        %v3058 = vsub.f32 %v1833, %v300
        %v3059 = vsub.f32 %v1839, %v302
        %v3060 = vsub.f32 %v1845, %v304
        %v3061 = vsub.f32 %v1851, %v306
        %v3062 = vsub.f32 %v1857, %v308
        %v3063 = vsub.f32 %v1863, %v310
        %v3064 = vsub.f32 %v1869, %v312
        %v3065 = vsub.f32 %v1875, %v314
        %v3066 = vsub.f32 %v1881, %v284
        %v3067 = vsub.f32 %v1887, %v286
        %v3068 = vsub.f32 %v1893, %v288
        %v3069 = vsub.f32 %v1899, %v290
        %v3070 = vsub.f32 %v1905, %v292
        %v3071 = vsub.f32 %v1911, %v294
        %v3072 = vsub.f32 %v1917, %v296
        %v3073 = vsub.f32 %v1923, %v298
        %v3074 = vsub.f32 %v1929, %v300
        %v3075 = vsub.f32 %v1935, %v302
        %v3076 = vsub.f32 %v1941, %v304
        %v3077 = vsub.f32 %v1947, %v306
        %v3078 = vsub.f32 %v1953, %v308
        %v3079 = vsub.f32 %v1959, %v310
        %v3080 = vsub.f32 %v1965, %v312
        %v3081 = vsub.f32 %v1971, %v314
        %v3082 = vsub.f32 %v1977, %v284
        %v3083 = vsub.f32 %v1983, %v286
        %v3084 = vsub.f32 %v1989, %v288
        %v3085 = vsub.f32 %v1995, %v290
        %v3086 = vsub.f32 %v2001, %v292
        %v3087 = vsub.f32 %v2007, %v294
        %v3088 = vsub.f32 %v2013, %v296
        %v3089 = vsub.f32 %v2019, %v298
        %v3090 = vsub.f32 %v2025, %v300
        %v3091 = vsub.f32 %v2031, %v302
        %v3092 = vsub.f32 %v2037, %v304
        %v3093 = vsub.f32 %v2043, %v306
        %v3094 = vsub.f32 %v2049, %v308
        %v3095 = vsub.f32 %v2055, %v310
        %v3096 = vsub.f32 %v2061, %v312
        %v3097 = vsub.f32 %v2067, %v314
        %v3098 = vmul.f32 %v2842, %v2970
        %v3099 = vmul.f32 %v2843, %v2971
        %v3100 = vmul.f32 %v2844, %v2972
        %v3101 = vmul.f32 %v2845, %v2973
        %v3102 = vmul.f32 %v2846, %v2974
        %v3103 = vmul.f32 %v2847, %v2975
        %v3104 = vmul.f32 %v2848, %v2976
        %v3105 = vmul.f32 %v2849, %v2977
        %v3106 = vmul.f32 %v2850, %v2978
        %v3107 = vmul.f32 %v2851, %v2979
        %v3108 = vmul.f32 %v2852, %v2980
        %v3109 = vmul.f32 %v2853, %v2981
        %v3110 = vmul.f32 %v2854, %v2982
        %v3111 = vmul.f32 %v2855, %v2983
        %v3112 = vmul.f32 %v2856, %v2984
        %v3113 = vmul.f32 %v2857, %v2985
        %v3114 = vmul.f32 %v2858, %v2986
        %v3115 = vmul.f32 %v2859, %v2987
        %v3116 = vmul.f32 %v2860, %v2988
        %v3117 = vmul.f32 %v2861, %v2989
        %v3118 = vmul.f32 %v2862, %v2990
        %v3119 = vmul.f32 %v2863, %v2991
        %v3120 = vmul.f32 %v2864, %v2992
        %v3121 = vmul.f32 %v2865, %v2993
        %v3122 = vmul.f32 %v2866, %v2994
        %v3123 = vmul.f32 %v2867, %v2995
        %v3124 = vmul.f32 %v2868, %v2996
        %v3125 = vmul.f32 %v2869, %v2997
        %v3126 = vmul.f32 %v2870, %v2998
        %v3127 = vmul.f32 %v2871, %v2999
        %v3128 = vmul.f32 %v2872, %v3000
        %v3129 = vmul.f32 %v2873, %v3001
        %v3130 = vmul.f32 %v2874, %v3002
        %v3131 = vmul.f32 %v2875, %v3003
        %v3132 = vmul.f32 %v2876, %v3004
        %v3133 = vmul.f32 %v2877, %v3005
        %v3134 = vmul.f32 %v2878, %v3006
        %v3135 = vmul.f32 %v2879, %v3007
        %v3136 = vmul.f32 %v2880, %v3008
        %v3137 = vmul.f32 %v2881, %v3009
        %v3138 = vmul.f32 %v2882, %v3010
        %v3139 = vmul.f32 %v2883, %v3011
        %v3140 = vmul.f32 %v2884, %v3012
        %v3141 = vmul.f32 %v2885, %v3013
        %v3142 = vmul.f32 %v2886, %v3014
        %v3143 = vmul.f32 %v2887, %v3015
        %v3144 = vmul.f32 %v2888, %v3016
        %v3145 = vmul.f32 %v2889, %v3017
        %v3146 = vmul.f32 %v2890, %v3018
        %v3147 = vmul.f32 %v2891, %v3019
        %v3148 = vmul.f32 %v2892, %v3020
        %v3149 = vmul.f32 %v2893, %v3021
        %v3150 = vmul.f32 %v2894, %v3022
        %v3151 = vmul.f32 %v2895, %v3023
        %v3152 = vmul.f32 %v2896, %v3024
        %v3153 = vmul.f32 %v2897, %v3025
        %v3154 = vmul.f32 %v2898, %v3026
        %v3155 = vmul.f32 %v2899, %v3027
        %v3156 = vmul.f32 %v2900, %v3028
        %v3157 = vmul.f32 %v2901, %v3029
        %v3158 = vmul.f32 %v2902, %v3030
        %v3159 = vmul.f32 %v2903, %v3031
        %v3160 = vmul.f32 %v2904, %v3032
        %v3161 = vmul.f32 %v2905, %v3033
        %v3162 = vmul.f32 %v2906, %v3034
        %v3163 = vmul.f32 %v2907, %v3035
        %v3164 = vmul.f32 %v2908, %v3036
        %v3165 = vmul.f32 %v2909, %v3037
        %v3166 = vmul.f32 %v2910, %v3038
        %v3167 = vmul.f32 %v2911, %v3039
        %v3168 = vmul.f32 %v2912, %v3040
        %v3169 = vmul.f32 %v2913, %v3041
        %v3170 = vmul.f32 %v2914, %v3042
        %v3171 = vmul.f32 %v2915, %v3043
        %v3172 = vmul.f32 %v2916, %v3044
        %v3173 = vmul.f32 %v2917, %v3045
        %v3174 = vmul.f32 %v2918, %v3046
        %v3175 = vmul.f32 %v2919, %v3047
        %v3176 = vmul.f32 %v2920, %v3048
        %v3177 = vmul.f32 %v2921, %v3049
        %v3178 = vmul.f32 %v2922, %v3050
        %v3179 = vmul.f32 %v2923, %v3051
        %v3180 = vmul.f32 %v2924, %v3052
        %v3181 = vmul.f32 %v2925, %v3053
        %v3182 = vmul.f32 %v2926, %v3054
        %v3183 = vmul.f32 %v2927, %v3055
        %v3184 = vmul.f32 %v2928, %v3056
        %v3185 = vmul.f32 %v2929, %v3057
        %v3186 = vmul.f32 %v2930, %v3058
        %v3187 = vmul.f32 %v2931, %v3059
        %v3188 = vmul.f32 %v2932, %v3060
        %v3189 = vmul.f32 %v2933, %v3061
        %v3190 = vmul.f32 %v2934, %v3062
        %v3191 = vmul.f32 %v2935, %v3063
        %v3192 = vmul.f32 %v2936, %v3064
        %v3193 = vmul.f32 %v2937, %v3065
        %v3194 = vmul.f32 %v2938, %v3066
        %v3195 = vmul.f32 %v2939, %v3067
        %v3196 = vmul.f32 %v2940, %v3068
        %v3197 = vmul.f32 %v2941, %v3069
        %v3198 = vmul.f32 %v2942, %v3070
        %v3199 = vmul.f32 %v2943, %v3071
        %v3200 = vmul.f32 %v2944, %v3072
        %v3201 = vmul.f32 %v2945, %v3073
        %v3202 = vmul.f32 %v2946, %v3074
        %v3203 = vmul.f32 %v2947, %v3075
        %v3204 = vmul.f32 %v2948, %v3076
        %v3205 = vmul.f32 %v2949, %v3077
        %v3206 = vmul.f32 %v2950, %v3078
        %v3207 = vmul.f32 %v2951, %v3079
        %v3208 = vmul.f32 %v2952, %v3080
        %v3209 = vmul.f32 %v2953, %v3081
        %v3210 = vmul.f32 %v2954, %v3082
        %v3211 = vmul.f32 %v2955, %v3083
        %v3212 = vmul.f32 %v2956, %v3084
        %v3213 = vmul.f32 %v2957, %v3085
        %v3214 = vmul.f32 %v2958, %v3086
        %v3215 = vmul.f32 %v2959, %v3087
        %v3216 = vmul.f32 %v2960, %v3088
        %v3217 = vmul.f32 %v2961, %v3089
        %v3218 = vmul.f32 %v2962, %v3090
        %v3219 = vmul.f32 %v2963, %v3091
        %v3220 = vmul.f32 %v2964, %v3092
        %v3221 = vmul.f32 %v2965, %v3093
        %v3222 = vmul.f32 %v2966, %v3094
        %v3223 = vmul.f32 %v2967, %v3095
        %v3224 = vmul.f32 %v2968, %v3096
        %v3225 = vmul.f32 %v2969, %v3097
        %v3226 = vlaneseq
        %v3227 = vshrl.u32 %v3226, 7
        %v3228 = vsub.s32 0, %v3227
        %v3229 = vrot.slane %v277, %v3228
        %v3230 = vadd.f32 %v3098, %v3229
        %v3231 = vadd.f32 %v3099, %v3229
        %v3232 = vadd.f32 %v3100, %v3229
        %v3233 = vadd.f32 %v3101, %v3229
        %v3234 = vadd.f32 %v3102, %v3229
        %v3235 = vadd.f32 %v3103, %v3229
        %v3236 = vadd.f32 %v3104, %v3229
        %v3237 = vadd.f32 %v3105, %v3229
        %v3238 = vadd.f32 %v3106, %v3229
        %v3239 = vadd.f32 %v3107, %v3229
        %v3240 = vadd.f32 %v3108, %v3229
        %v3241 = vadd.f32 %v3109, %v3229
        %v3242 = vadd.f32 %v3110, %v3229
        %v3243 = vadd.f32 %v3111, %v3229
        %v3244 = vadd.f32 %v3112, %v3229
        %v3245 = vadd.f32 %v3113, %v3229
        %v3246 = vadd.f32 %v3114, %v3229
        %v3247 = vadd.f32 %v3115, %v3229
        %v3248 = vadd.f32 %v3116, %v3229
        %v3249 = vadd.f32 %v3117, %v3229
        %v3250 = vadd.f32 %v3118, %v3229
        %v3251 = vadd.f32 %v3119, %v3229
        %v3252 = vadd.f32 %v3120, %v3229
        %v3253 = vadd.f32 %v3121, %v3229
        %v3254 = vadd.f32 %v3122, %v3229
        %v3255 = vadd.f32 %v3123, %v3229
        %v3256 = vadd.f32 %v3124, %v3229
        %v3257 = vadd.f32 %v3125, %v3229
        %v3258 = vadd.f32 %v3126, %v3229
        %v3259 = vadd.f32 %v3127, %v3229
        %v3260 = vadd.f32 %v3128, %v3229
        %v3261 = vadd.f32 %v3129, %v3229
        %v3262 = vadd.f32 %v3130, %v3229
        %v3263 = vadd.f32 %v3131, %v3229
        %v3264 = vadd.f32 %v3132, %v3229
        %v3265 = vadd.f32 %v3133, %v3229
        %v3266 = vadd.f32 %v3134, %v3229
        %v3267 = vadd.f32 %v3135, %v3229
        %v3268 = vadd.f32 %v3136, %v3229
        %v3269 = vadd.f32 %v3137, %v3229
        %v3270 = vadd.f32 %v3138, %v3229
        %v3271 = vadd.f32 %v3139, %v3229
        %v3272 = vadd.f32 %v3140, %v3229
        %v3273 = vadd.f32 %v3141, %v3229
        %v3274 = vadd.f32 %v3142, %v3229
        %v3275 = vadd.f32 %v3143, %v3229
        %v3276 = vadd.f32 %v3144, %v3229
        %v3277 = vadd.f32 %v3145, %v3229
        %v3278 = vadd.f32 %v3146, %v3229
        %v3279 = vadd.f32 %v3147, %v3229
        %v3280 = vadd.f32 %v3148, %v3229
        %v3281 = vadd.f32 %v3149, %v3229
        %v3282 = vadd.f32 %v3150, %v3229
        %v3283 = vadd.f32 %v3151, %v3229
        %v3284 = vadd.f32 %v3152, %v3229
        %v3285 = vadd.f32 %v3153, %v3229
        %v3286 = vadd.f32 %v3154, %v3229
        %v3287 = vadd.f32 %v3155, %v3229
        %v3288 = vadd.f32 %v3156, %v3229
        %v3289 = vadd.f32 %v3157, %v3229
        %v3290 = vadd.f32 %v3158, %v3229
        %v3291 = vadd.f32 %v3159, %v3229
        %v3292 = vadd.f32 %v3160, %v3229
        %v3293 = vadd.f32 %v3161, %v3229
        %v3294 = vadd.f32 %v3162, %v3229
        %v3295 = vadd.f32 %v3163, %v3229
        %v3296 = vadd.f32 %v3164, %v3229
        %v3297 = vadd.f32 %v3165, %v3229
        %v3298 = vadd.f32 %v3166, %v3229
        %v3299 = vadd.f32 %v3167, %v3229
        %v3300 = vadd.f32 %v3168, %v3229
        %v3301 = vadd.f32 %v3169, %v3229
        %v3302 = vadd.f32 %v3170, %v3229
        %v3303 = vadd.f32 %v3171, %v3229
        %v3304 = vadd.f32 %v3172, %v3229
        %v3305 = vadd.f32 %v3173, %v3229
        %v3306 = vadd.f32 %v3174, %v3229
        %v3307 = vadd.f32 %v3175, %v3229
        %v3308 = vadd.f32 %v3176, %v3229
        %v3309 = vadd.f32 %v3177, %v3229
        %v3310 = vadd.f32 %v3178, %v3229
        %v3311 = vadd.f32 %v3179, %v3229
        %v3312 = vadd.f32 %v3180, %v3229
        %v3313 = vadd.f32 %v3181, %v3229
        %v3314 = vadd.f32 %v3182, %v3229
        %v3315 = vadd.f32 %v3183, %v3229
        %v3316 = vadd.f32 %v3184, %v3229
        %v3317 = vadd.f32 %v3185, %v3229
        %v3318 = vadd.f32 %v3186, %v3229
        %v3319 = vadd.f32 %v3187, %v3229
        %v3320 = vadd.f32 %v3188, %v3229
        %v3321 = vadd.f32 %v3189, %v3229
        %v3322 = vadd.f32 %v3190, %v3229
        %v3323 = vadd.f32 %v3191, %v3229
        %v3324 = vadd.f32 %v3192, %v3229
        %v3325 = vadd.f32 %v3193, %v3229
        %v3326 = vadd.f32 %v3194, %v3229
        %v3327 = vadd.f32 %v3195, %v3229
        %v3328 = vadd.f32 %v3196, %v3229
        %v3329 = vadd.f32 %v3197, %v3229
        %v3330 = vadd.f32 %v3198, %v3229
        %v3331 = vadd.f32 %v3199, %v3229
        %v3332 = vadd.f32 %v3200, %v3229
        %v3333 = vadd.f32 %v3201, %v3229
        %v3334 = vadd.f32 %v3202, %v3229
        %v3335 = vadd.f32 %v3203, %v3229
        %v3336 = vadd.f32 %v3204, %v3229
        %v3337 = vadd.f32 %v3205, %v3229
        %v3338 = vadd.f32 %v3206, %v3229
        %v3339 = vadd.f32 %v3207, %v3229
        %v3340 = vadd.f32 %v3208, %v3229
        %v3341 = vadd.f32 %v3209, %v3229
        %v3342 = vadd.f32 %v3210, %v3229
        %v3343 = vadd.f32 %v3211, %v3229
        %v3344 = vadd.f32 %v3212, %v3229
        %v3345 = vadd.f32 %v3213, %v3229
        %v3346 = vadd.f32 %v3214, %v3229
        %v3347 = vadd.f32 %v3215, %v3229
        %v3348 = vadd.f32 %v3216, %v3229
        %v3349 = vadd.f32 %v3217, %v3229
        %v3350 = vadd.f32 %v3218, %v3229
        %v3351 = vadd.f32 %v3219, %v3229
        %v3352 = vadd.f32 %v3220, %v3229
        %v3353 = vadd.f32 %v3221, %v3229
        %v3354 = vadd.f32 %v3222, %v3229
        %v3355 = vadd.f32 %v3223, %v3229
        %v3356 = vadd.f32 %v3224, %v3229
        %v3357 = vadd.f32 %v3225, %v3229
        %v3358 = vmax.f32 %v3230, 0.0
        %v3359 = vmax.f32 %v3231, 0.0
        %v3360 = vmax.f32 %v3232, 0.0
        %v3361 = vmax.f32 %v3233, 0.0
        %v3362 = vmax.f32 %v3234, 0.0
        %v3363 = vmax.f32 %v3235, 0.0
        %v3364 = vmax.f32 %v3236, 0.0
        %v3365 = vmax.f32 %v3237, 0.0
        %v3366 = vmax.f32 %v3238, 0.0
        %v3367 = vmax.f32 %v3239, 0.0
        %v3368 = vmax.f32 %v3240, 0.0
        %v3369 = vmax.f32 %v3241, 0.0
        %v3370 = vmax.f32 %v3242, 0.0
        %v3371 = vmax.f32 %v3243, 0.0
        %v3372 = vmax.f32 %v3244, 0.0
        %v3373 = vmax.f32 %v3245, 0.0
        %v3374 = vmax.f32 %v3246, 0.0
        %v3375 = vmax.f32 %v3247, 0.0
        %v3376 = vmax.f32 %v3248, 0.0
        %v3377 = vmax.f32 %v3249, 0.0
        %v3378 = vmax.f32 %v3250, 0.0
        %v3379 = vmax.f32 %v3251, 0.0
        %v3380 = vmax.f32 %v3252, 0.0
        %v3381 = vmax.f32 %v3253, 0.0
        %v3382 = vmax.f32 %v3254, 0.0
        %v3383 = vmax.f32 %v3255, 0.0
        %v3384 = vmax.f32 %v3256, 0.0
        %v3385 = vmax.f32 %v3257, 0.0
        %v3386 = vmax.f32 %v3258, 0.0
        %v3387 = vmax.f32 %v3259, 0.0
        %v3388 = vmax.f32 %v3260, 0.0
        %v3389 = vmax.f32 %v3261, 0.0
        %v3390 = vmax.f32 %v3262, 0.0
        %v3391 = vmax.f32 %v3263, 0.0
        %v3392 = vmax.f32 %v3264, 0.0
        %v3393 = vmax.f32 %v3265, 0.0
        %v3394 = vmax.f32 %v3266, 0.0
        %v3395 = vmax.f32 %v3267, 0.0
        %v3396 = vmax.f32 %v3268, 0.0
        %v3397 = vmax.f32 %v3269, 0.0
        %v3398 = vmax.f32 %v3270, 0.0
        %v3399 = vmax.f32 %v3271, 0.0
        %v3400 = vmax.f32 %v3272, 0.0
        %v3401 = vmax.f32 %v3273, 0.0
        %v3402 = vmax.f32 %v3274, 0.0
        %v3403 = vmax.f32 %v3275, 0.0
        %v3404 = vmax.f32 %v3276, 0.0
        %v3405 = vmax.f32 %v3277, 0.0
        %v3406 = vmax.f32 %v3278, 0.0
        %v3407 = vmax.f32 %v3279, 0.0
        %v3408 = vmax.f32 %v3280, 0.0
        %v3409 = vmax.f32 %v3281, 0.0
        %v3410 = vmax.f32 %v3282, 0.0
        %v3411 = vmax.f32 %v3283, 0.0
        %v3412 = vmax.f32 %v3284, 0.0
        %v3413 = vmax.f32 %v3285, 0.0
        %v3414 = vmax.f32 %v3286, 0.0
        %v3415 = vmax.f32 %v3287, 0.0
        %v3416 = vmax.f32 %v3288, 0.0
        %v3417 = vmax.f32 %v3289, 0.0
        %v3418 = vmax.f32 %v3290, 0.0
        %v3419 = vmax.f32 %v3291, 0.0
        %v3420 = vmax.f32 %v3292, 0.0
        %v3421 = vmax.f32 %v3293, 0.0
        %v3422 = vmax.f32 %v3294, 0.0
        %v3423 = vmax.f32 %v3295, 0.0
        %v3424 = vmax.f32 %v3296, 0.0
        %v3425 = vmax.f32 %v3297, 0.0
        %v3426 = vmax.f32 %v3298, 0.0
        %v3427 = vmax.f32 %v3299, 0.0
        %v3428 = vmax.f32 %v3300, 0.0
        %v3429 = vmax.f32 %v3301, 0.0
        %v3430 = vmax.f32 %v3302, 0.0
        %v3431 = vmax.f32 %v3303, 0.0
        %v3432 = vmax.f32 %v3304, 0.0
        %v3433 = vmax.f32 %v3305, 0.0
        %v3434 = vmax.f32 %v3306, 0.0
        %v3435 = vmax.f32 %v3307, 0.0
        %v3436 = vmax.f32 %v3308, 0.0
        %v3437 = vmax.f32 %v3309, 0.0
        %v3438 = vmax.f32 %v3310, 0.0
        %v3439 = vmax.f32 %v3311, 0.0
        %v3440 = vmax.f32 %v3312, 0.0
        %v3441 = vmax.f32 %v3313, 0.0
        %v3442 = vmax.f32 %v3314, 0.0
        %v3443 = vmax.f32 %v3315, 0.0
        %v3444 = vmax.f32 %v3316, 0.0
        %v3445 = vmax.f32 %v3317, 0.0
        %v3446 = vmax.f32 %v3318, 0.0
        %v3447 = vmax.f32 %v3319, 0.0
        %v3448 = vmax.f32 %v3320, 0.0
        %v3449 = vmax.f32 %v3321, 0.0
        %v3450 = vmax.f32 %v3322, 0.0
        %v3451 = vmax.f32 %v3323, 0.0
        %v3452 = vmax.f32 %v3324, 0.0
        %v3453 = vmax.f32 %v3325, 0.0
        %v3454 = vmax.f32 %v3326, 0.0
        %v3455 = vmax.f32 %v3327, 0.0
        %v3456 = vmax.f32 %v3328, 0.0
        %v3457 = vmax.f32 %v3329, 0.0
        %v3458 = vmax.f32 %v3330, 0.0
        %v3459 = vmax.f32 %v3331, 0.0
        %v3460 = vmax.f32 %v3332, 0.0
        %v3461 = vmax.f32 %v3333, 0.0
        %v3462 = vmax.f32 %v3334, 0.0
        %v3463 = vmax.f32 %v3335, 0.0
        %v3464 = vmax.f32 %v3336, 0.0
        %v3465 = vmax.f32 %v3337, 0.0
        %v3466 = vmax.f32 %v3338, 0.0
        %v3467 = vmax.f32 %v3339, 0.0
        %v3468 = vmax.f32 %v3340, 0.0
        %v3469 = vmax.f32 %v3341, 0.0
        %v3470 = vmax.f32 %v3342, 0.0
        %v3471 = vmax.f32 %v3343, 0.0
        %v3472 = vmax.f32 %v3344, 0.0
        %v3473 = vmax.f32 %v3345, 0.0
        %v3474 = vmax.f32 %v3346, 0.0
        %v3475 = vmax.f32 %v3347, 0.0
        %v3476 = vmax.f32 %v3348, 0.0
        %v3477 = vmax.f32 %v3349, 0.0
        %v3478 = vmax.f32 %v3350, 0.0
        %v3479 = vmax.f32 %v3351, 0.0
        %v3480 = vmax.f32 %v3352, 0.0
        %v3481 = vmax.f32 %v3353, 0.0
        %v3482 = vmax.f32 %v3354, 0.0
        %v3483 = vmax.f32 %v3355, 0.0
        %v3484 = vmax.f32 %v3356, 0.0
        %v3485 = vmax.f32 %v3357, 0.0
        %v3486 = vlaneseq
        %v3487 = vshrl.u32 %v3486, 7
        %v3488 = vsub.s32 1, %v3487
        %v3489 = vrot.slane %v277, %v3488
        %v3490 = vadd.f32 %v1307, %v3489
        %v3491 = vadd.f32 %v1313, %v3489
        %v3492 = vadd.f32 %v1319, %v3489
        %v3493 = vadd.f32 %v1325, %v3489
        %v3494 = vadd.f32 %v1331, %v3489
        %v3495 = vadd.f32 %v1337, %v3489
        %v3496 = vadd.f32 %v1343, %v3489
        %v3497 = vadd.f32 %v1349, %v3489
        %v3498 = vadd.f32 %v1355, %v3489
        %v3499 = vadd.f32 %v1361, %v3489
        %v3500 = vadd.f32 %v1367, %v3489
        %v3501 = vadd.f32 %v1373, %v3489
        %v3502 = vadd.f32 %v1379, %v3489
        %v3503 = vadd.f32 %v1385, %v3489
        %v3504 = vadd.f32 %v1391, %v3489
        %v3505 = vadd.f32 %v1397, %v3489
        %v3506 = vadd.f32 %v1403, %v3489
        %v3507 = vadd.f32 %v1409, %v3489
        %v3508 = vadd.f32 %v1415, %v3489
        %v3509 = vadd.f32 %v1421, %v3489
        %v3510 = vadd.f32 %v1427, %v3489
        %v3511 = vadd.f32 %v1433, %v3489
        %v3512 = vadd.f32 %v1439, %v3489
        %v3513 = vadd.f32 %v1445, %v3489
        %v3514 = vadd.f32 %v1451, %v3489
        %v3515 = vadd.f32 %v1457, %v3489
        %v3516 = vadd.f32 %v1463, %v3489
        %v3517 = vadd.f32 %v1469, %v3489
        %v3518 = vadd.f32 %v1475, %v3489
        %v3519 = vadd.f32 %v1481, %v3489
        %v3520 = vadd.f32 %v1487, %v3489
        %v3521 = vadd.f32 %v1493, %v3489
        %v3522 = vadd.f32 %v1499, %v3489
        %v3523 = vadd.f32 %v1505, %v3489
        %v3524 = vadd.f32 %v1511, %v3489
        %v3525 = vadd.f32 %v1517, %v3489
        %v3526 = vadd.f32 %v1523, %v3489
        %v3527 = vadd.f32 %v1529, %v3489
        %v3528 = vadd.f32 %v1535, %v3489
        %v3529 = vadd.f32 %v1541, %v3489
        %v3530 = vadd.f32 %v1547, %v3489
        %v3531 = vadd.f32 %v1553, %v3489
        %v3532 = vadd.f32 %v1559, %v3489
        %v3533 = vadd.f32 %v1565, %v3489
        %v3534 = vadd.f32 %v1571, %v3489
        %v3535 = vadd.f32 %v1577, %v3489
        %v3536 = vadd.f32 %v1583, %v3489
        %v3537 = vadd.f32 %v1589, %v3489
        %v3538 = vadd.f32 %v1595, %v3489
        %v3539 = vadd.f32 %v1601, %v3489
        %v3540 = vadd.f32 %v1607, %v3489
        %v3541 = vadd.f32 %v1613, %v3489
        %v3542 = vadd.f32 %v1619, %v3489
        %v3543 = vadd.f32 %v1625, %v3489
        %v3544 = vadd.f32 %v1631, %v3489
        %v3545 = vadd.f32 %v1637, %v3489
        %v3546 = vadd.f32 %v1643, %v3489
        %v3547 = vadd.f32 %v1649, %v3489
        %v3548 = vadd.f32 %v1655, %v3489
        %v3549 = vadd.f32 %v1661, %v3489
        %v3550 = vadd.f32 %v1667, %v3489
        %v3551 = vadd.f32 %v1673, %v3489
        %v3552 = vadd.f32 %v1679, %v3489
        %v3553 = vadd.f32 %v1685, %v3489
        %v3554 = vadd.f32 %v1691, %v3489
        %v3555 = vadd.f32 %v1697, %v3489
        %v3556 = vadd.f32 %v1703, %v3489
        %v3557 = vadd.f32 %v1709, %v3489
        %v3558 = vadd.f32 %v1715, %v3489
        %v3559 = vadd.f32 %v1721, %v3489
        %v3560 = vadd.f32 %v1727, %v3489
        %v3561 = vadd.f32 %v1733, %v3489
        %v3562 = vadd.f32 %v1739, %v3489
        %v3563 = vadd.f32 %v1745, %v3489
        %v3564 = vadd.f32 %v1751, %v3489
        %v3565 = vadd.f32 %v1757, %v3489
        %v3566 = vadd.f32 %v1763, %v3489
        %v3567 = vadd.f32 %v1769, %v3489
        %v3568 = vadd.f32 %v1775, %v3489
        %v3569 = vadd.f32 %v1781, %v3489
        %v3570 = vadd.f32 %v1787, %v3489
        %v3571 = vadd.f32 %v1793, %v3489
        %v3572 = vadd.f32 %v1799, %v3489
        %v3573 = vadd.f32 %v1805, %v3489
        %v3574 = vadd.f32 %v1811, %v3489
        %v3575 = vadd.f32 %v1817, %v3489
        %v3576 = vadd.f32 %v1823, %v3489
        %v3577 = vadd.f32 %v1829, %v3489
        %v3578 = vadd.f32 %v1835, %v3489
        %v3579 = vadd.f32 %v1841, %v3489
        %v3580 = vadd.f32 %v1847, %v3489
        %v3581 = vadd.f32 %v1853, %v3489
        %v3582 = vadd.f32 %v1859, %v3489
        %v3583 = vadd.f32 %v1865, %v3489
        %v3584 = vadd.f32 %v1871, %v3489
        %v3585 = vadd.f32 %v1877, %v3489
        %v3586 = vadd.f32 %v1883, %v3489
        %v3587 = vadd.f32 %v1889, %v3489
        %v3588 = vadd.f32 %v1895, %v3489
        %v3589 = vadd.f32 %v1901, %v3489
        %v3590 = vadd.f32 %v1907, %v3489
        %v3591 = vadd.f32 %v1913, %v3489
        %v3592 = vadd.f32 %v1919, %v3489
        %v3593 = vadd.f32 %v1925, %v3489
        %v3594 = vadd.f32 %v1931, %v3489
        %v3595 = vadd.f32 %v1937, %v3489
        %v3596 = vadd.f32 %v1943, %v3489
        %v3597 = vadd.f32 %v1949, %v3489
        %v3598 = vadd.f32 %v1955, %v3489
        %v3599 = vadd.f32 %v1961, %v3489
        %v3600 = vadd.f32 %v1967, %v3489
        %v3601 = vadd.f32 %v1973, %v3489
        %v3602 = vadd.f32 %v1979, %v3489
        %v3603 = vadd.f32 %v1985, %v3489
        %v3604 = vadd.f32 %v1991, %v3489
        %v3605 = vadd.f32 %v1997, %v3489
        %v3606 = vadd.f32 %v2003, %v3489
        %v3607 = vadd.f32 %v2009, %v3489
        %v3608 = vadd.f32 %v2015, %v3489
        %v3609 = vadd.f32 %v2021, %v3489
        %v3610 = vadd.f32 %v2027, %v3489
        %v3611 = vadd.f32 %v2033, %v3489
        %v3612 = vadd.f32 %v2039, %v3489
        %v3613 = vadd.f32 %v2045, %v3489
        %v3614 = vadd.f32 %v2051, %v3489
        %v3615 = vadd.f32 %v2057, %v3489
        %v3616 = vadd.f32 %v2063, %v3489
        %v3617 = vadd.f32 %v2069, %v3489
        %v3618 = vmax.f32 %v3490, 0.0
        %v3619 = vmax.f32 %v3491, 0.0
        %v3620 = vmax.f32 %v3492, 0.0
        %v3621 = vmax.f32 %v3493, 0.0
        %v3622 = vmax.f32 %v3494, 0.0
        %v3623 = vmax.f32 %v3495, 0.0
        %v3624 = vmax.f32 %v3496, 0.0
        %v3625 = vmax.f32 %v3497, 0.0
        %v3626 = vmax.f32 %v3498, 0.0
        %v3627 = vmax.f32 %v3499, 0.0
        %v3628 = vmax.f32 %v3500, 0.0
        %v3629 = vmax.f32 %v3501, 0.0
        %v3630 = vmax.f32 %v3502, 0.0
        %v3631 = vmax.f32 %v3503, 0.0
        %v3632 = vmax.f32 %v3504, 0.0
        %v3633 = vmax.f32 %v3505, 0.0
        %v3634 = vmax.f32 %v3506, 0.0
        %v3635 = vmax.f32 %v3507, 0.0
        %v3636 = vmax.f32 %v3508, 0.0
        %v3637 = vmax.f32 %v3509, 0.0
        %v3638 = vmax.f32 %v3510, 0.0
        %v3639 = vmax.f32 %v3511, 0.0
        %v3640 = vmax.f32 %v3512, 0.0
        %v3641 = vmax.f32 %v3513, 0.0
        %v3642 = vmax.f32 %v3514, 0.0
        %v3643 = vmax.f32 %v3515, 0.0
        %v3644 = vmax.f32 %v3516, 0.0
        %v3645 = vmax.f32 %v3517, 0.0
        %v3646 = vmax.f32 %v3518, 0.0
        %v3647 = vmax.f32 %v3519, 0.0
        %v3648 = vmax.f32 %v3520, 0.0
        %v3649 = vmax.f32 %v3521, 0.0
        %v3650 = vmax.f32 %v3522, 0.0
        %v3651 = vmax.f32 %v3523, 0.0
        %v3652 = vmax.f32 %v3524, 0.0
        %v3653 = vmax.f32 %v3525, 0.0
        %v3654 = vmax.f32 %v3526, 0.0
        %v3655 = vmax.f32 %v3527, 0.0
        %v3656 = vmax.f32 %v3528, 0.0
        %v3657 = vmax.f32 %v3529, 0.0
        %v3658 = vmax.f32 %v3530, 0.0
        %v3659 = vmax.f32 %v3531, 0.0
        %v3660 = vmax.f32 %v3532, 0.0
        %v3661 = vmax.f32 %v3533, 0.0
        %v3662 = vmax.f32 %v3534, 0.0
        %v3663 = vmax.f32 %v3535, 0.0
        %v3664 = vmax.f32 %v3536, 0.0
        %v3665 = vmax.f32 %v3537, 0.0
        %v3666 = vmax.f32 %v3538, 0.0
        %v3667 = vmax.f32 %v3539, 0.0
        %v3668 = vmax.f32 %v3540, 0.0
        %v3669 = vmax.f32 %v3541, 0.0
        %v3670 = vmax.f32 %v3542, 0.0
        %v3671 = vmax.f32 %v3543, 0.0
        %v3672 = vmax.f32 %v3544, 0.0
        %v3673 = vmax.f32 %v3545, 0.0
        %v3674 = vmax.f32 %v3546, 0.0
        %v3675 = vmax.f32 %v3547, 0.0
        %v3676 = vmax.f32 %v3548, 0.0
        %v3677 = vmax.f32 %v3549, 0.0
        %v3678 = vmax.f32 %v3550, 0.0
        %v3679 = vmax.f32 %v3551, 0.0
        %v3680 = vmax.f32 %v3552, 0.0
        %v3681 = vmax.f32 %v3553, 0.0
        %v3682 = vmax.f32 %v3554, 0.0
        %v3683 = vmax.f32 %v3555, 0.0
        %v3684 = vmax.f32 %v3556, 0.0
        %v3685 = vmax.f32 %v3557, 0.0
        %v3686 = vmax.f32 %v3558, 0.0
        %v3687 = vmax.f32 %v3559, 0.0
        %v3688 = vmax.f32 %v3560, 0.0
        %v3689 = vmax.f32 %v3561, 0.0
        %v3690 = vmax.f32 %v3562, 0.0
        %v3691 = vmax.f32 %v3563, 0.0
        %v3692 = vmax.f32 %v3564, 0.0
        %v3693 = vmax.f32 %v3565, 0.0
        %v3694 = vmax.f32 %v3566, 0.0
        %v3695 = vmax.f32 %v3567, 0.0
        %v3696 = vmax.f32 %v3568, 0.0
        %v3697 = vmax.f32 %v3569, 0.0
        %v3698 = vmax.f32 %v3570, 0.0
        %v3699 = vmax.f32 %v3571, 0.0
        %v3700 = vmax.f32 %v3572, 0.0
        %v3701 = vmax.f32 %v3573, 0.0
        %v3702 = vmax.f32 %v3574, 0.0
        %v3703 = vmax.f32 %v3575, 0.0
        %v3704 = vmax.f32 %v3576, 0.0
        %v3705 = vmax.f32 %v3577, 0.0
        %v3706 = vmax.f32 %v3578, 0.0
        %v3707 = vmax.f32 %v3579, 0.0
        %v3708 = vmax.f32 %v3580, 0.0
        %v3709 = vmax.f32 %v3581, 0.0
        %v3710 = vmax.f32 %v3582, 0.0
        %v3711 = vmax.f32 %v3583, 0.0
        %v3712 = vmax.f32 %v3584, 0.0
        %v3713 = vmax.f32 %v3585, 0.0
        %v3714 = vmax.f32 %v3586, 0.0
        %v3715 = vmax.f32 %v3587, 0.0
        %v3716 = vmax.f32 %v3588, 0.0
        %v3717 = vmax.f32 %v3589, 0.0
        %v3718 = vmax.f32 %v3590, 0.0
        %v3719 = vmax.f32 %v3591, 0.0
        %v3720 = vmax.f32 %v3592, 0.0
        %v3721 = vmax.f32 %v3593, 0.0
        %v3722 = vmax.f32 %v3594, 0.0
        %v3723 = vmax.f32 %v3595, 0.0
        %v3724 = vmax.f32 %v3596, 0.0
        %v3725 = vmax.f32 %v3597, 0.0
        %v3726 = vmax.f32 %v3598, 0.0
        %v3727 = vmax.f32 %v3599, 0.0
        %v3728 = vmax.f32 %v3600, 0.0
        %v3729 = vmax.f32 %v3601, 0.0
        %v3730 = vmax.f32 %v3602, 0.0
        %v3731 = vmax.f32 %v3603, 0.0
        %v3732 = vmax.f32 %v3604, 0.0
        %v3733 = vmax.f32 %v3605, 0.0
        %v3734 = vmax.f32 %v3606, 0.0
        %v3735 = vmax.f32 %v3607, 0.0
        %v3736 = vmax.f32 %v3608, 0.0
        %v3737 = vmax.f32 %v3609, 0.0
        %v3738 = vmax.f32 %v3610, 0.0
        %v3739 = vmax.f32 %v3611, 0.0
        %v3740 = vmax.f32 %v3612, 0.0
        %v3741 = vmax.f32 %v3613, 0.0
        %v3742 = vmax.f32 %v3614, 0.0
        %v3743 = vmax.f32 %v3615, 0.0
        %v3744 = vmax.f32 %v3616, 0.0
        %v3745 = vmax.f32 %v3617, 0.0
        %v3746 = vmul.f32 %v3358, %v3618
        %v3747 = vmul.f32 %v3359, %v3619
        %v3748 = vmul.f32 %v3360, %v3620
        %v3749 = vmul.f32 %v3361, %v3621
        %v3750 = vmul.f32 %v3362, %v3622
        %v3751 = vmul.f32 %v3363, %v3623
        %v3752 = vmul.f32 %v3364, %v3624
        %v3753 = vmul.f32 %v3365, %v3625
        %v3754 = vmul.f32 %v3366, %v3626
        %v3755 = vmul.f32 %v3367, %v3627
        %v3756 = vmul.f32 %v3368, %v3628
        %v3757 = vmul.f32 %v3369, %v3629
        %v3758 = vmul.f32 %v3370, %v3630
        %v3759 = vmul.f32 %v3371, %v3631
        %v3760 = vmul.f32 %v3372, %v3632
        %v3761 = vmul.f32 %v3373, %v3633
        %v3762 = vmul.f32 %v3374, %v3634
        %v3763 = vmul.f32 %v3375, %v3635
        %v3764 = vmul.f32 %v3376, %v3636
        %v3765 = vmul.f32 %v3377, %v3637
        %v3766 = vmul.f32 %v3378, %v3638
        %v3767 = vmul.f32 %v3379, %v3639
        %v3768 = vmul.f32 %v3380, %v3640
        %v3769 = vmul.f32 %v3381, %v3641
        %v3770 = vmul.f32 %v3382, %v3642
        %v3771 = vmul.f32 %v3383, %v3643
        %v3772 = vmul.f32 %v3384, %v3644
        %v3773 = vmul.f32 %v3385, %v3645
        %v3774 = vmul.f32 %v3386, %v3646
        %v3775 = vmul.f32 %v3387, %v3647
        %v3776 = vmul.f32 %v3388, %v3648
        %v3777 = vmul.f32 %v3389, %v3649
        %v3778 = vmul.f32 %v3390, %v3650
        %v3779 = vmul.f32 %v3391, %v3651
        %v3780 = vmul.f32 %v3392, %v3652
        %v3781 = vmul.f32 %v3393, %v3653
        %v3782 = vmul.f32 %v3394, %v3654
        %v3783 = vmul.f32 %v3395, %v3655
        %v3784 = vmul.f32 %v3396, %v3656
        %v3785 = vmul.f32 %v3397, %v3657
        %v3786 = vmul.f32 %v3398, %v3658
        %v3787 = vmul.f32 %v3399, %v3659
        %v3788 = vmul.f32 %v3400, %v3660
        %v3789 = vmul.f32 %v3401, %v3661
        %v3790 = vmul.f32 %v3402, %v3662
        %v3791 = vmul.f32 %v3403, %v3663
        %v3792 = vmul.f32 %v3404, %v3664
        %v3793 = vmul.f32 %v3405, %v3665
        %v3794 = vmul.f32 %v3406, %v3666
        %v3795 = vmul.f32 %v3407, %v3667
        %v3796 = vmul.f32 %v3408, %v3668
        %v3797 = vmul.f32 %v3409, %v3669
        %v3798 = vmul.f32 %v3410, %v3670
        %v3799 = vmul.f32 %v3411, %v3671
        %v3800 = vmul.f32 %v3412, %v3672
        %v3801 = vmul.f32 %v3413, %v3673
        %v3802 = vmul.f32 %v3414, %v3674
        %v3803 = vmul.f32 %v3415, %v3675
        %v3804 = vmul.f32 %v3416, %v3676
        %v3805 = vmul.f32 %v3417, %v3677
        %v3806 = vmul.f32 %v3418, %v3678
        %v3807 = vmul.f32 %v3419, %v3679
        %v3808 = vmul.f32 %v3420, %v3680
        %v3809 = vmul.f32 %v3421, %v3681
        %v3810 = vmul.f32 %v3422, %v3682
        %v3811 = vmul.f32 %v3423, %v3683
        %v3812 = vmul.f32 %v3424, %v3684
        %v3813 = vmul.f32 %v3425, %v3685
        %v3814 = vmul.f32 %v3426, %v3686
        %v3815 = vmul.f32 %v3427, %v3687
        %v3816 = vmul.f32 %v3428, %v3688
        %v3817 = vmul.f32 %v3429, %v3689
        %v3818 = vmul.f32 %v3430, %v3690
        %v3819 = vmul.f32 %v3431, %v3691
        %v3820 = vmul.f32 %v3432, %v3692
        %v3821 = vmul.f32 %v3433, %v3693
        %v3822 = vmul.f32 %v3434, %v3694
        %v3823 = vmul.f32 %v3435, %v3695
        %v3824 = vmul.f32 %v3436, %v3696
        %v3825 = vmul.f32 %v3437, %v3697
        %v3826 = vmul.f32 %v3438, %v3698
        %v3827 = vmul.f32 %v3439, %v3699
        %v3828 = vmul.f32 %v3440, %v3700
        %v3829 = vmul.f32 %v3441, %v3701
        %v3830 = vmul.f32 %v3442, %v3702
        %v3831 = vmul.f32 %v3443, %v3703
        %v3832 = vmul.f32 %v3444, %v3704
        %v3833 = vmul.f32 %v3445, %v3705
        %v3834 = vmul.f32 %v3446, %v3706
        %v3835 = vmul.f32 %v3447, %v3707
        %v3836 = vmul.f32 %v3448, %v3708
        %v3837 = vmul.f32 %v3449, %v3709
        %v3838 = vmul.f32 %v3450, %v3710
        %v3839 = vmul.f32 %v3451, %v3711
        %v3840 = vmul.f32 %v3452, %v3712
        %v3841 = vmul.f32 %v3453, %v3713
        %v3842 = vmul.f32 %v3454, %v3714
        %v3843 = vmul.f32 %v3455, %v3715
        %v3844 = vmul.f32 %v3456, %v3716
        %v3845 = vmul.f32 %v3457, %v3717
        %v3846 = vmul.f32 %v3458, %v3718
        %v3847 = vmul.f32 %v3459, %v3719
        %v3848 = vmul.f32 %v3460, %v3720
        %v3849 = vmul.f32 %v3461, %v3721
        %v3850 = vmul.f32 %v3462, %v3722
        %v3851 = vmul.f32 %v3463, %v3723
        %v3852 = vmul.f32 %v3464, %v3724
        %v3853 = vmul.f32 %v3465, %v3725
        %v3854 = vmul.f32 %v3466, %v3726
        %v3855 = vmul.f32 %v3467, %v3727
        %v3856 = vmul.f32 %v3468, %v3728
        %v3857 = vmul.f32 %v3469, %v3729
        %v3858 = vmul.f32 %v3470, %v3730
        %v3859 = vmul.f32 %v3471, %v3731
        %v3860 = vmul.f32 %v3472, %v3732
        %v3861 = vmul.f32 %v3473, %v3733
        %v3862 = vmul.f32 %v3474, %v3734
        %v3863 = vmul.f32 %v3475, %v3735
        %v3864 = vmul.f32 %v3476, %v3736
        %v3865 = vmul.f32 %v3477, %v3737
        %v3866 = vmul.f32 %v3478, %v3738
        %v3867 = vmul.f32 %v3479, %v3739
        %v3868 = vmul.f32 %v3480, %v3740
        %v3869 = vmul.f32 %v3481, %v3741
        %v3870 = vmul.f32 %v3482, %v3742
        %v3871 = vmul.f32 %v3483, %v3743
        %v3872 = vmul.f32 %v3484, %v3744
        %v3873 = vmul.f32 %v3485, %v3745
        %v3874 = vmax.f32 %v3746, %v3762
        %v3875 = vmax.f32 %v3874, %v3778
        %v3876 = vmax.f32 %v3875, %v3794
        %v3877 = vmax.f32 %v3876, %v3810
        %v3878 = vmax.f32 %v3877, %v3826
        %v3879 = vmax.f32 %v3878, %v3842
        %v3880 = vmax.f32 %v3879, %v3858
        %v3881 = vmax.f32 %v3747, %v3763
        %v3882 = vmax.f32 %v3881, %v3779
        %v3883 = vmax.f32 %v3882, %v3795
        %v3884 = vmax.f32 %v3883, %v3811
        %v3885 = vmax.f32 %v3884, %v3827
        %v3886 = vmax.f32 %v3885, %v3843
        %v3887 = vmax.f32 %v3886, %v3859
        %v3888 = vmax.f32 %v3748, %v3764
        %v3889 = vmax.f32 %v3888, %v3780
        %v3890 = vmax.f32 %v3889, %v3796
        %v3891 = vmax.f32 %v3890, %v3812
        %v3892 = vmax.f32 %v3891, %v3828
        %v3893 = vmax.f32 %v3892, %v3844
        %v3894 = vmax.f32 %v3893, %v3860
        %v3895 = vmax.f32 %v3749, %v3765
        %v3896 = vmax.f32 %v3895, %v3781
        %v3897 = vmax.f32 %v3896, %v3797
        %v3898 = vmax.f32 %v3897, %v3813
        %v3899 = vmax.f32 %v3898, %v3829
        %v3900 = vmax.f32 %v3899, %v3845
        %v3901 = vmax.f32 %v3900, %v3861
        %v3902 = vmax.f32 %v3750, %v3766
        %v3903 = vmax.f32 %v3902, %v3782
        %v3904 = vmax.f32 %v3903, %v3798
        %v3905 = vmax.f32 %v3904, %v3814
        %v3906 = vmax.f32 %v3905, %v3830
        %v3907 = vmax.f32 %v3906, %v3846
        %v3908 = vmax.f32 %v3907, %v3862
        %v3909 = vmax.f32 %v3751, %v3767
        %v3910 = vmax.f32 %v3909, %v3783
        %v3911 = vmax.f32 %v3910, %v3799
        %v3912 = vmax.f32 %v3911, %v3815
        %v3913 = vmax.f32 %v3912, %v3831
        %v3914 = vmax.f32 %v3913, %v3847
        %v3915 = vmax.f32 %v3914, %v3863
        %v3916 = vmax.f32 %v3752, %v3768
        %v3917 = vmax.f32 %v3916, %v3784
        %v3918 = vmax.f32 %v3917, %v3800
        %v3919 = vmax.f32 %v3918, %v3816
        %v3920 = vmax.f32 %v3919, %v3832
        %v3921 = vmax.f32 %v3920, %v3848
        %v3922 = vmax.f32 %v3921, %v3864
        %v3923 = vmax.f32 %v3753, %v3769
        %v3924 = vmax.f32 %v3923, %v3785
        %v3925 = vmax.f32 %v3924, %v3801
        %v3926 = vmax.f32 %v3925, %v3817
        %v3927 = vmax.f32 %v3926, %v3833
        %v3928 = vmax.f32 %v3927, %v3849
        %v3929 = vmax.f32 %v3928, %v3865
        %v3930 = vmax.f32 %v3754, %v3770
        %v3931 = vmax.f32 %v3930, %v3786
        %v3932 = vmax.f32 %v3931, %v3802
        %v3933 = vmax.f32 %v3932, %v3818
        %v3934 = vmax.f32 %v3933, %v3834
        %v3935 = vmax.f32 %v3934, %v3850
        %v3936 = vmax.f32 %v3935, %v3866
        %v3937 = vmax.f32 %v3755, %v3771
        %v3938 = vmax.f32 %v3937, %v3787
        %v3939 = vmax.f32 %v3938, %v3803
        %v3940 = vmax.f32 %v3939, %v3819
        %v3941 = vmax.f32 %v3940, %v3835
        %v3942 = vmax.f32 %v3941, %v3851
        %v3943 = vmax.f32 %v3942, %v3867
        %v3944 = vmax.f32 %v3756, %v3772
        %v3945 = vmax.f32 %v3944, %v3788
        %v3946 = vmax.f32 %v3945, %v3804
        %v3947 = vmax.f32 %v3946, %v3820
        %v3948 = vmax.f32 %v3947, %v3836
        %v3949 = vmax.f32 %v3948, %v3852
        %v3950 = vmax.f32 %v3949, %v3868
        %v3951 = vmax.f32 %v3757, %v3773
        %v3952 = vmax.f32 %v3951, %v3789
        %v3953 = vmax.f32 %v3952, %v3805
        %v3954 = vmax.f32 %v3953, %v3821
        %v3955 = vmax.f32 %v3954, %v3837
        %v3956 = vmax.f32 %v3955, %v3853
        %v3957 = vmax.f32 %v3956, %v3869
        %v3958 = vmax.f32 %v3758, %v3774
        %v3959 = vmax.f32 %v3958, %v3790
        %v3960 = vmax.f32 %v3959, %v3806
        %v3961 = vmax.f32 %v3960, %v3822
        %v3962 = vmax.f32 %v3961, %v3838
        %v3963 = vmax.f32 %v3962, %v3854
        %v3964 = vmax.f32 %v3963, %v3870
        %v3965 = vmax.f32 %v3759, %v3775
        %v3966 = vmax.f32 %v3965, %v3791
        %v3967 = vmax.f32 %v3966, %v3807
        %v3968 = vmax.f32 %v3967, %v3823
        %v3969 = vmax.f32 %v3968, %v3839
        %v3970 = vmax.f32 %v3969, %v3855
        %v3971 = vmax.f32 %v3970, %v3871
        %v3972 = vmax.f32 %v3760, %v3776
        %v3973 = vmax.f32 %v3972, %v3792
        %v3974 = vmax.f32 %v3973, %v3808
        %v3975 = vmax.f32 %v3974, %v3824
        %v3976 = vmax.f32 %v3975, %v3840
        %v3977 = vmax.f32 %v3976, %v3856
        %v3978 = vmax.f32 %v3977, %v3872
        %v3979 = vmax.f32 %v3761, %v3777
        %v3980 = vmax.f32 %v3979, %v3793
        %v3981 = vmax.f32 %v3980, %v3809
        %v3982 = vmax.f32 %v3981, %v3825
        %v3983 = vmax.f32 %v3982, %v3841
        %v3984 = vmax.f32 %v3983, %v3857
        %v3985 = vmax.f32 %v3984, %v3873
        %3986 = vst [vmem:[%s242] sm:$0xff] %v3880
        %3987 = vst [vmem:[%s242 + $0x8] sm:$0xff] %v3887
        %3988 = vst [vmem:[%s242 + $0x10] sm:$0xff] %v3894
        %3989 = vst [vmem:[%s242 + $0x18] sm:$0xff] %v3901
        %3990 = vst [vmem:[%s242 + $0x20] sm:$0xff] %v3908
        %3991 = vst [vmem:[%s242 + $0x28] sm:$0xff] %v3915
        %3992 = vst [vmem:[%s242 + $0x30] sm:$0xff] %v3922
        %3993 = vst [vmem:[%s242 + $0x38] sm:$0xff] %v3929
        %3994 = vst [vmem:[%s242 + $0x40] sm:$0xff] %v3936
        %3995 = vst [vmem:[%s242 + $0x48] sm:$0xff] %v3943
        %3996 = vst [vmem:[%s242 + $0x50] sm:$0xff] %v3950
        %3997 = vst [vmem:[%s242 + $0x58] sm:$0xff] %v3957
        %3998 = vst [vmem:[%s242 + $0x60] sm:$0xff] %v3964
        %3999 = vst [vmem:[%s242 + $0x68] sm:$0xff] %v3971
        %4000 = vst [vmem:[%s242 + $0x70] sm:$0xff] %v3978
        %4001 = vst [vmem:[%s242 + $0x78] sm:$0xff] %v3985
        %s4002 = sand.u32 %s120, 1
        %s4003 = scalar_lea.sflag [#allocation4], %s4002
        %s4004 = sand.u32 %s120, 1
        %s4005 = smul.addr %s4004, 128
        %s4006 = scalar_lea.vmem [#allocation7], %s4005
        // Predicated region
        $region41: #{tpu_custom_call.1} parent=31 // pred_check
          %p4007 = pneg %p130
        $region42: #{tpu_custom_call.1} parent=31 // pred_check_branch
          %4009 = sbr.rel (%p4007) target = $region44
        $region43: #{tpu_custom_call.1} parent=31 // pred_region
          %s4010 = smul.u32 16, %s28
          %s4012 = ssub.s32 2048, 2048
          %4013 = vsyncadd %s4003, %s4012
          %s4014 = smul.addr %s27, 16
          %s4015 = sadd.s32 %s4010, %s4014
          %s4016 = smul.addr %s4015, 128
          %s4017 = scalar_lea.hbm %s3, %s4016
          %s4018 = sshll.u32 %s4006, 4
          %s4019 = int_to_ptr.vmem [resolvable:$true] %s4018
          %4024 = dma.vmem_to_hbm [thread:$0]  %s4019, 2048, %s4017, %s4003, 128, 128, 8
        $region44: #{tpu_custom_call.1} parent=31 // pred_fallthru
          _
      $region32: #{tpu_custom_call.1} parent=5 // pred_fallthru
        _
      %p4025 = scmp.le.s32.totalorder 2, %s18
      // Predicated region
      $region45: #{tpu_custom_call.1} parent=5 // pred_check
        %p4026 = pneg %p4025
      $region46: #{tpu_custom_call.1} parent=5 // pred_check_branch
        %4028 = sbr.rel (%p4026) target = $region48
      $region47: #{tpu_custom_call.1} parent=5 // pred_region
        %s4029 = ssub.s32 %s18, 2
        // Predicated region
        $region49: #{tpu_custom_call.1} parent=47 // pred_check
          %p4030 = pneg %p136
        $region50: #{tpu_custom_call.1} parent=47 // pred_check_branch
          %4032 = sbr.rel (%p4030) target = $region52
        $region51: #{tpu_custom_call.1} parent=47 // pred_region
          %s4033 = sand.u32 %s121, 1
          %s4034 = scalar_lea.sflag [#allocation4], %s4033
          %s4035 = sand.u32 %s121, 1
          %s4036 = smul.addr %s4035, 128
          %s4037 = scalar_lea.vmem [#allocation7], %s4036
          %4038 = dma.done %s4034, 2048
        $region52: #{tpu_custom_call.1} parent=47 // pred_fallthru
          _
      $region48: #{tpu_custom_call.1} parent=5 // pred_fallthru
        _
    $region6: #{tpu_custom_call.1} parent=1 // loop_footer
      %s22 = sadd.s32 1, %s18
    $region7: #{tpu_custom_call.1} parent=1 // loop_footer_branch
      %17 = sbr.rel target = $region3
    $region8: #{tpu_custom_call.1} parent=1 // loop_exit
      _
    %4039 = vsyncpa [#allocation3], 1
    %s4040 = scalar_lea.sflag [#allocation3], 1
    %4041 = vsyncpa %s4040, 1
    %4042 = vsyncpa [#allocation6], 1
    %s4043 = scalar_lea.sflag [#allocation6], 1
    %4044 = vsyncpa %s4043, 1
    %4045 = vsyncpa [#allocation4], 1
    %s4046 = scalar_lea.sflag [#allocation4], 1
    %4047 = vsyncpa %s4046, 1

</llo_original>
